<compile_context>
chip_gen: v7x
topology: tpu7x:2x2x1
jax: 0.10.0
libtpu: 0.0.40
codegen_flags: <defaults>
</compile_context>

<pallas_src>
import jax
import jax.numpy as jnp
from jax.experimental import pallas as pl
from jax.experimental.pallas import tpu as pltpu

EPS = 1e-5

# Set to jnp.bfloat16 to use the bf16 MXU fast path on v6e/v7x
# (feature math and the accumulator stay float32).
MXU_DTYPE = jnp.float32


# ---------------------------------------------------------------------------
# In-kernel building blocks
# ---------------------------------------------------------------------------
def _gather_mesh_dot(gi_ref, b, x_ref, w_ref, n1_ref, n2_ref, n3_ref, n4_ref):
    """MeshConv core for one batch element.

    gi_ref : (B, 4*E) int32 SMEM (scalar-prefetched GeMM neighbour ids,
             laid out as [n1(e=0..E-1), n2(...), n3(...), n4(...)]).
    x_ref  : (E, C)  VMEM block of edge features of batch b.
    w_ref  : (5*C, Cout) VMEM weight slab.
    n*_ref : (E, C)  VMEM scratch for the gathered neighbours.
    Returns the (E, Cout) float32 conv result (bias not added).
    """
    E, _ = x_ref.shape

    def gather_row(e, carry):
        i1 = gi_ref[b, e]
        i2 = gi_ref[b, E + e]
        i3 = gi_ref[b, 2 * E + e]
        i4 = gi_ref[b, 3 * E + e]
        n1_ref[pl.ds(e, 1), :] = x_ref[pl.ds(i1, 1), :]
        n2_ref[pl.ds(e, 1), :] = x_ref[pl.ds(i2, 1), :]
        n3_ref[pl.ds(e, 1), :] = x_ref[pl.ds(i3, 1), :]
        n4_ref[pl.ds(e, 1), :] = x_ref[pl.ds(i4, 1), :]
        return carry

    jax.lax.fori_loop(0, E, gather_row, 0)

    x = x_ref[...].astype(jnp.float32)
    n1 = n1_ref[...].astype(jnp.float32)
    n2 = n2_ref[...].astype(jnp.float32)
    n3 = n3_ref[...].astype(jnp.float32)
    n4 = n4_ref[...].astype(jnp.float32)

    # Symmetric MeshConv features, concatenated on the lane axis so the five
    # per-feature matmuls collapse into a single MXU dot with K = 5*C.
    feats = jnp.concatenate(
        [x, jnp.abs(n1 - n3), n1 + n3, jnp.abs(n2 - n4), n2 + n4], axis=-1)
    return jnp.dot(feats.astype(MXU_DTYPE), w_ref[...].astype(MXU_DTYPE),
                   preferred_element_type=jnp.float32)


def _instance_norm(y):
    """InstanceNorm2d(affine=False): per-channel, biased variance over edges.

    Single-pass statistics (sum / sum-of-squares)."""
    inv_e = 1.0 / y.shape[0]
    s1 = jnp.sum(y, axis=0, keepdims=True)
    s2 = jnp.sum(y * y, axis=0, keepdims=True)
    mean = s1 * inv_e
    var = jnp.maximum(s2 * inv_e - mean * mean, 0.0)
    return (y - mean) * jax.lax.rsqrt(var + EPS)


# ---------------------------------------------------------------------------
# Kernels (one per conv block of UpConv)
# ---------------------------------------------------------------------------
def _up_conv_kernel(gi_ref, x_ref, w_ref, bias_ref, out_ref,
                    n1_ref, n2_ref, n3_ref, n4_ref):
    # up_conv: MeshConv only (no norm / activation).
    b = pl.program_id(0)
    acc = _gather_mesh_dot(gi_ref, b, x_ref, w_ref,
                           n1_ref, n2_ref, n3_ref, n4_ref)
    out_ref[...] = (acc + bias_ref[...].astype(jnp.float32)).astype(out_ref.dtype)


def _conv1_kernel(gi_ref, x_ref, d_ref, wx_ref, wd_ref, bias_ref, out_ref,
                  n1_ref, n2_ref, n3_ref, n4_ref):
    # conv1 over the (virtual) channel-concat [x, from_down], then
    # InstanceNorm + ReLU.  The concat is folded into two accumulating dots
    # (weight split along Cin) so the (B, E, 2*Cout) tensor never hits HBM.
    b = pl.program_id(0)
    acc = _gather_mesh_dot(gi_ref, b, x_ref, wx_ref,
                           n1_ref, n2_ref, n3_ref, n4_ref)
    acc = acc + _gather_mesh_dot(gi_ref, b, d_ref, wd_ref,
                                 n1_ref, n2_ref, n3_ref, n4_ref)
    acc = acc + bias_ref[...].astype(jnp.float32)
    y = _instance_norm(acc)
    out_ref[...] = jnp.maximum(y, 0.0).astype(out_ref.dtype)


def _conv2_kernel(gi_ref, x_ref, w_ref, bias_ref, out_ref,
                  n1_ref, n2_ref, n3_ref, n4_ref):
    # conv2 block: MeshConv + InstanceNorm + residual (conv input) + ReLU.
    b = pl.program_id(0)
    acc = _gather_mesh_dot(gi_ref, b, x_ref, w_ref,
                           n1_ref, n2_ref, n3_ref, n4_ref)
    acc = acc + bias_ref[...].astype(jnp.float32)
    y = _instance_norm(acc)
    y = y + x_ref[...].astype(jnp.float32)        # residual == conv input
    out_ref[...] = jnp.maximum(y, 0.0).astype(out_ref.dtype)


# ---------------------------------------------------------------------------
# pallas_call wrappers
# ---------------------------------------------------------------------------
def _compiler_params():
    return pltpu.CompilerParams(dimension_semantics=("parallel",))


def mesh_conv(x, gi_flat, w5, bias):
    """up_conv: x (B,E,Cin) -> (B,E,Cout); no norm / activation."""
    B, E, Cin = x.shape
    Cout = w5.shape[-1]
    w_flat = w5.reshape(5 * Cin, Cout)
    b2d = bias.reshape(1, Cout)
    grid_spec = pltpu.PrefetchScalarGridSpec(
        num_scalar_prefetch=1,
        grid=(B,),
        in_specs=[
            pl.BlockSpec((None, E, Cin), lambda b, gi: (b, 0, 0)),
            pl.BlockSpec((5 * Cin, Cout), lambda b, gi: (0, 0)),
            pl.BlockSpec((1, Cout), lambda b, gi: (0, 0)),
        ],
        out_specs=pl.BlockSpec((None, E, Cout), lambda b, gi: (b, 0, 0)),
        scratch_shapes=[pltpu.VMEM((E, Cin), x.dtype) for _ in range(4)],
    )
    return pl.pallas_call(
        _up_conv_kernel,
        out_shape=jax.ShapeDtypeStruct((B, E, Cout), x.dtype),
        grid_spec=grid_spec,
        compiler_params=_compiler_params(),
    )(gi_flat, x, w_flat, b2d)


def mesh_conv_skip_norm_relu(x, from_down, gi_flat, w5, bias):
    """conv1: MeshConv over cat([x, from_down], channels) + InstanceNorm + ReLU,
    with the concat folded into two accumulating dots (weight split)."""
    B, E, Cx = x.shape
    _, _, Cd = from_down.shape
    Cout = w5.shape[-1]
    assert w5.shape[1] == Cx + Cd
    assert Cx == Cd, "scratch reuse assumes equal channel widths for both streams"
    wx = w5[:, :Cx, :].reshape(5 * Cx, Cout)
    wd = w5[:, Cx:, :].reshape(5 * Cd, Cout)
    b2d = bias.reshape(1, Cout)
    grid_spec = pltpu.PrefetchScalarGridSpec(
        num_scalar_prefetch=1,
        grid=(B,),
        in_specs=[
            pl.BlockSpec((None, E, Cx), lambda b, gi: (b, 0, 0)),
            pl.BlockSpec((None, E, Cd), lambda b, gi: (b, 0, 0)),
            pl.BlockSpec((5 * Cx, Cout), lambda b, gi: (0, 0)),
            pl.BlockSpec((5 * Cd, Cout), lambda b, gi: (0, 0)),
            pl.BlockSpec((1, Cout), lambda b, gi: (0, 0)),
        ],
        out_specs=pl.BlockSpec((None, E, Cout), lambda b, gi: (b, 0, 0)),
        scratch_shapes=[pltpu.VMEM((E, Cx), x.dtype) for _ in range(4)],
    )
    return pl.pallas_call(
        _conv1_kernel,
        out_shape=jax.ShapeDtypeStruct((B, E, Cout), x.dtype),
        grid_spec=grid_spec,
        compiler_params=_compiler_params(),
    )(gi_flat, x, from_down, wx, wd, b2d)


def mesh_conv_norm_res_relu(x, gi_flat, w5, bias):
    """conv2 block: MeshConv + InstanceNorm + residual + ReLU, fully fused."""
    B, E, Cin = x.shape
    Cout = w5.shape[-1]
    assert Cin == Cout, "residual add requires matching channel counts"
    w_flat = w5.reshape(5 * Cin, Cout)
    b2d = bias.reshape(1, Cout)
    grid_spec = pltpu.PrefetchScalarGridSpec(
        num_scalar_prefetch=1,
        grid=(B,),
        in_specs=[
            pl.BlockSpec((None, E, Cin), lambda b, gi: (b, 0, 0)),
            pl.BlockSpec((5 * Cin, Cout), lambda b, gi: (0, 0)),
            pl.BlockSpec((1, Cout), lambda b, gi: (0, 0)),
        ],
        out_specs=pl.BlockSpec((None, E, Cout), lambda b, gi: (b, 0, 0)),
        scratch_shapes=[pltpu.VMEM((E, Cin), x.dtype) for _ in range(4)],
    )
    return pl.pallas_call(
        _conv2_kernel,
        out_shape=jax.ShapeDtypeStruct((B, E, Cout), x.dtype),
        grid_spec=grid_spec,
        compiler_params=_compiler_params(),
    )(gi_flat, x, w_flat, b2d)


def upconv_forward(from_up, from_down, Gi, params):
    """UpConv.forward((from_up, meshes), from_down) for the configuration
    (blocks=len(params['conv2']), unroll=0, residual=True, batch_norm=True,
     transfer_data=True).  Gi: (B, E, 4) GeMM neighbour indices.
    Returns (B, E, out_channels)  ==  torch (B, out_channels, E)."""
    B, E, _ = Gi.shape
    # (B, E, 4) -> (B, 4*E) int32 for SMEM scalar prefetch (long axis last).
    gi_flat = jnp.transpose(Gi.astype(jnp.int32), (0, 2, 1)).reshape(B, 4 * E)

    # x1 = self.up_conv(from_up, meshes).squeeze(3)
    x1 = mesh_conv(from_up, gi_flat, *params["up_conv"])
    # transfer_data concat + conv1 + bn[0] + relu (fused, concat-free)
    x1 = mesh_conv_skip_norm_relu(x1, from_down, gi_flat, *params["conv1"])
    x2 = x1
    for w5, bias in params["conv2"]:
        # conv2[idx] + bn[idx+1] + residual + relu (fused)
        x2 = mesh_conv_norm_res_relu(x1, gi_flat, w5, bias)
        x1 = x2
    return x2


# ---------------------------------------------------------------------------
# Pure-JAX reference (mirrors torch semantics) for correctness check
# ---------------------------------------------------------------------------
def _mesh_conv_ref(x, Gi, w5, bias):
    nbrs = jax.vmap(lambda xb, gb: xb[gb])(x, Gi)            # (B, E, 4, C)
    n1, n2, n3, n4 = (nbrs[:, :, k, :] for k in range(4))
    feats = (x, jnp.abs(n1 - n3), n1 + n3, jnp.abs(n2 - n4), n2 + n4)
    out = bias.reshape(1, 1, -1)
    for k in range(5):
        out = out + jnp.einsum("bec,cd->bed", feats[k], w5[k])
    return out


def _inorm_ref(x):
    mean = x.mean(axis=1, keepdims=True)
    var = ((x - mean) ** 2).mean(axis=1, keepdims=True)
    return (x - mean) / jnp.sqrt(var + EPS)


def _upconv_ref(from_up, from_down, Gi, params):
    x1 = _mesh_conv_ref(from_up, Gi, *params["up_conv"])
    x1 = jnp.concatenate([x1, from_down], axis=-1)
    x1 = _mesh_conv_ref(x1, Gi, *params["conv1"])
    x1 = jnp.maximum(_inorm_ref(x1), 0.0)
    x2 = x1
    for w5, bias in params["conv2"]:
        x2 = _mesh_conv_ref(x1, Gi, w5, bias)
        x2 = jnp.maximum(_inorm_ref(x2) + x1, 0.0)
        x1 = x2
    return x2


# ---------------------------------------------------------------------------
# Deterministic parameter init (torch Conv2d weight shape (Cout, Cin, 1, 5))
# ---------------------------------------------------------------------------
def _make_conv_params(key, cin, cout):
    kw, kb = jax.random.split(key)
    w = jax.random.normal(kw, (cout, cin, 1, 5), jnp.float32) * 0.1
    b = jax.random.normal(kb, (cout,), jnp.float32) * 0.1
    # (5, Cin, Cout):  w5[k, ci, co] = w[co, ci, 0, k]
    w5 = jnp.transpose(w[:, :, 0, :], (2, 1, 0))
    return w5, b


if __name__ == "__main__":
    B, E = 2, 128
    in_channels, out_channels, blocks = 8, 16, 2

    key = jax.random.PRNGKey(0)
    keys = jax.random.split(key, 5 + blocks)
    k_up, k_c1, k_x, k_d, k_g = keys[:5]
    k_blocks = keys[5:]

    params = {
        "up_conv": _make_conv_params(k_up, in_channels, out_channels),
        "conv1":   _make_conv_params(k_c1, 2 * out_channels, out_channels),
        "conv2":   [_make_conv_params(k_blocks[i], out_channels, out_channels)
                    for i in range(blocks)],
    }

    # Synthetic GeMM connectivity: 4 arbitrary neighbours per edge.
    Gi = jax.random.randint(k_g, (B, E, 4), 0, E, dtype=jnp.int32)
    from_up = jax.random.normal(k_x, (B, E, in_channels), jnp.float32)
    from_down = jax.random.normal(k_d, (B, E, out_channels), jnp.float32)

    out = jax.jit(upconv_forward)(from_up, from_down, Gi, params)
    out = jax.block_until_ready(out)

    ref = _upconv_ref(from_up, from_down, Gi, params)
    assert out.shape == (B, E, out_channels)
    assert jnp.allclose(out, ref, atol=1e-4, rtol=1e-4), (
        "mismatch vs reference: max err "
        f"{jnp.max(jnp.abs(out - ref)):.3e}")

    print("KERNEL_OK")
</pallas_src>

<mosaic_0001>
module attributes {stable_mosaic.version = 11 : i64} {
  func.func @_up_conv_kernel(%arg0: i32, %arg1: memref<2x512xi32, #tpu.memory_space<smem>>, %arg2: memref<1x128x8xf32, #tpu.memory_space<vmem>>, %arg3: memref<40x16xf32, #tpu.memory_space<vmem>>, %arg4: memref<1x16xf32, #tpu.memory_space<vmem>>, %arg5: memref<1x128x16xf32, #tpu.memory_space<vmem>>, %arg6: memref<128x8xf32, #tpu.memory_space<vmem>>, %arg7: memref<128x8xf32, #tpu.memory_space<vmem>>, %arg8: memref<128x8xf32, #tpu.memory_space<vmem>>, %arg9: memref<128x8xf32, #tpu.memory_space<vmem>>) attributes {dimension_semantics = [#tpu.dimension_semantics<parallel>], iteration_bounds = array<i64: 2>, scalar_prefetch = 1 : i64, scratch_operands = 4 : i64, tpu.core_type = #tpu.core_type<tc>, window_params = [{transform_indices = @transform_0, window_bounds = array<i64: 1, 128, 8>}, {pipeline_mode = #tpu.pipeline_mode<synchronous>, transform_indices = @transform_1, window_bounds = array<i64: 40, 16>}, {pipeline_mode = #tpu.pipeline_mode<synchronous>, transform_indices = @transform_2, window_bounds = array<i64: 1, 16>}, {transform_indices = @transform_3, window_bounds = array<i64: 1, 128, 16>}]} {
    %c0_i32 = arith.constant 0 : i32
    %c128_i32 = arith.constant 128 : i32
    %0 = arith.addi %c0_i32, %c128_i32 : i32
    %c1_i32 = arith.constant 1 : i32
    scf.for %arg10 = %c0_i32 to %0 step %c1_i32  : i32 {
      %22 = arith.index_cast %arg0 : i32 to index
      %23 = arith.index_cast %arg10 : i32 to index
      %24 = memref.load %arg1[%22, %23] : memref<2x512xi32, #tpu.memory_space<smem>>
      %c128_i32_18 = arith.constant 128 : i32
      %25 = arith.addi %c128_i32_18, %arg10 : i32
      %26 = arith.index_cast %arg0 : i32 to index
      %27 = arith.index_cast %25 : i32 to index
      %28 = memref.load %arg1[%26, %27] : memref<2x512xi32, #tpu.memory_space<smem>>
      %c256_i32 = arith.constant 256 : i32
      %29 = arith.addi %c256_i32, %arg10 : i32
      %30 = arith.index_cast %arg0 : i32 to index
      %31 = arith.index_cast %29 : i32 to index
      %32 = memref.load %arg1[%30, %31] : memref<2x512xi32, #tpu.memory_space<smem>>
      %c384_i32 = arith.constant 384 : i32
      %33 = arith.addi %c384_i32, %arg10 : i32
      %34 = arith.index_cast %arg0 : i32 to index
      %35 = arith.index_cast %33 : i32 to index
      %36 = memref.load %arg1[%34, %35] : memref<2x512xi32, #tpu.memory_space<smem>>
      %c0_19 = arith.constant 0 : index
      %37 = arith.index_cast %24 : i32 to index
      %c0_20 = arith.constant 0 : index
      %38 = vector.load %arg2[%c0_19, %37, %c0_20] : memref<1x128x8xf32, #tpu.memory_space<vmem>>, vector<1x1x8xf32>
      %39 = vector.shape_cast %38 : vector<1x1x8xf32> to vector<1x8xf32>
      %40 = arith.index_cast %arg10 : i32 to index
      %c0_21 = arith.constant 0 : index
      %41 = vector.load %arg6[%40, %c0_21] : memref<128x8xf32, #tpu.memory_space<vmem>>, vector<1x8xf32>
      tpu.vector_store %arg6[%40, %c0_21], %39 {strides = array<i32>} : memref<128x8xf32, #tpu.memory_space<vmem>>, vector<1x8xf32>,
      %c0_22 = arith.constant 0 : index
      %42 = arith.index_cast %28 : i32 to index
      %c0_23 = arith.constant 0 : index
      %43 = vector.load %arg2[%c0_22, %42, %c0_23] : memref<1x128x8xf32, #tpu.memory_space<vmem>>, vector<1x1x8xf32>
      %44 = vector.shape_cast %43 : vector<1x1x8xf32> to vector<1x8xf32>
      %45 = arith.index_cast %arg10 : i32 to index
      %c0_24 = arith.constant 0 : index
      %46 = vector.load %arg7[%45, %c0_24] : memref<128x8xf32, #tpu.memory_space<vmem>>, vector<1x8xf32>
      tpu.vector_store %arg7[%45, %c0_24], %44 {strides = array<i32>} : memref<128x8xf32, #tpu.memory_space<vmem>>, vector<1x8xf32>,
      %c0_25 = arith.constant 0 : index
      %47 = arith.index_cast %32 : i32 to index
      %c0_26 = arith.constant 0 : index
      %48 = vector.load %arg2[%c0_25, %47, %c0_26] : memref<1x128x8xf32, #tpu.memory_space<vmem>>, vector<1x1x8xf32>
      %49 = vector.shape_cast %48 : vector<1x1x8xf32> to vector<1x8xf32>
      %50 = arith.index_cast %arg10 : i32 to index
      %c0_27 = arith.constant 0 : index
      %51 = vector.load %arg8[%50, %c0_27] : memref<128x8xf32, #tpu.memory_space<vmem>>, vector<1x8xf32>
      tpu.vector_store %arg8[%50, %c0_27], %49 {strides = array<i32>} : memref<128x8xf32, #tpu.memory_space<vmem>>, vector<1x8xf32>,
      %c0_28 = arith.constant 0 : index
      %52 = arith.index_cast %36 : i32 to index
      %c0_29 = arith.constant 0 : index
      %53 = vector.load %arg2[%c0_28, %52, %c0_29] : memref<1x128x8xf32, #tpu.memory_space<vmem>>, vector<1x1x8xf32>
      %54 = vector.shape_cast %53 : vector<1x1x8xf32> to vector<1x8xf32>
      %55 = arith.index_cast %arg10 : i32 to index
      %c0_30 = arith.constant 0 : index
      %56 = vector.load %arg9[%55, %c0_30] : memref<128x8xf32, #tpu.memory_space<vmem>>, vector<1x8xf32>
      tpu.vector_store %arg9[%55, %c0_30], %54 {strides = array<i32>} : memref<128x8xf32, #tpu.memory_space<vmem>>, vector<1x8xf32>,
    }
    %c128_i32_0 = arith.constant 128 : i32
    %c0 = arith.constant 0 : index
    %c0_1 = arith.constant 0 : index
    %c0_2 = arith.constant 0 : index
    %1 = vector.load %arg2[%c0, %c0_1, %c0_2] : memref<1x128x8xf32, #tpu.memory_space<vmem>>, vector<1x128x8xf32>
    %2 = vector.shape_cast %1 : vector<1x128x8xf32> to vector<128x8xf32>
    %c0_3 = arith.constant 0 : index
    %c0_4 = arith.constant 0 : index
    %3 = vector.load %arg6[%c0_3, %c0_4] : memref<128x8xf32, #tpu.memory_space<vmem>>, vector<128x8xf32>
    %c0_5 = arith.constant 0 : index
    %c0_6 = arith.constant 0 : index
    %4 = vector.load %arg7[%c0_5, %c0_6] : memref<128x8xf32, #tpu.memory_space<vmem>>, vector<128x8xf32>
    %c0_7 = arith.constant 0 : index
    %c0_8 = arith.constant 0 : index
    %5 = vector.load %arg8[%c0_7, %c0_8] : memref<128x8xf32, #tpu.memory_space<vmem>>, vector<128x8xf32>
    %c0_9 = arith.constant 0 : index
    %c0_10 = arith.constant 0 : index
    %6 = vector.load %arg9[%c0_9, %c0_10] : memref<128x8xf32, #tpu.memory_space<vmem>>, vector<128x8xf32>
    %7 = arith.subf %3, %5 : vector<128x8xf32>
    %8 = math.absf %7 : vector<128x8xf32>
    %9 = arith.addf %3, %5 : vector<128x8xf32>
    %10 = arith.subf %4, %6 : vector<128x8xf32>
    %11 = math.absf %10 : vector<128x8xf32>
    %12 = arith.addf %4, %6 : vector<128x8xf32>
    %13 = tpu.concatenate %2, %8, %9, %11, %12 in 1 : vector<128x8xf32>, vector<128x8xf32>, vector<128x8xf32>, vector<128x8xf32>, vector<128x8xf32> -> vector<128x40xf32>
    %c0_11 = arith.constant 0 : index
    %c0_12 = arith.constant 0 : index
    %14 = vector.load %arg3[%c0_11, %c0_12] : memref<40x16xf32, #tpu.memory_space<vmem>>, vector<40x16xf32>
    %cst = arith.constant dense<0.000000e+00> : vector<128x16xf32>
    %15 = tpu.matmul %13, %14, %cst {dimension_numbers = #tpu.dot_dimension_numbers<[1], [0], [0], [1], [0, 0, 1, 1], [], []>} : vector<128x40xf32>, vector<40x16xf32>, vector<128x16xf32> -> vector<128x16xf32>
    %c0_13 = arith.constant 0 : index
    %c0_14 = arith.constant 0 : index
    %16 = vector.load %arg4[%c0_13, %c0_14] : memref<1x16xf32, #tpu.memory_space<vmem>>, vector<1x16xf32>
    %17 = vector.broadcast %16 : vector<1x16xf32> to vector<128x16xf32>
    %18 = arith.addf %15, %17 : vector<128x16xf32>
    %c0_15 = arith.constant 0 : index
    %c0_16 = arith.constant 0 : index
    %c0_17 = arith.constant 0 : index
    %19 = vector.load %arg5[%c0_15, %c0_16, %c0_17] : memref<1x128x16xf32, #tpu.memory_space<vmem>>, vector<1x128x16xf32>
    %20 = vector.shape_cast %19 : vector<1x128x16xf32> to vector<128x16xf32>
    %21 = vector.shape_cast %18 : vector<128x16xf32> to vector<1x128x16xf32>
    tpu.vector_store %arg5[%c0_15, %c0_16, %c0_17], %21 {strides = array<i32>} : memref<1x128x16xf32, #tpu.memory_space<vmem>>, vector<1x128x16xf32>,
    return
  }
  func.func @transform_0(%arg0: i32, %arg1: memref<2x512xi32, #tpu.memory_space<smem>>) -> (i32, i32, i32) {
    %c0_i32 = arith.constant 0 : i32
    %c0_i32_0 = arith.constant 0 : i32
    %c0_i32_1 = arith.constant 0 : i32
    return %arg0, %c0_i32, %c0_i32_0 : i32, i32, i32
  }
  func.func @transform_1(%arg0: i32, %arg1: memref<2x512xi32, #tpu.memory_space<smem>>) -> (i32, i32) {
    %c0_i32 = arith.constant 0 : i32
    %c0_i32_0 = arith.constant 0 : i32
    %c0_i32_1 = arith.constant 0 : i32
    return %c0_i32, %c0_i32_0 : i32, i32
  }
  func.func @transform_2(%arg0: i32, %arg1: memref<2x512xi32, #tpu.memory_space<smem>>) -> (i32, i32) {
    %c0_i32 = arith.constant 0 : i32
    %c0_i32_0 = arith.constant 0 : i32
    %c0_i32_1 = arith.constant 0 : i32
    return %c0_i32, %c0_i32_0 : i32, i32
  }
  func.func @transform_3(%arg0: i32, %arg1: memref<2x512xi32, #tpu.memory_space<smem>>) -> (i32, i32, i32) {
    %c0_i32 = arith.constant 0 : i32
    %c0_i32_0 = arith.constant 0 : i32
    %c0_i32_1 = arith.constant 0 : i32
    return %arg0, %c0_i32, %c0_i32_0 : i32, i32, i32
  }
}

module attributes {stable_mosaic.version = 11 : i64} {
  func.func @_conv2_kernel(%arg0: i32, %arg1: memref<2x512xi32, #tpu.memory_space<smem>>, %arg2: memref<1x128x16xf32, #tpu.memory_space<vmem>>, %arg3: memref<80x16xf32, #tpu.memory_space<vmem>>, %arg4: memref<1x16xf32, #tpu.memory_space<vmem>>, %arg5: memref<1x128x16xf32, #tpu.memory_space<vmem>>, %arg6: memref<128x16xf32, #tpu.memory_space<vmem>>, %arg7: memref<128x16xf32, #tpu.memory_space<vmem>>, %arg8: memref<128x16xf32, #tpu.memory_space<vmem>>, %arg9: memref<128x16xf32, #tpu.memory_space<vmem>>) attributes {dimension_semantics = [#tpu.dimension_semantics<parallel>], iteration_bounds = array<i64: 2>, scalar_prefetch = 1 : i64, scratch_operands = 4 : i64, tpu.core_type = #tpu.core_type<tc>, window_params = [{transform_indices = @transform_0, window_bounds = array<i64: 1, 128, 16>}, {pipeline_mode = #tpu.pipeline_mode<synchronous>, transform_indices = @transform_1, window_bounds = array<i64: 80, 16>}, {pipeline_mode = #tpu.pipeline_mode<synchronous>, transform_indices = @transform_2, window_bounds = array<i64: 1, 16>}, {transform_indices = @transform_3, window_bounds = array<i64: 1, 128, 16>}]} {
    %c0_i32 = arith.constant 0 : i32
    %c128_i32 = arith.constant 128 : i32
    %0 = arith.addi %c0_i32, %c128_i32 : i32
    %c1_i32 = arith.constant 1 : i32
    scf.for %arg10 = %c0_i32 to %0 step %c1_i32  : i32 {
      %47 = arith.index_cast %arg0 : i32 to index
      %48 = arith.index_cast %arg10 : i32 to index
      %49 = memref.load %arg1[%47, %48] : memref<2x512xi32, #tpu.memory_space<smem>>
      %c128_i32_28 = arith.constant 128 : i32
      %50 = arith.addi %c128_i32_28, %arg10 : i32
      %51 = arith.index_cast %arg0 : i32 to index
      %52 = arith.index_cast %50 : i32 to index
      %53 = memref.load %arg1[%51, %52] : memref<2x512xi32, #tpu.memory_space<smem>>
      %c256_i32 = arith.constant 256 : i32
      %54 = arith.addi %c256_i32, %arg10 : i32
      %55 = arith.index_cast %arg0 : i32 to index
      %56 = arith.index_cast %54 : i32 to index
      %57 = memref.load %arg1[%55, %56] : memref<2x512xi32, #tpu.memory_space<smem>>
      %c384_i32 = arith.constant 384 : i32
      %58 = arith.addi %c384_i32, %arg10 : i32
      %59 = arith.index_cast %arg0 : i32 to index
      %60 = arith.index_cast %58 : i32 to index
      %61 = memref.load %arg1[%59, %60] : memref<2x512xi32, #tpu.memory_space<smem>>
      %c0_29 = arith.constant 0 : index
      %62 = arith.index_cast %49 : i32 to index
      %c0_30 = arith.constant 0 : index
      %63 = vector.load %arg2[%c0_29, %62, %c0_30] : memref<1x128x16xf32, #tpu.memory_space<vmem>>, vector<1x1x16xf32>
      %64 = vector.shape_cast %63 : vector<1x1x16xf32> to vector<1x16xf32>
      %65 = arith.index_cast %arg10 : i32 to index
      %c0_31 = arith.constant 0 : index
      %66 = vector.load %arg6[%65, %c0_31] : memref<128x16xf32, #tpu.memory_space<vmem>>, vector<1x16xf32>
      tpu.vector_store %arg6[%65, %c0_31], %64 {strides = array<i32>} : memref<128x16xf32, #tpu.memory_space<vmem>>, vector<1x16xf32>,
      %c0_32 = arith.constant 0 : index
      %67 = arith.index_cast %53 : i32 to index
      %c0_33 = arith.constant 0 : index
      %68 = vector.load %arg2[%c0_32, %67, %c0_33] : memref<1x128x16xf32, #tpu.memory_space<vmem>>, vector<1x1x16xf32>
      %69 = vector.shape_cast %68 : vector<1x1x16xf32> to vector<1x16xf32>
      %70 = arith.index_cast %arg10 : i32 to index
      %c0_34 = arith.constant 0 : index
      %71 = vector.load %arg7[%70, %c0_34] : memref<128x16xf32, #tpu.memory_space<vmem>>, vector<1x16xf32>
      tpu.vector_store %arg7[%70, %c0_34], %69 {strides = array<i32>} : memref<128x16xf32, #tpu.memory_space<vmem>>, vector<1x16xf32>,
      %c0_35 = arith.constant 0 : index
      %72 = arith.index_cast %57 : i32 to index
      %c0_36 = arith.constant 0 : index
      %73 = vector.load %arg2[%c0_35, %72, %c0_36] : memref<1x128x16xf32, #tpu.memory_space<vmem>>, vector<1x1x16xf32>
      %74 = vector.shape_cast %73 : vector<1x1x16xf32> to vector<1x16xf32>
      %75 = arith.index_cast %arg10 : i32 to index
      %c0_37 = arith.constant 0 : index
      %76 = vector.load %arg8[%75, %c0_37] : memref<128x16xf32, #tpu.memory_space<vmem>>, vector<1x16xf32>
      tpu.vector_store %arg8[%75, %c0_37], %74 {strides = array<i32>} : memref<128x16xf32, #tpu.memory_space<vmem>>, vector<1x16xf32>,
      %c0_38 = arith.constant 0 : index
      %77 = arith.index_cast %61 : i32 to index
      %c0_39 = arith.constant 0 : index
      %78 = vector.load %arg2[%c0_38, %77, %c0_39] : memref<1x128x16xf32, #tpu.memory_space<vmem>>, vector<1x1x16xf32>
      %79 = vector.shape_cast %78 : vector<1x1x16xf32> to vector<1x16xf32>
      %80 = arith.index_cast %arg10 : i32 to index
      %c0_40 = arith.constant 0 : index
      %81 = vector.load %arg9[%80, %c0_40] : memref<128x16xf32, #tpu.memory_space<vmem>>, vector<1x16xf32>
      tpu.vector_store %arg9[%80, %c0_40], %79 {strides = array<i32>} : memref<128x16xf32, #tpu.memory_space<vmem>>, vector<1x16xf32>,
    }
    %c128_i32_0 = arith.constant 128 : i32
    %c0 = arith.constant 0 : index
    %c0_1 = arith.constant 0 : index
    %c0_2 = arith.constant 0 : index
    %1 = vector.load %arg2[%c0, %c0_1, %c0_2] : memref<1x128x16xf32, #tpu.memory_space<vmem>>, vector<1x128x16xf32>
    %2 = vector.shape_cast %1 : vector<1x128x16xf32> to vector<128x16xf32>
    %c0_3 = arith.constant 0 : index
    %c0_4 = arith.constant 0 : index
    %3 = vector.load %arg6[%c0_3, %c0_4] : memref<128x16xf32, #tpu.memory_space<vmem>>, vector<128x16xf32>
    %c0_5 = arith.constant 0 : index
    %c0_6 = arith.constant 0 : index
    %4 = vector.load %arg7[%c0_5, %c0_6] : memref<128x16xf32, #tpu.memory_space<vmem>>, vector<128x16xf32>
    %c0_7 = arith.constant 0 : index
    %c0_8 = arith.constant 0 : index
    %5 = vector.load %arg8[%c0_7, %c0_8] : memref<128x16xf32, #tpu.memory_space<vmem>>, vector<128x16xf32>
    %c0_9 = arith.constant 0 : index
    %c0_10 = arith.constant 0 : index
    %6 = vector.load %arg9[%c0_9, %c0_10] : memref<128x16xf32, #tpu.memory_space<vmem>>, vector<128x16xf32>
    %7 = arith.subf %3, %5 : vector<128x16xf32>
    %8 = math.absf %7 : vector<128x16xf32>
    %9 = arith.addf %3, %5 : vector<128x16xf32>
    %10 = arith.subf %4, %6 : vector<128x16xf32>
    %11 = math.absf %10 : vector<128x16xf32>
    %12 = arith.addf %4, %6 : vector<128x16xf32>
    %13 = tpu.concatenate %2, %8, %9, %11, %12 in 1 : vector<128x16xf32>, vector<128x16xf32>, vector<128x16xf32>, vector<128x16xf32>, vector<128x16xf32> -> vector<128x80xf32>
    %c0_11 = arith.constant 0 : index
    %c0_12 = arith.constant 0 : index
    %14 = vector.load %arg3[%c0_11, %c0_12] : memref<80x16xf32, #tpu.memory_space<vmem>>, vector<80x16xf32>
    %cst = arith.constant dense<0.000000e+00> : vector<128x16xf32>
    %15 = tpu.matmul %13, %14, %cst {dimension_numbers = #tpu.dot_dimension_numbers<[1], [0], [0], [1], [0, 0, 1, 1], [], []>} : vector<128x80xf32>, vector<80x16xf32>, vector<128x16xf32> -> vector<128x16xf32>
    %c0_13 = arith.constant 0 : index
    %c0_14 = arith.constant 0 : index
    %16 = vector.load %arg4[%c0_13, %c0_14] : memref<1x16xf32, #tpu.memory_space<vmem>>, vector<1x16xf32>
    %17 = vector.broadcast %16 : vector<1x16xf32> to vector<128x16xf32>
    %18 = arith.addf %15, %17 : vector<128x16xf32>
    %cst_15 = arith.constant dense<0.000000e+00> : vector<16xf32>
    %19 = vector.multi_reduction <add>, %18, %cst_15 [0] : vector<128x16xf32> to vector<16xf32>
    %20 = vector.shape_cast %19 : vector<16xf32> to vector<1x16xf32>
    %21 = arith.mulf %18, %18 : vector<128x16xf32>
    %cst_16 = arith.constant dense<0.000000e+00> : vector<16xf32>
    %22 = vector.multi_reduction <add>, %21, %cst_16 [0] : vector<128x16xf32> to vector<16xf32>
    %23 = vector.shape_cast %22 : vector<16xf32> to vector<1x16xf32>
    %cst_17 = arith.constant 7.812500e-03 : f32
    %24 = vector.broadcast %cst_17 : f32 to vector<1x16xf32>
    %25 = arith.mulf %20, %24 : vector<1x16xf32>
    %cst_18 = arith.constant 7.812500e-03 : f32
    %26 = vector.broadcast %cst_18 : f32 to vector<1x16xf32>
    %27 = arith.mulf %23, %26 : vector<1x16xf32>
    %28 = arith.mulf %25, %25 : vector<1x16xf32>
    %29 = arith.subf %27, %28 : vector<1x16xf32>
    %cst_19 = arith.constant 0.000000e+00 : f32
    %30 = vector.broadcast %cst_19 : f32 to vector<1x16xf32>
    %31 = arith.maximumf %29, %30 : vector<1x16xf32>
    %32 = vector.broadcast %25 : vector<1x16xf32> to vector<128x16xf32>
    %33 = arith.subf %18, %32 : vector<128x16xf32>
    %cst_20 = arith.constant 9.99999974E-6 : f32
    %34 = vector.broadcast %cst_20 : f32 to vector<1x16xf32>
    %35 = arith.addf %31, %34 : vector<1x16xf32>
    %36 = math.rsqrt %35 : vector<1x16xf32>
    %37 = vector.broadcast %36 : vector<1x16xf32> to vector<128x16xf32>
    %38 = arith.mulf %33, %37 : vector<128x16xf32>
    %c0_21 = arith.constant 0 : index
    %c0_22 = arith.constant 0 : index
    %c0_23 = arith.constant 0 : index
    %39 = vector.load %arg2[%c0_21, %c0_22, %c0_23] : memref<1x128x16xf32, #tpu.memory_space<vmem>>, vector<1x128x16xf32>
    %40 = vector.shape_cast %39 : vector<1x128x16xf32> to vector<128x16xf32>
    %41 = arith.addf %38, %40 : vector<128x16xf32>
    %cst_24 = arith.constant 0.000000e+00 : f32
    %42 = vector.broadcast %cst_24 : f32 to vector<128x16xf32>
    %43 = arith.maximumf %41, %42 : vector<128x16xf32>
    %c0_25 = arith.constant 0 : index
    %c0_26 = arith.constant 0 : index
    %c0_27 = arith.constant 0 : index
    %44 = vector.load %arg5[%c0_25, %c0_26, %c0_27] : memref<1x128x16xf32, #tpu.memory_space<vmem>>, vector<1x128x16xf32>
    %45 = vector.shape_cast %44 : vector<1x128x16xf32> to vector<128x16xf32>
    %46 = vector.shape_cast %43 : vector<128x16xf32> to vector<1x128x16xf32>
    tpu.vector_store %arg5[%c0_25, %c0_26, %c0_27], %46 {strides = array<i32>} : memref<1x128x16xf32, #tpu.memory_space<vmem>>, vector<1x128x16xf32>,
    return
  }
  func.func @transform_0(%arg0: i32, %arg1: memref<2x512xi32, #tpu.memory_space<smem>>) -> (i32, i32, i32) {
    %c0_i32 = arith.constant 0 : i32
    %c0_i32_0 = arith.constant 0 : i32
    %c0_i32_1 = arith.constant 0 : i32
    return %arg0, %c0_i32, %c0_i32_0 : i32, i32, i32
  }
  func.func @transform_1(%arg0: i32, %arg1: memref<2x512xi32, #tpu.memory_space<smem>>) -> (i32, i32) {
    %c0_i32 = arith.constant 0 : i32
    %c0_i32_0 = arith.constant 0 : i32
    %c0_i32_1 = arith.constant 0 : i32
    return %c0_i32, %c0_i32_0 : i32, i32
  }
  func.func @transform_2(%arg0: i32, %arg1: memref<2x512xi32, #tpu.memory_space<smem>>) -> (i32, i32) {
    %c0_i32 = arith.constant 0 : i32
    %c0_i32_0 = arith.constant 0 : i32
    %c0_i32_1 = arith.constant 0 : i32
    return %c0_i32, %c0_i32_0 : i32, i32
  }
  func.func @transform_3(%arg0: i32, %arg1: memref<2x512xi32, #tpu.memory_space<smem>>) -> (i32, i32, i32) {
    %c0_i32 = arith.constant 0 : i32
    %c0_i32_0 = arith.constant 0 : i32
    %c0_i32_1 = arith.constant 0 : i32
    return %arg0, %c0_i32, %c0_i32_0 : i32, i32, i32
  }
}

module attributes {stable_mosaic.version = 11 : i64} {
  func.func @_conv1_kernel(%arg0: i32, %arg1: memref<2x512xi32, #tpu.memory_space<smem>>, %arg2: memref<1x128x16xf32, #tpu.memory_space<vmem>>, %arg3: memref<1x128x16xf32, #tpu.memory_space<vmem>>, %arg4: memref<80x16xf32, #tpu.memory_space<vmem>>, %arg5: memref<80x16xf32, #tpu.memory_space<vmem>>, %arg6: memref<1x16xf32, #tpu.memory_space<vmem>>, %arg7: memref<1x128x16xf32, #tpu.memory_space<vmem>>, %arg8: memref<128x16xf32, #tpu.memory_space<vmem>>, %arg9: memref<128x16xf32, #tpu.memory_space<vmem>>, %arg10: memref<128x16xf32, #tpu.memory_space<vmem>>, %arg11: memref<128x16xf32, #tpu.memory_space<vmem>>) attributes {dimension_semantics = [#tpu.dimension_semantics<parallel>], iteration_bounds = array<i64: 2>, scalar_prefetch = 1 : i64, scratch_operands = 4 : i64, tpu.core_type = #tpu.core_type<tc>, window_params = [{transform_indices = @transform_0, window_bounds = array<i64: 1, 128, 16>}, {transform_indices = @transform_1, window_bounds = array<i64: 1, 128, 16>}, {pipeline_mode = #tpu.pipeline_mode<synchronous>, transform_indices = @transform_2, window_bounds = array<i64: 80, 16>}, {pipeline_mode = #tpu.pipeline_mode<synchronous>, transform_indices = @transform_3, window_bounds = array<i64: 80, 16>}, {pipeline_mode = #tpu.pipeline_mode<synchronous>, transform_indices = @transform_4, window_bounds = array<i64: 1, 16>}, {transform_indices = @transform_5, window_bounds = array<i64: 1, 128, 16>}]} {
    %c0_i32 = arith.constant 0 : i32
    %c128_i32 = arith.constant 128 : i32
    %0 = arith.addi %c0_i32, %c128_i32 : i32
    %c1_i32 = arith.constant 1 : i32
    scf.for %arg12 = %c0_i32 to %0 step %c1_i32  : i32 {
      %61 = arith.index_cast %arg0 : i32 to index
      %62 = arith.index_cast %arg12 : i32 to index
      %63 = memref.load %arg1[%61, %62] : memref<2x512xi32, #tpu.memory_space<smem>>
      %c128_i32_43 = arith.constant 128 : i32
      %64 = arith.addi %c128_i32_43, %arg12 : i32
      %65 = arith.index_cast %arg0 : i32 to index
      %66 = arith.index_cast %64 : i32 to index
      %67 = memref.load %arg1[%65, %66] : memref<2x512xi32, #tpu.memory_space<smem>>
      %c256_i32 = arith.constant 256 : i32
      %68 = arith.addi %c256_i32, %arg12 : i32
      %69 = arith.index_cast %arg0 : i32 to index
      %70 = arith.index_cast %68 : i32 to index
      %71 = memref.load %arg1[%69, %70] : memref<2x512xi32, #tpu.memory_space<smem>>
      %c384_i32 = arith.constant 384 : i32
      %72 = arith.addi %c384_i32, %arg12 : i32
      %73 = arith.index_cast %arg0 : i32 to index
      %74 = arith.index_cast %72 : i32 to index
      %75 = memref.load %arg1[%73, %74] : memref<2x512xi32, #tpu.memory_space<smem>>
      %c0_44 = arith.constant 0 : index
      %76 = arith.index_cast %63 : i32 to index
      %c0_45 = arith.constant 0 : index
      %77 = vector.load %arg2[%c0_44, %76, %c0_45] : memref<1x128x16xf32, #tpu.memory_space<vmem>>, vector<1x1x16xf32>
      %78 = vector.shape_cast %77 : vector<1x1x16xf32> to vector<1x16xf32>
      %79 = arith.index_cast %arg12 : i32 to index
      %c0_46 = arith.constant 0 : index
      %80 = vector.load %arg8[%79, %c0_46] : memref<128x16xf32, #tpu.memory_space<vmem>>, vector<1x16xf32>
      tpu.vector_store %arg8[%79, %c0_46], %78 {strides = array<i32>} : memref<128x16xf32, #tpu.memory_space<vmem>>, vector<1x16xf32>,
      %c0_47 = arith.constant 0 : index
      %81 = arith.index_cast %67 : i32 to index
      %c0_48 = arith.constant 0 : index
      %82 = vector.load %arg2[%c0_47, %81, %c0_48] : memref<1x128x16xf32, #tpu.memory_space<vmem>>, vector<1x1x16xf32>
      %83 = vector.shape_cast %82 : vector<1x1x16xf32> to vector<1x16xf32>
      %84 = arith.index_cast %arg12 : i32 to index
      %c0_49 = arith.constant 0 : index
      %85 = vector.load %arg9[%84, %c0_49] : memref<128x16xf32, #tpu.memory_space<vmem>>, vector<1x16xf32>
      tpu.vector_store %arg9[%84, %c0_49], %83 {strides = array<i32>} : memref<128x16xf32, #tpu.memory_space<vmem>>, vector<1x16xf32>,
      %c0_50 = arith.constant 0 : index
      %86 = arith.index_cast %71 : i32 to index
      %c0_51 = arith.constant 0 : index
      %87 = vector.load %arg2[%c0_50, %86, %c0_51] : memref<1x128x16xf32, #tpu.memory_space<vmem>>, vector<1x1x16xf32>
      %88 = vector.shape_cast %87 : vector<1x1x16xf32> to vector<1x16xf32>
      %89 = arith.index_cast %arg12 : i32 to index
      %c0_52 = arith.constant 0 : index
      %90 = vector.load %arg10[%89, %c0_52] : memref<128x16xf32, #tpu.memory_space<vmem>>, vector<1x16xf32>
      tpu.vector_store %arg10[%89, %c0_52], %88 {strides = array<i32>} : memref<128x16xf32, #tpu.memory_space<vmem>>, vector<1x16xf32>,
      %c0_53 = arith.constant 0 : index
      %91 = arith.index_cast %75 : i32 to index
      %c0_54 = arith.constant 0 : index
      %92 = vector.load %arg2[%c0_53, %91, %c0_54] : memref<1x128x16xf32, #tpu.memory_space<vmem>>, vector<1x1x16xf32>
      %93 = vector.shape_cast %92 : vector<1x1x16xf32> to vector<1x16xf32>
      %94 = arith.index_cast %arg12 : i32 to index
      %c0_55 = arith.constant 0 : index
      %95 = vector.load %arg11[%94, %c0_55] : memref<128x16xf32, #tpu.memory_space<vmem>>, vector<1x16xf32>
      tpu.vector_store %arg11[%94, %c0_55], %93 {strides = array<i32>} : memref<128x16xf32, #tpu.memory_space<vmem>>, vector<1x16xf32>,
    }
    %c128_i32_0 = arith.constant 128 : i32
    %c0 = arith.constant 0 : index
    %c0_1 = arith.constant 0 : index
    %c0_2 = arith.constant 0 : index
    %1 = vector.load %arg2[%c0, %c0_1, %c0_2] : memref<1x128x16xf32, #tpu.memory_space<vmem>>, vector<1x128x16xf32>
    %2 = vector.shape_cast %1 : vector<1x128x16xf32> to vector<128x16xf32>
    %c0_3 = arith.constant 0 : index
    %c0_4 = arith.constant 0 : index
    %3 = vector.load %arg8[%c0_3, %c0_4] : memref<128x16xf32, #tpu.memory_space<vmem>>, vector<128x16xf32>
    %c0_5 = arith.constant 0 : index
    %c0_6 = arith.constant 0 : index
    %4 = vector.load %arg9[%c0_5, %c0_6] : memref<128x16xf32, #tpu.memory_space<vmem>>, vector<128x16xf32>
    %c0_7 = arith.constant 0 : index
    %c0_8 = arith.constant 0 : index
    %5 = vector.load %arg10[%c0_7, %c0_8] : memref<128x16xf32, #tpu.memory_space<vmem>>, vector<128x16xf32>
    %c0_9 = arith.constant 0 : index
    %c0_10 = arith.constant 0 : index
    %6 = vector.load %arg11[%c0_9, %c0_10] : memref<128x16xf32, #tpu.memory_space<vmem>>, vector<128x16xf32>
    %7 = arith.subf %3, %5 : vector<128x16xf32>
    %8 = math.absf %7 : vector<128x16xf32>
    %9 = arith.addf %3, %5 : vector<128x16xf32>
    %10 = arith.subf %4, %6 : vector<128x16xf32>
    %11 = math.absf %10 : vector<128x16xf32>
    %12 = arith.addf %4, %6 : vector<128x16xf32>
    %13 = tpu.concatenate %2, %8, %9, %11, %12 in 1 : vector<128x16xf32>, vector<128x16xf32>, vector<128x16xf32>, vector<128x16xf32>, vector<128x16xf32> -> vector<128x80xf32>
    %c0_11 = arith.constant 0 : index
    %c0_12 = arith.constant 0 : index
    %14 = vector.load %arg4[%c0_11, %c0_12] : memref<80x16xf32, #tpu.memory_space<vmem>>, vector<80x16xf32>
    %cst = arith.constant dense<0.000000e+00> : vector<128x16xf32>
    %15 = tpu.matmul %13, %14, %cst {dimension_numbers = #tpu.dot_dimension_numbers<[1], [0], [0], [1], [0, 0, 1, 1], [], []>} : vector<128x80xf32>, vector<80x16xf32>, vector<128x16xf32> -> vector<128x16xf32>
    %c0_i32_13 = arith.constant 0 : i32
    %c128_i32_14 = arith.constant 128 : i32
    %16 = arith.addi %c0_i32_13, %c128_i32_14 : i32
    %c1_i32_15 = arith.constant 1 : i32
    scf.for %arg12 = %c0_i32_13 to %16 step %c1_i32_15  : i32 {
      %61 = arith.index_cast %arg0 : i32 to index
      %62 = arith.index_cast %arg12 : i32 to index
      %63 = memref.load %arg1[%61, %62] : memref<2x512xi32, #tpu.memory_space<smem>>
      %c128_i32_43 = arith.constant 128 : i32
      %64 = arith.addi %c128_i32_43, %arg12 : i32
      %65 = arith.index_cast %arg0 : i32 to index
      %66 = arith.index_cast %64 : i32 to index
      %67 = memref.load %arg1[%65, %66] : memref<2x512xi32, #tpu.memory_space<smem>>
      %c256_i32 = arith.constant 256 : i32
      %68 = arith.addi %c256_i32, %arg12 : i32
      %69 = arith.index_cast %arg0 : i32 to index
      %70 = arith.index_cast %68 : i32 to index
      %71 = memref.load %arg1[%69, %70] : memref<2x512xi32, #tpu.memory_space<smem>>
      %c384_i32 = arith.constant 384 : i32
      %72 = arith.addi %c384_i32, %arg12 : i32
      %73 = arith.index_cast %arg0 : i32 to index
      %74 = arith.index_cast %72 : i32 to index
      %75 = memref.load %arg1[%73, %74] : memref<2x512xi32, #tpu.memory_space<smem>>
      %c0_44 = arith.constant 0 : index
      %76 = arith.index_cast %63 : i32 to index
      %c0_45 = arith.constant 0 : index
      %77 = vector.load %arg3[%c0_44, %76, %c0_45] : memref<1x128x16xf32, #tpu.memory_space<vmem>>, vector<1x1x16xf32>
      %78 = vector.shape_cast %77 : vector<1x1x16xf32> to vector<1x16xf32>
      %79 = arith.index_cast %arg12 : i32 to index
      %c0_46 = arith.constant 0 : index
      %80 = vector.load %arg8[%79, %c0_46] : memref<128x16xf32, #tpu.memory_space<vmem>>, vector<1x16xf32>
      tpu.vector_store %arg8[%79, %c0_46], %78 {strides = array<i32>} : memref<128x16xf32, #tpu.memory_space<vmem>>, vector<1x16xf32>,
      %c0_47 = arith.constant 0 : index
      %81 = arith.index_cast %67 : i32 to index
      %c0_48 = arith.constant 0 : index
      %82 = vector.load %arg3[%c0_47, %81, %c0_48] : memref<1x128x16xf32, #tpu.memory_space<vmem>>, vector<1x1x16xf32>
      %83 = vector.shape_cast %82 : vector<1x1x16xf32> to vector<1x16xf32>
      %84 = arith.index_cast %arg12 : i32 to index
      %c0_49 = arith.constant 0 : index
      %85 = vector.load %arg9[%84, %c0_49] : memref<128x16xf32, #tpu.memory_space<vmem>>, vector<1x16xf32>
      tpu.vector_store %arg9[%84, %c0_49], %83 {strides = array<i32>} : memref<128x16xf32, #tpu.memory_space<vmem>>, vector<1x16xf32>,
      %c0_50 = arith.constant 0 : index
      %86 = arith.index_cast %71 : i32 to index
      %c0_51 = arith.constant 0 : index
      %87 = vector.load %arg3[%c0_50, %86, %c0_51] : memref<1x128x16xf32, #tpu.memory_space<vmem>>, vector<1x1x16xf32>
      %88 = vector.shape_cast %87 : vector<1x1x16xf32> to vector<1x16xf32>
      %89 = arith.index_cast %arg12 : i32 to index
      %c0_52 = arith.constant 0 : index
      %90 = vector.load %arg10[%89, %c0_52] : memref<128x16xf32, #tpu.memory_space<vmem>>, vector<1x16xf32>
      tpu.vector_store %arg10[%89, %c0_52], %88 {strides = array<i32>} : memref<128x16xf32, #tpu.memory_space<vmem>>, vector<1x16xf32>,
      %c0_53 = arith.constant 0 : index
      %91 = arith.index_cast %75 : i32 to index
      %c0_54 = arith.constant 0 : index
      %92 = vector.load %arg3[%c0_53, %91, %c0_54] : memref<1x128x16xf32, #tpu.memory_space<vmem>>, vector<1x1x16xf32>
      %93 = vector.shape_cast %92 : vector<1x1x16xf32> to vector<1x16xf32>
      %94 = arith.index_cast %arg12 : i32 to index
      %c0_55 = arith.constant 0 : index
      %95 = vector.load %arg11[%94, %c0_55] : memref<128x16xf32, #tpu.memory_space<vmem>>, vector<1x16xf32>
      tpu.vector_store %arg11[%94, %c0_55], %93 {strides = array<i32>} : memref<128x16xf32, #tpu.memory_space<vmem>>, vector<1x16xf32>,
    }
    %c128_i32_16 = arith.constant 128 : i32
    %c0_17 = arith.constant 0 : index
    %c0_18 = arith.constant 0 : index
    %c0_19 = arith.constant 0 : index
    %17 = vector.load %arg3[%c0_17, %c0_18, %c0_19] : memref<1x128x16xf32, #tpu.memory_space<vmem>>, vector<1x128x16xf32>
    %18 = vector.shape_cast %17 : vector<1x128x16xf32> to vector<128x16xf32>
    %c0_20 = arith.constant 0 : index
    %c0_21 = arith.constant 0 : index
    %19 = vector.load %arg8[%c0_20, %c0_21] : memref<128x16xf32, #tpu.memory_space<vmem>>, vector<128x16xf32>
    %c0_22 = arith.constant 0 : index
    %c0_23 = arith.constant 0 : index
    %20 = vector.load %arg9[%c0_22, %c0_23] : memref<128x16xf32, #tpu.memory_space<vmem>>, vector<128x16xf32>
    %c0_24 = arith.constant 0 : index
    %c0_25 = arith.constant 0 : index
    %21 = vector.load %arg10[%c0_24, %c0_25] : memref<128x16xf32, #tpu.memory_space<vmem>>, vector<128x16xf32>
    %c0_26 = arith.constant 0 : index
    %c0_27 = arith.constant 0 : index
    %22 = vector.load %arg11[%c0_26, %c0_27] : memref<128x16xf32, #tpu.memory_space<vmem>>, vector<128x16xf32>
    %23 = arith.subf %19, %21 : vector<128x16xf32>
    %24 = math.absf %23 : vector<128x16xf32>
    %25 = arith.addf %19, %21 : vector<128x16xf32>
    %26 = arith.subf %20, %22 : vector<128x16xf32>
    %27 = math.absf %26 : vector<128x16xf32>
    %28 = arith.addf %20, %22 : vector<128x16xf32>
    %29 = tpu.concatenate %18, %24, %25, %27, %28 in 1 : vector<128x16xf32>, vector<128x16xf32>, vector<128x16xf32>, vector<128x16xf32>, vector<128x16xf32> -> vector<128x80xf32>
    %c0_28 = arith.constant 0 : index
    %c0_29 = arith.constant 0 : index
    %30 = vector.load %arg5[%c0_28, %c0_29] : memref<80x16xf32, #tpu.memory_space<vmem>>, vector<80x16xf32>
    %cst_30 = arith.constant dense<0.000000e+00> : vector<128x16xf32>
    %31 = tpu.matmul %29, %30, %cst_30 {dimension_numbers = #tpu.dot_dimension_numbers<[1], [0], [0], [1], [0, 0, 1, 1], [], []>} : vector<128x80xf32>, vector<80x16xf32>, vector<128x16xf32> -> vector<128x16xf32>
    %32 = arith.addf %15, %31 : vector<128x16xf32>
    %c0_31 = arith.constant 0 : index
    %c0_32 = arith.constant 0 : index
    %33 = vector.load %arg6[%c0_31, %c0_32] : memref<1x16xf32, #tpu.memory_space<vmem>>, vector<1x16xf32>
    %34 = vector.broadcast %33 : vector<1x16xf32> to vector<128x16xf32>
    %35 = arith.addf %32, %34 : vector<128x16xf32>
    %cst_33 = arith.constant dense<0.000000e+00> : vector<16xf32>
    %36 = vector.multi_reduction <add>, %35, %cst_33 [0] : vector<128x16xf32> to vector<16xf32>
    %37 = vector.shape_cast %36 : vector<16xf32> to vector<1x16xf32>
    %38 = arith.mulf %35, %35 : vector<128x16xf32>
    %cst_34 = arith.constant dense<0.000000e+00> : vector<16xf32>
    %39 = vector.multi_reduction <add>, %38, %cst_34 [0] : vector<128x16xf32> to vector<16xf32>
    %40 = vector.shape_cast %39 : vector<16xf32> to vector<1x16xf32>
    %cst_35 = arith.constant 7.812500e-03 : f32
    %41 = vector.broadcast %cst_35 : f32 to vector<1x16xf32>
    %42 = arith.mulf %37, %41 : vector<1x16xf32>
    %cst_36 = arith.constant 7.812500e-03 : f32
    %43 = vector.broadcast %cst_36 : f32 to vector<1x16xf32>
    %44 = arith.mulf %40, %43 : vector<1x16xf32>
    %45 = arith.mulf %42, %42 : vector<1x16xf32>
    %46 = arith.subf %44, %45 : vector<1x16xf32>
    %cst_37 = arith.constant 0.000000e+00 : f32
    %47 = vector.broadcast %cst_37 : f32 to vector<1x16xf32>
    %48 = arith.maximumf %46, %47 : vector<1x16xf32>
    %49 = vector.broadcast %42 : vector<1x16xf32> to vector<128x16xf32>
    %50 = arith.subf %35, %49 : vector<128x16xf32>
    %cst_38 = arith.constant 9.99999974E-6 : f32
    %51 = vector.broadcast %cst_38 : f32 to vector<1x16xf32>
    %52 = arith.addf %48, %51 : vector<1x16xf32>
    %53 = math.rsqrt %52 : vector<1x16xf32>
    %54 = vector.broadcast %53 : vector<1x16xf32> to vector<128x16xf32>
    %55 = arith.mulf %50, %54 : vector<128x16xf32>
    %cst_39 = arith.constant 0.000000e+00 : f32
    %56 = vector.broadcast %cst_39 : f32 to vector<128x16xf32>
    %57 = arith.maximumf %55, %56 : vector<128x16xf32>
    %c0_40 = arith.constant 0 : index
    %c0_41 = arith.constant 0 : index
    %c0_42 = arith.constant 0 : index
    %58 = vector.load %arg7[%c0_40, %c0_41, %c0_42] : memref<1x128x16xf32, #tpu.memory_space<vmem>>, vector<1x128x16xf32>
    %59 = vector.shape_cast %58 : vector<1x128x16xf32> to vector<128x16xf32>
    %60 = vector.shape_cast %57 : vector<128x16xf32> to vector<1x128x16xf32>
    tpu.vector_store %arg7[%c0_40, %c0_41, %c0_42], %60 {strides = array<i32>} : memref<1x128x16xf32, #tpu.memory_space<vmem>>, vector<1x128x16xf32>,
    return
  }
  func.func @transform_0(%arg0: i32, %arg1: memref<2x512xi32, #tpu.memory_space<smem>>) -> (i32, i32, i32) {
    %c0_i32 = arith.constant 0 : i32
    %c0_i32_0 = arith.constant 0 : i32
    %c0_i32_1 = arith.constant 0 : i32
    return %arg0, %c0_i32, %c0_i32_0 : i32, i32, i32
  }
  func.func @transform_1(%arg0: i32, %arg1: memref<2x512xi32, #tpu.memory_space<smem>>) -> (i32, i32, i32) {
    %c0_i32 = arith.constant 0 : i32
    %c0_i32_0 = arith.constant 0 : i32
    %c0_i32_1 = arith.constant 0 : i32
    return %arg0, %c0_i32, %c0_i32_0 : i32, i32, i32
  }
  func.func @transform_2(%arg0: i32, %arg1: memref<2x512xi32, #tpu.memory_space<smem>>) -> (i32, i32) {
    %c0_i32 = arith.constant 0 : i32
    %c0_i32_0 = arith.constant 0 : i32
    %c0_i32_1 = arith.constant 0 : i32
    return %c0_i32, %c0_i32_0 : i32, i32
  }
  func.func @transform_3(%arg0: i32, %arg1: memref<2x512xi32, #tpu.memory_space<smem>>) -> (i32, i32) {
    %c0_i32 = arith.constant 0 : i32
    %c0_i32_0 = arith.constant 0 : i32
    %c0_i32_1 = arith.constant 0 : i32
    return %c0_i32, %c0_i32_0 : i32, i32
  }
  func.func @transform_4(%arg0: i32, %arg1: memref<2x512xi32, #tpu.memory_space<smem>>) -> (i32, i32) {
    %c0_i32 = arith.constant 0 : i32
    %c0_i32_0 = arith.constant 0 : i32
    %c0_i32_1 = arith.constant 0 : i32
    return %c0_i32, %c0_i32_0 : i32, i32
  }
  func.func @transform_5(%arg0: i32, %arg1: memref<2x512xi32, #tpu.memory_space<smem>>) -> (i32, i32, i32) {
    %c0_i32 = arith.constant 0 : i32
    %c0_i32_0 = arith.constant 0 : i32
    %c0_i32_1 = arith.constant 0 : i32
    return %arg0, %c0_i32, %c0_i32_0 : i32, i32, i32
  }
}

</mosaic_0001>

<llo_original>
// kernel: upconv_forward.6
$region0: #{upconv_forward.6}
  #allocation0 [shape = 'u32[]', space=smem, size = 0x4, offset = 0x4, fixed_abs, tag = 'smem constant byte address 0x4 - core index']
  #allocation1 [shape = 'u32[144,128]{1,0:T(1,128)}', space=vmem, size = 0x12000, scoped, tag = 'internal scratch']
  #allocation2 [shape = 'f32[128,16]{1,0:T(8,128)}', space=vmem, size = 0x10000, scoped, tag = 'scratch operand']
  #allocation3 [shape = 'f32[128,16]{1,0:T(8,128)}', space=vmem, size = 0x10000, scoped, tag = 'scratch operand']
  #allocation4 [shape = 'f32[128,16]{1,0:T(8,128)}', space=vmem, size = 0x10000, scoped, tag = 'scratch operand']
  #allocation5 [shape = 'f32[128,16]{1,0:T(8,128)}', space=vmem, size = 0x10000, scoped, tag = 'scratch operand']
  #allocation6 [shape = 's32[1]{0}', space=sflag, size = 0x4, scoped, tag = 'scoped memory for upconv_forward.6']
  #allocation7 [shape = 'u8[4096]{0}', space=smem, size = 0x1000, scoped, tag = 'prefetched SMEM operand 0']
  %s0 = inlined_call_operand.vmem [shape: s32[2,512], index: 0, kind: input, shape index: {}]
  %s1 = inlined_call_operand.vmem [shape: f32[2,128,16], index: 1, kind: input, shape index: {}]
  %s2 = inlined_call_operand.vmem [shape: f32[80,16], index: 2, kind: input, shape index: {}]
  %s3 = inlined_call_operand.vmem [shape: f32[1,16], index: 3, kind: input, shape index: {}]
  %s4 = inlined_call_operand.vmem [shape: f32[2,128,16], index: 4, kind: output, shape index: {}]
  %s5 = sld [smem:[#allocation0]]
  $region52: #{upconv_forward.6} parent=0
    _
  %s7 = ssub.s32 1, %s5
  %s8 = scalar_select 0, %s7, %s5
  %s9 = sshll.u32 %s0, 4
  %s10 = int_to_ptr.vmem [resolvable:$true] %s9
  %12 = dma.vmem_to_smem %s10, 128, [#allocation7], [#allocation6]
  %13 = dma.done [#allocation6], 128
  %14 = sfence
  loop: start=0, step=1, limit=4
  $region2: #{upconv_forward.6} parent=0 // loop_pre_header
    _
  $region3: #{upconv_forward.6} parent=0 // loop_header
    %s16 = sphi 0, %s20
    %p17 = scmp.ge.s32.totalorder %s16, 4
    %s26 = sphi 0, %s28
    %s29 = sphi 0, %s26
    %s30 = sphi 0, %s29
    %s46 = sphi 0, %s30
    %s50 = sphi 0, %s50
    %s52 = sphi 0, %s50
    %s53 = sphi 0, %s52
    %s67 = sphi 0, %s53
    %s71 = sphi 0, %s71
    %s73 = sphi 0, %s71
    %s74 = sphi 0, %s73
    %s88 = sphi 0, %s74
    %s94 = sphi 0, %s96
    %s97 = sphi 0, %s94
    %s98 = sphi 0, %s97
    %s114 = sphi 0, %s98
  $region4: #{upconv_forward.6} parent=0 // loop_header_branch
    %19 = sbr.rel (%p17) target = $region8
  $region5: #{upconv_forward.6} parent=0 // loop_body
    %s21 = ssub.s32 %s16, 1
    %s22 = ssub.s32 %s16, 2
    %s23 = sadd.s32 %s16, 1
    %s24 = ssub.s32 %s16, %s23
    %p25 = scmp.eq.s32.totalorder %s24, 0
    %s27 = sadd.s32 %s26, 1
    %s28 = scalar_select %p25, %s26, %s27
    %p31 = pneg %p25
    %p32 = scmp.eq.s32.totalorder %s16, 1
    %p33 = por %p31, %p32
    %p34 = scmp.ne.s32.totalorder %s26, %s29
    %p35 = scmp.eq.s32.totalorder %s16, 0
    %p36 = por %p34, %p35
    %p37 = scmp.ne.s32.totalorder %s26, %s29
    %p38 = scmp.eq.s32.totalorder %s21, 1
    %p39 = por %p37, %p38
    %p40 = scmp.ne.s32.totalorder %s29, %s30
    %p41 = scmp.eq.s32.totalorder %s21, 0
    %p42 = por %p40, %p41
    %p43 = scmp.ne.s32.totalorder %s29, %s30
    %p44 = scmp.eq.s32.totalorder %s22, 1
    %p45 = por %p43, %p44
    %p47 = scmp.ne.s32.totalorder %s30, %s46
    %p48 = scmp.eq.s32.totalorder %s22, 0
    %p49 = por %p47, %p48
    %s51 = sadd.s32 %s50, 1
    %p54 = scmp.eq.s32.totalorder %s16, 1
    %p55 = scmp.ne.s32.totalorder %s50, %s52
    %p56 = scmp.eq.s32.totalorder %s16, 0
    %p57 = por %p55, %p56
    %p58 = scmp.ne.s32.totalorder %s50, %s52
    %p59 = scmp.eq.s32.totalorder %s21, 1
    %p60 = por %p58, %p59
    %p61 = scmp.ne.s32.totalorder %s52, %s53
    %p62 = scmp.eq.s32.totalorder %s21, 0
    %p63 = por %p61, %p62
    %p64 = scmp.ne.s32.totalorder %s52, %s53
    %p65 = scmp.eq.s32.totalorder %s22, 1
    %p66 = por %p64, %p65
    %p68 = scmp.ne.s32.totalorder %s53, %s67
    %p69 = scmp.eq.s32.totalorder %s22, 0
    %p70 = por %p68, %p69
    %s72 = sadd.s32 %s71, 1
    %p75 = scmp.eq.s32.totalorder %s16, 1
    %p76 = scmp.ne.s32.totalorder %s71, %s73
    %p77 = scmp.eq.s32.totalorder %s16, 0
    %p78 = por %p76, %p77
    %p79 = scmp.ne.s32.totalorder %s71, %s73
    %p80 = scmp.eq.s32.totalorder %s21, 1
    %p81 = por %p79, %p80
    %p82 = scmp.ne.s32.totalorder %s73, %s74
    %p83 = scmp.eq.s32.totalorder %s21, 0
    %p84 = por %p82, %p83
    %p85 = scmp.ne.s32.totalorder %s73, %s74
    %p86 = scmp.eq.s32.totalorder %s22, 1
    %p87 = por %p85, %p86
    %p89 = scmp.ne.s32.totalorder %s74, %s88
    %p90 = scmp.eq.s32.totalorder %s22, 0
    %p91 = por %p89, %p90
    %s92 = ssub.s32 %s16, %s23
    %p93 = scmp.eq.s32.totalorder %s92, 0
    %s95 = sadd.s32 %s94, 1
    %s96 = scalar_select %p93, %s94, %s95
    %p99 = pneg %p93
    %p100 = scmp.eq.s32.totalorder %s16, 1
    %p101 = por %p99, %p100
    %p102 = scmp.ne.s32.totalorder %s94, %s97
    %p103 = scmp.eq.s32.totalorder %s16, 0
    %p104 = por %p102, %p103
    %p105 = scmp.ne.s32.totalorder %s94, %s97
    %p106 = scmp.eq.s32.totalorder %s21, 1
    %p107 = por %p105, %p106
    %p108 = scmp.ne.s32.totalorder %s97, %s98
    %p109 = scmp.eq.s32.totalorder %s21, 0
    %p110 = por %p108, %p109
    %p111 = scmp.ne.s32.totalorder %s97, %s98
    %p112 = scmp.eq.s32.totalorder %s22, 1
    %p113 = por %p111, %p112
    %p115 = scmp.ne.s32.totalorder %s98, %s114
    %p116 = scmp.eq.s32.totalorder %s22, 0
    %p117 = por %p115, %p116
    %p118 = scmp.le.s32.totalorder 1, %s16
    %p119 = scmp.lt.s32.totalorder %s16, 3
    %p120 = pnand %p118, %p119
    %p121 = pneg %p120
    // Predicated region
    $region9: #{upconv_forward.6} parent=5 // pred_check
      _
    $region10: #{upconv_forward.6} parent=5 // pred_check_branch
      %123 = sbr.rel (%p120) target = $region12
    $region11: #{upconv_forward.6} parent=5 // pred_region
      %s124 = ssub.s32 %s16, 1
      // Predicated region
      $region13: #{upconv_forward.6} parent=11 // pred_check
        %p125 = pneg %p63
      $region14: #{upconv_forward.6} parent=11 // pred_check_branch
        %127 = sbr.rel (%p125) target = $region16
      $region15: #{upconv_forward.6} parent=11 // pred_region
        _
      $region16: #{upconv_forward.6} parent=11 // pred_fallthru
        _
      // Predicated region
      $region17: #{upconv_forward.6} parent=11 // pred_check
        %p128 = pneg %p84
      $region18: #{upconv_forward.6} parent=11 // pred_check_branch
        %130 = sbr.rel (%p128) target = $region20
      $region19: #{upconv_forward.6} parent=11 // pred_region
        _
      $region20: #{upconv_forward.6} parent=11 // pred_fallthru
        _
    $region12: #{upconv_forward.6} parent=5 // pred_fallthru
      _
    %p131 = scmp.lt.s32.totalorder %s16, 2
    // Predicated region
    $region21: #{upconv_forward.6} parent=5 // pred_check
      %p132 = pneg %p131
    $region22: #{upconv_forward.6} parent=5 // pred_check_branch
      %134 = sbr.rel (%p132) target = $region24
    $region23: #{upconv_forward.6} parent=5 // pred_region
      // Predicated region
      $region25: #{upconv_forward.6} parent=23 // pred_check
        %p135 = pneg %p36
      $region26: #{upconv_forward.6} parent=23 // pred_check_branch
        %137 = sbr.rel (%p135) target = $region28
      $region27: #{upconv_forward.6} parent=23 // pred_region
        %p138 = scmp.lt.s32.totalorder %s16, 1
        %s139 = scalar_select %p138, %s16, 1
        %s140 = smul.addr %s139, 16
        %s141 = smul.addr %s140, 8
        %s142 = scalar_lea.vmem %s1, %s141
      $region28: #{upconv_forward.6} parent=23 // pred_fallthru
        _
    $region24: #{upconv_forward.6} parent=5 // pred_fallthru
      _
    %p143 = scmp.le.s32.totalorder 1, %s16
    %p144 = scmp.lt.s32.totalorder %s16, 3
    %p145 = pnand %p143, %p144
    %p146 = pneg %p145
    // Predicated region
    $region29: #{upconv_forward.6} parent=5 // pred_check
      _
    $region30: #{upconv_forward.6} parent=5 // pred_check_branch
      %148 = sbr.rel (%p145) target = $region32
    $region31: #{upconv_forward.6} parent=5 // pred_region
      %s149 = ssub.s32 %s16, 1
      %p150 = scmp.lt.s32.totalorder %s21, 1
      %s151 = scalar_select %p150, %s21, 1
      %s152 = smul.addr %s151, 16
      %s153 = smul.addr %s152, 8
      %s154 = scalar_lea.vmem %s1, %s153
      %p155 = pneg %p42
      %p156 = pneg %p39
      %p157 = pneg %p63
      %p158 = pneg %p60
      %p159 = pneg %p84
      %p160 = pneg %p81
      %p161 = pneg %p110
      %p162 = pneg %p107
      %p163 = scmp.lt.s32.totalorder %s21, 1
      %s164 = scalar_select %p163, %s21, 1
      %s165 = smul.addr %s164, 16
      %s166 = smul.addr %s165, 8
      %s167 = scalar_lea.vmem %s4, %s166
      %p168 = scmp.lt.s32.totalorder %s21, 1
      %s169 = scalar_select %p168, %s21, 1
      %s170 = smul.addr %s169, 16
      %s171 = smul.addr %s170, 8
      %s172 = scalar_lea.vmem %s1, %s171
      %p173 = scmp.lt.s32.totalorder %s21, 1
      %s174 = scalar_select %p173, %s21, 1
      %s175 = smul.addr %s174, 16
      %s176 = smul.addr %s175, 8
      %s177 = scalar_lea.vmem %s4, %s176
      loop: start=0, step=1, limit=128
      $region33: #{upconv_forward.6} parent=31 // loop_pre_header
        _
      $region34: #{upconv_forward.6} parent=31 // loop_header
        %s179 = sphi 0, %s183
        %p180 = scmp.ge.s32.totalorder %s179, 128
      $region35: #{upconv_forward.6} parent=31 // loop_header_branch
        %182 = sbr.rel (%p180) target = $region39
      $region36: #{upconv_forward.6} parent=31 // loop_body
        %s184 = sshra.s32 %s179, 7
        %s185 = sand.u32 %s179, 127
        %s186 = sshra.s32 %s21, 1
        %s187 = sand.u32 %s21, 1
        %s188 = smul.u32 %s186, 4
        %s189 = sadd.s32 %s184, %s188
        %s190 = smul.u32 %s189, 256
        %s191 = sshra.s32 %s21, 1
        %s192 = sand.u32 %s21, 1
        %s193 = sshra.s32 %s179, 7
        %s194 = sand.u32 %s179, 127
        %s195 = smul.u32 %s192, 128
        %s196 = sadd.s32 %s195, %s194
        %s197 = sadd.s32 %s190, %s196
        %s198 = sld [smem:[#allocation7 + %s197]]
        %s199 = sadd.s32 %s179, 128
        %s200 = sshra.s32 %s199, 7
        %s201 = sand.u32 %s199, 127
        %s202 = sadd.s32 %s200, %s188
        %s203 = smul.u32 %s202, 256
        %s204 = sshra.s32 %s199, 7
        %s205 = sand.u32 %s199, 127
        %s206 = sadd.s32 %s195, %s205
        %s207 = sadd.s32 %s203, %s206
        %s208 = sld [smem:[#allocation7 + %s207]]
        %s209 = sadd.s32 %s179, 256
        %s210 = sshra.s32 %s209, 7
        %s211 = sand.u32 %s209, 127
        %s212 = sadd.s32 %s210, %s188
        %s213 = smul.u32 %s212, 256
        %s214 = sshra.s32 %s209, 7
        %s215 = sand.u32 %s209, 127
        %s216 = sadd.s32 %s195, %s215
        %s217 = sadd.s32 %s213, %s216
        %s218 = sld [smem:[#allocation7 + %s217]]
        %s219 = sadd.s32 %s179, 384
        %s220 = sshra.s32 %s219, 7
        %s221 = sand.u32 %s219, 127
        %s222 = sadd.s32 %s220, %s188
        %s223 = smul.u32 %s222, 256
        %s224 = sshra.s32 %s219, 7
        %s225 = sand.u32 %s219, 127
        %s226 = sadd.s32 %s195, %s225
        %s227 = sadd.s32 %s223, %s226
        %s228 = sld [smem:[#allocation7 + %s227]]
        %s229 = scalar_lea.vmem %s172, %s198
        %v230 = vld [vmem:[%s229] sm:$0x1]
        %s231 = scalar_lea.vmem [#allocation2], %s179
        %vm232 = vcmask 122880
        %233 = vst.msk [vmem:[%s231] sm:$0x1] %vm232, %v230
        %s234 = scalar_lea.vmem %s172, %s208
        %v235 = vld [vmem:[%s234] sm:$0x1]
        %s236 = scalar_lea.vmem [#allocation3], %s179
        %237 = vst.msk [vmem:[%s236] sm:$0x1] %vm232, %v235
        %s238 = scalar_lea.vmem %s172, %s218
        %v239 = vld [vmem:[%s238] sm:$0x1]
        %s240 = scalar_lea.vmem [#allocation4], %s179
        %241 = vst.msk [vmem:[%s240] sm:$0x1] %vm232, %v239
        %s242 = scalar_lea.vmem %s172, %s228
        %v243 = vld [vmem:[%s242] sm:$0x1]
        %s244 = scalar_lea.vmem [#allocation5], %s179
        %245 = vst.msk [vmem:[%s244] sm:$0x1] %vm232, %v243
      $region37: #{upconv_forward.6} parent=31 // loop_footer
        %s183 = sadd.s32 1, %s179
      $region38: #{upconv_forward.6} parent=31 // loop_footer_branch
        %178 = sbr.rel target = $region34
      $region39: #{upconv_forward.6} parent=31 // loop_exit
        _
      %v246 = vld [vmem:[%s172] sm:$0xff]
      %v247 = vld [vmem:[%s172 + $0x8] sm:$0xff]
      %v248 = vld [vmem:[%s172 + $0x10] sm:$0xff]
      %v249 = vld [vmem:[%s172 + $0x18] sm:$0xff]
      %v250 = vld [vmem:[%s172 + $0x20] sm:$0xff]
      %v251 = vld [vmem:[%s172 + $0x28] sm:$0xff]
      %v252 = vld [vmem:[%s172 + $0x30] sm:$0xff]
      %v253 = vld [vmem:[%s172 + $0x38] sm:$0xff]
      %v254 = vld [vmem:[%s172 + $0x40] sm:$0xff]
      %v255 = vld [vmem:[%s172 + $0x48] sm:$0xff]
      %v256 = vld [vmem:[%s172 + $0x50] sm:$0xff]
      %v257 = vld [vmem:[%s172 + $0x58] sm:$0xff]
      %v258 = vld [vmem:[%s172 + $0x60] sm:$0xff]
      %v259 = vld [vmem:[%s172 + $0x68] sm:$0xff]
      %v260 = vld [vmem:[%s172 + $0x70] sm:$0xff]
      %v261 = vld [vmem:[%s172 + $0x78] sm:$0xff]
      %v262 = vld [vmem:[#allocation2] sm:$0xff]
      %v263 = vld [vmem:[#allocation2 + $0x8] sm:$0xff]
      %v264 = vld [vmem:[#allocation2 + $0x10] sm:$0xff]
      %v265 = vld [vmem:[#allocation2 + $0x18] sm:$0xff]
      %v266 = vld [vmem:[#allocation2 + $0x20] sm:$0xff]
      %v267 = vld [vmem:[#allocation2 + $0x28] sm:$0xff]
      %v268 = vld [vmem:[#allocation2 + $0x30] sm:$0xff]
      %v269 = vld [vmem:[#allocation2 + $0x38] sm:$0xff]
      %v270 = vld [vmem:[#allocation2 + $0x40] sm:$0xff]
      %v271 = vld [vmem:[#allocation2 + $0x48] sm:$0xff]
      %v272 = vld [vmem:[#allocation2 + $0x50] sm:$0xff]
      %v273 = vld [vmem:[#allocation2 + $0x58] sm:$0xff]
      %v274 = vld [vmem:[#allocation2 + $0x60] sm:$0xff]
      %v275 = vld [vmem:[#allocation2 + $0x68] sm:$0xff]
      %v276 = vld [vmem:[#allocation2 + $0x70] sm:$0xff]
      %v277 = vld [vmem:[#allocation2 + $0x78] sm:$0xff]
      %v278 = vld [vmem:[#allocation3] sm:$0xff]
      %v279 = vld [vmem:[#allocation3 + $0x8] sm:$0xff]
      %v280 = vld [vmem:[#allocation3 + $0x10] sm:$0xff]
      %v281 = vld [vmem:[#allocation3 + $0x18] sm:$0xff]
      %v282 = vld [vmem:[#allocation3 + $0x20] sm:$0xff]
      %v283 = vld [vmem:[#allocation3 + $0x28] sm:$0xff]
      %v284 = vld [vmem:[#allocation3 + $0x30] sm:$0xff]
      %v285 = vld [vmem:[#allocation3 + $0x38] sm:$0xff]
      %v286 = vld [vmem:[#allocation3 + $0x40] sm:$0xff]
      %v287 = vld [vmem:[#allocation3 + $0x48] sm:$0xff]
      %v288 = vld [vmem:[#allocation3 + $0x50] sm:$0xff]
      %v289 = vld [vmem:[#allocation3 + $0x58] sm:$0xff]
      %v290 = vld [vmem:[#allocation3 + $0x60] sm:$0xff]
      %v291 = vld [vmem:[#allocation3 + $0x68] sm:$0xff]
      %v292 = vld [vmem:[#allocation3 + $0x70] sm:$0xff]
      %v293 = vld [vmem:[#allocation3 + $0x78] sm:$0xff]
      %v294 = vld [vmem:[#allocation4] sm:$0xff]
      %v295 = vld [vmem:[#allocation4 + $0x8] sm:$0xff]
      %v296 = vld [vmem:[#allocation4 + $0x10] sm:$0xff]
      %v297 = vld [vmem:[#allocation4 + $0x18] sm:$0xff]
      %v298 = vld [vmem:[#allocation4 + $0x20] sm:$0xff]
      %v299 = vld [vmem:[#allocation4 + $0x28] sm:$0xff]
      %v300 = vld [vmem:[#allocation4 + $0x30] sm:$0xff]
      %v301 = vld [vmem:[#allocation4 + $0x38] sm:$0xff]
      %v302 = vld [vmem:[#allocation4 + $0x40] sm:$0xff]
      %v303 = vld [vmem:[#allocation4 + $0x48] sm:$0xff]
      %v304 = vld [vmem:[#allocation4 + $0x50] sm:$0xff]
      %v305 = vld [vmem:[#allocation4 + $0x58] sm:$0xff]
      %v306 = vld [vmem:[#allocation4 + $0x60] sm:$0xff]
      %v307 = vld [vmem:[#allocation4 + $0x68] sm:$0xff]
      %v308 = vld [vmem:[#allocation4 + $0x70] sm:$0xff]
      %v309 = vld [vmem:[#allocation4 + $0x78] sm:$0xff]
      %v310 = vld [vmem:[#allocation5] sm:$0xff]
      %v311 = vld [vmem:[#allocation5 + $0x8] sm:$0xff]
      %v312 = vld [vmem:[#allocation5 + $0x10] sm:$0xff]
      %v313 = vld [vmem:[#allocation5 + $0x18] sm:$0xff]
      %v314 = vld [vmem:[#allocation5 + $0x20] sm:$0xff]
      %v315 = vld [vmem:[#allocation5 + $0x28] sm:$0xff]
      %v316 = vld [vmem:[#allocation5 + $0x30] sm:$0xff]
      %v317 = vld [vmem:[#allocation5 + $0x38] sm:$0xff]
      %v318 = vld [vmem:[#allocation5 + $0x40] sm:$0xff]
      %v319 = vld [vmem:[#allocation5 + $0x48] sm:$0xff]
      %v320 = vld [vmem:[#allocation5 + $0x50] sm:$0xff]
      %v321 = vld [vmem:[#allocation5 + $0x58] sm:$0xff]
      %v322 = vld [vmem:[#allocation5 + $0x60] sm:$0xff]
      %v323 = vld [vmem:[#allocation5 + $0x68] sm:$0xff]
      %v324 = vld [vmem:[#allocation5 + $0x70] sm:$0xff]
      %v325 = vld [vmem:[#allocation5 + $0x78] sm:$0xff]
      %v326 = vsub.f32 %v262, %v294
      %v327 = vsub.f32 %v263, %v295
      %v328 = vsub.f32 %v264, %v296
      %v329 = vsub.f32 %v265, %v297
      %v330 = vsub.f32 %v266, %v298
      %v331 = vsub.f32 %v267, %v299
      %v332 = vsub.f32 %v268, %v300
      %v333 = vsub.f32 %v269, %v301
      %v334 = vsub.f32 %v270, %v302
      %v335 = vsub.f32 %v271, %v303
      %v336 = vsub.f32 %v272, %v304
      %v337 = vsub.f32 %v273, %v305
      %v338 = vsub.f32 %v274, %v306
      %v339 = vsub.f32 %v275, %v307
      %v340 = vsub.f32 %v276, %v308
      %v341 = vsub.f32 %v277, %v309
      %v342 = vand.u32 2147483647, %v326
      %v343 = vand.u32 2147483647, %v327
      %v344 = vand.u32 2147483647, %v328
      %v345 = vand.u32 2147483647, %v329
      %v346 = vand.u32 2147483647, %v330
      %v347 = vand.u32 2147483647, %v331
      %v348 = vand.u32 2147483647, %v332
      %v349 = vand.u32 2147483647, %v333
      %v350 = vand.u32 2147483647, %v334
      %v351 = vand.u32 2147483647, %v335
      %v352 = vand.u32 2147483647, %v336
      %v353 = vand.u32 2147483647, %v337
      %v354 = vand.u32 2147483647, %v338
      %v355 = vand.u32 2147483647, %v339
      %v356 = vand.u32 2147483647, %v340
      %v357 = vand.u32 2147483647, %v341
      %v358 = vadd.f32 %v262, %v294
      %v359 = vadd.f32 %v263, %v295
      %v360 = vadd.f32 %v264, %v296
      %v361 = vadd.f32 %v265, %v297
      %v362 = vadd.f32 %v266, %v298
      %v363 = vadd.f32 %v267, %v299
      %v364 = vadd.f32 %v268, %v300
      %v365 = vadd.f32 %v269, %v301
      %v366 = vadd.f32 %v270, %v302
      %v367 = vadd.f32 %v271, %v303
      %v368 = vadd.f32 %v272, %v304
      %v369 = vadd.f32 %v273, %v305
      %v370 = vadd.f32 %v274, %v306
      %v371 = vadd.f32 %v275, %v307
      %v372 = vadd.f32 %v276, %v308
      %v373 = vadd.f32 %v277, %v309
      %v374 = vsub.f32 %v278, %v310
      %v375 = vsub.f32 %v279, %v311
      %v376 = vsub.f32 %v280, %v312
      %v377 = vsub.f32 %v281, %v313
      %v378 = vsub.f32 %v282, %v314
      %v379 = vsub.f32 %v283, %v315
      %v380 = vsub.f32 %v284, %v316
      %v381 = vsub.f32 %v285, %v317
      %v382 = vsub.f32 %v286, %v318
      %v383 = vsub.f32 %v287, %v319
      %v384 = vsub.f32 %v288, %v320
      %v385 = vsub.f32 %v289, %v321
      %v386 = vsub.f32 %v290, %v322
      %v387 = vsub.f32 %v291, %v323
      %v388 = vsub.f32 %v292, %v324
      %v389 = vsub.f32 %v293, %v325
      %v390 = vand.u32 2147483647, %v374
      %v391 = vand.u32 2147483647, %v375
      %v392 = vand.u32 2147483647, %v376
      %v393 = vand.u32 2147483647, %v377
      %v394 = vand.u32 2147483647, %v378
      %v395 = vand.u32 2147483647, %v379
      %v396 = vand.u32 2147483647, %v380
      %v397 = vand.u32 2147483647, %v381
      %v398 = vand.u32 2147483647, %v382
      %v399 = vand.u32 2147483647, %v383
      %v400 = vand.u32 2147483647, %v384
      %v401 = vand.u32 2147483647, %v385
      %v402 = vand.u32 2147483647, %v386
      %v403 = vand.u32 2147483647, %v387
      %v404 = vand.u32 2147483647, %v388
      %v405 = vand.u32 2147483647, %v389
      %v406 = vadd.f32 %v278, %v310
      %v407 = vadd.f32 %v279, %v311
      %v408 = vadd.f32 %v280, %v312
      %v409 = vadd.f32 %v281, %v313
      %v410 = vadd.f32 %v282, %v314
      %v411 = vadd.f32 %v283, %v315
      %v412 = vadd.f32 %v284, %v316
      %v413 = vadd.f32 %v285, %v317
      %v414 = vadd.f32 %v286, %v318
      %v415 = vadd.f32 %v287, %v319
      %v416 = vadd.f32 %v288, %v320
      %v417 = vadd.f32 %v289, %v321
      %v418 = vadd.f32 %v290, %v322
      %v419 = vadd.f32 %v291, %v323
      %v420 = vadd.f32 %v292, %v324
      %v421 = vadd.f32 %v293, %v325
      %438 = vrot.lane.b32.xlu0 %v342, 16
      %v439 = vpop.permute.xlu0 %438
      %440 = vrot.lane.b32.xlu0 %v343, 16
      %v441 = vpop.permute.xlu0 %440
      %442 = vrot.lane.b32.xlu0 %v344, 16
      %v443 = vpop.permute.xlu0 %442
      %444 = vrot.lane.b32.xlu0 %v345, 16
      %v445 = vpop.permute.xlu0 %444
      %446 = vrot.lane.b32.xlu0 %v346, 16
      %v447 = vpop.permute.xlu0 %446
      %448 = vrot.lane.b32.xlu0 %v347, 16
      %v449 = vpop.permute.xlu0 %448
      %450 = vrot.lane.b32.xlu0 %v348, 16
      %v451 = vpop.permute.xlu0 %450
      %452 = vrot.lane.b32.xlu0 %v349, 16
      %v453 = vpop.permute.xlu0 %452
      %454 = vrot.lane.b32.xlu0 %v350, 16
      %v455 = vpop.permute.xlu0 %454
      %456 = vrot.lane.b32.xlu0 %v351, 16
      %v457 = vpop.permute.xlu0 %456
      %458 = vrot.lane.b32.xlu0 %v352, 16
      %v459 = vpop.permute.xlu0 %458
      %460 = vrot.lane.b32.xlu0 %v353, 16
      %v461 = vpop.permute.xlu0 %460
      %462 = vrot.lane.b32.xlu0 %v354, 16
      %v463 = vpop.permute.xlu0 %462
      %464 = vrot.lane.b32.xlu0 %v355, 16
      %v465 = vpop.permute.xlu0 %464
      %466 = vrot.lane.b32.xlu0 %v356, 16
      %v467 = vpop.permute.xlu0 %466
      %468 = vrot.lane.b32.xlu0 %v357, 16
      %v469 = vpop.permute.xlu0 %468
      %502 = vrot.lane.b32.xlu0 %v358, 32
      %v503 = vpop.permute.xlu0 %502
      %504 = vrot.lane.b32.xlu0 %v359, 32
      %v505 = vpop.permute.xlu0 %504
      %506 = vrot.lane.b32.xlu0 %v360, 32
      %v507 = vpop.permute.xlu0 %506
      %508 = vrot.lane.b32.xlu0 %v361, 32
      %v509 = vpop.permute.xlu0 %508
      %510 = vrot.lane.b32.xlu0 %v362, 32
      %v511 = vpop.permute.xlu0 %510
      %512 = vrot.lane.b32.xlu0 %v363, 32
      %v513 = vpop.permute.xlu0 %512
      %514 = vrot.lane.b32.xlu0 %v364, 32
      %v515 = vpop.permute.xlu0 %514
      %516 = vrot.lane.b32.xlu0 %v365, 32
      %v517 = vpop.permute.xlu0 %516
      %518 = vrot.lane.b32.xlu0 %v366, 32
      %v519 = vpop.permute.xlu0 %518
      %520 = vrot.lane.b32.xlu0 %v367, 32
      %v521 = vpop.permute.xlu0 %520
      %522 = vrot.lane.b32.xlu0 %v368, 32
      %v523 = vpop.permute.xlu0 %522
      %524 = vrot.lane.b32.xlu0 %v369, 32
      %v525 = vpop.permute.xlu0 %524
      %526 = vrot.lane.b32.xlu0 %v370, 32
      %v527 = vpop.permute.xlu0 %526
      %528 = vrot.lane.b32.xlu0 %v371, 32
      %v529 = vpop.permute.xlu0 %528
      %530 = vrot.lane.b32.xlu0 %v372, 32
      %v531 = vpop.permute.xlu0 %530
      %532 = vrot.lane.b32.xlu0 %v373, 32
      %v533 = vpop.permute.xlu0 %532
      %566 = vrot.lane.b32.xlu0 %v390, 48
      %v567 = vpop.permute.xlu0 %566
      %568 = vrot.lane.b32.xlu0 %v391, 48
      %v569 = vpop.permute.xlu0 %568
      %570 = vrot.lane.b32.xlu0 %v392, 48
      %v571 = vpop.permute.xlu0 %570
      %572 = vrot.lane.b32.xlu0 %v393, 48
      %v573 = vpop.permute.xlu0 %572
      %574 = vrot.lane.b32.xlu0 %v394, 48
      %v575 = vpop.permute.xlu0 %574
      %576 = vrot.lane.b32.xlu0 %v395, 48
      %v577 = vpop.permute.xlu0 %576
      %578 = vrot.lane.b32.xlu0 %v396, 48
      %v579 = vpop.permute.xlu0 %578
      %580 = vrot.lane.b32.xlu0 %v397, 48
      %v581 = vpop.permute.xlu0 %580
      %582 = vrot.lane.b32.xlu0 %v398, 48
      %v583 = vpop.permute.xlu0 %582
      %584 = vrot.lane.b32.xlu0 %v399, 48
      %v585 = vpop.permute.xlu0 %584
      %586 = vrot.lane.b32.xlu0 %v400, 48
      %v587 = vpop.permute.xlu0 %586
      %588 = vrot.lane.b32.xlu0 %v401, 48
      %v589 = vpop.permute.xlu0 %588
      %590 = vrot.lane.b32.xlu0 %v402, 48
      %v591 = vpop.permute.xlu0 %590
      %592 = vrot.lane.b32.xlu0 %v403, 48
      %v593 = vpop.permute.xlu0 %592
      %594 = vrot.lane.b32.xlu0 %v404, 48
      %v595 = vpop.permute.xlu0 %594
      %596 = vrot.lane.b32.xlu0 %v405, 48
      %v597 = vpop.permute.xlu0 %596
      %630 = vrot.lane.b32.xlu0 %v406, 64
      %v631 = vpop.permute.xlu0 %630
      %632 = vrot.lane.b32.xlu0 %v407, 64
      %v633 = vpop.permute.xlu0 %632
      %634 = vrot.lane.b32.xlu0 %v408, 64
      %v635 = vpop.permute.xlu0 %634
      %636 = vrot.lane.b32.xlu0 %v409, 64
      %v637 = vpop.permute.xlu0 %636
      %638 = vrot.lane.b32.xlu0 %v410, 64
      %v639 = vpop.permute.xlu0 %638
      %640 = vrot.lane.b32.xlu0 %v411, 64
      %v641 = vpop.permute.xlu0 %640
      %642 = vrot.lane.b32.xlu0 %v412, 64
      %v643 = vpop.permute.xlu0 %642
      %644 = vrot.lane.b32.xlu0 %v413, 64
      %v645 = vpop.permute.xlu0 %644
      %646 = vrot.lane.b32.xlu0 %v414, 64
      %v647 = vpop.permute.xlu0 %646
      %648 = vrot.lane.b32.xlu0 %v415, 64
      %v649 = vpop.permute.xlu0 %648
      %650 = vrot.lane.b32.xlu0 %v416, 64
      %v651 = vpop.permute.xlu0 %650
      %652 = vrot.lane.b32.xlu0 %v417, 64
      %v653 = vpop.permute.xlu0 %652
      %654 = vrot.lane.b32.xlu0 %v418, 64
      %v655 = vpop.permute.xlu0 %654
      %656 = vrot.lane.b32.xlu0 %v419, 64
      %v657 = vpop.permute.xlu0 %656
      %658 = vrot.lane.b32.xlu0 %v420, 64
      %v659 = vpop.permute.xlu0 %658
      %660 = vrot.lane.b32.xlu0 %v421, 64
      %v661 = vpop.permute.xlu0 %660
      %vm678 = vcmask 130048
      %v679 = vsel %vm678, %v246, %v439
      %v680 = vsel %vm678, %v247, %v441
      %v681 = vsel %vm678, %v248, %v443
      %v682 = vsel %vm678, %v249, %v445
      %v683 = vsel %vm678, %v250, %v447
      %v684 = vsel %vm678, %v251, %v449
      %v685 = vsel %vm678, %v252, %v451
      %v686 = vsel %vm678, %v253, %v453
      %v687 = vsel %vm678, %v254, %v455
      %v688 = vsel %vm678, %v255, %v457
      %v689 = vsel %vm678, %v256, %v459
      %v690 = vsel %vm678, %v257, %v461
      %v691 = vsel %vm678, %v258, %v463
      %v692 = vsel %vm678, %v259, %v465
      %v693 = vsel %vm678, %v260, %v467
      %v694 = vsel %vm678, %v261, %v469
      %vm695 = vcmask 261120
      %v696 = vsel %vm695, %v679, %v503
      %v697 = vsel %vm695, %v680, %v505
      %v698 = vsel %vm695, %v681, %v507
      %v699 = vsel %vm695, %v682, %v509
      %v700 = vsel %vm695, %v683, %v511
      %v701 = vsel %vm695, %v684, %v513
      %v702 = vsel %vm695, %v685, %v515
      %v703 = vsel %vm695, %v686, %v517
      %v704 = vsel %vm695, %v687, %v519
      %v705 = vsel %vm695, %v688, %v521
      %v706 = vsel %vm695, %v689, %v523
      %v707 = vsel %vm695, %v690, %v525
      %v708 = vsel %vm695, %v691, %v527
      %v709 = vsel %vm695, %v692, %v529
      %v710 = vsel %vm695, %v693, %v531
      %v711 = vsel %vm695, %v694, %v533
      %vm712 = vcmask 392192
      %v713 = vsel %vm712, %v696, %v567
      %v714 = vsel %vm712, %v697, %v569
      %v715 = vsel %vm712, %v698, %v571
      %v716 = vsel %vm712, %v699, %v573
      %v717 = vsel %vm712, %v700, %v575
      %v718 = vsel %vm712, %v701, %v577
      %v719 = vsel %vm712, %v702, %v579
      %v720 = vsel %vm712, %v703, %v581
      %v721 = vsel %vm712, %v704, %v583
      %v722 = vsel %vm712, %v705, %v585
      %v723 = vsel %vm712, %v706, %v587
      %v724 = vsel %vm712, %v707, %v589
      %v725 = vsel %vm712, %v708, %v591
      %v726 = vsel %vm712, %v709, %v593
      %v727 = vsel %vm712, %v710, %v595
      %v728 = vsel %vm712, %v711, %v597
      %vm729 = vcmask 523264
      %v730 = vsel %vm729, %v713, %v631
      %v731 = vsel %vm729, %v714, %v633
      %v732 = vsel %vm729, %v715, %v635
      %v733 = vsel %vm729, %v716, %v637
      %v734 = vsel %vm729, %v717, %v639
      %v735 = vsel %vm729, %v718, %v641
      %v736 = vsel %vm729, %v719, %v643
      %v737 = vsel %vm729, %v720, %v645
      %v738 = vsel %vm729, %v721, %v647
      %v739 = vsel %vm729, %v722, %v649
      %v740 = vsel %vm729, %v723, %v651
      %v741 = vsel %vm729, %v724, %v653
      %v742 = vsel %vm729, %v725, %v655
      %v743 = vsel %vm729, %v726, %v657
      %v744 = vsel %vm729, %v727, %v659
      %v745 = vsel %vm729, %v728, %v661
      %v746 = vld [vmem:[%s2] sm:$0xff]
      %v747 = vld [vmem:[%s2 + $0x8] sm:$0xff]
      %v748 = vld [vmem:[%s2 + $0x10] sm:$0xff]
      %v749 = vld [vmem:[%s2 + $0x18] sm:$0xff]
      %v750 = vld [vmem:[%s2 + $0x20] sm:$0xff]
      %v751 = vld [vmem:[%s2 + $0x28] sm:$0xff]
      %v752 = vld [vmem:[%s2 + $0x30] sm:$0xff]
      %v753 = vld [vmem:[%s2 + $0x38] sm:$0xff]
      %v754 = vld [vmem:[%s2 + $0x40] sm:$0xff]
      %v755 = vld [vmem:[%s2 + $0x48] sm:$0xff]
      %v756 = vld [vmem:[%s3] sm:$0x1]
      %v758 = vlaneseq
      %v759 = vshrl.u32 %v758, 7
      %v760 = vsub.s32 0, %v759
      %v761 = vrot.slane %v756, %v760
      %vm763 = vcmask 654336
      %v765 = vsel %vm763, %v730, 0
      %v768 = vsel %vm763, %v731, 0
      %v771 = vsel %vm763, %v732, 0
      %v774 = vsel %vm763, %v733, 0
      %v777 = vsel %vm763, %v734, 0
      %v780 = vsel %vm763, %v735, 0
      %v783 = vsel %vm763, %v736, 0
      %v786 = vsel %vm763, %v737, 0
      %v789 = vsel %vm763, %v738, 0
      %v792 = vsel %vm763, %v739, 0
      %v795 = vsel %vm763, %v740, 0
      %v798 = vsel %vm763, %v741, 0
      %v801 = vsel %vm763, %v742, 0
      %v804 = vsel %vm763, %v743, 0
      %v807 = vsel %vm763, %v744, 0
      %v810 = vsel %vm763, %v745, 0
      %812 = vmatprep.subr.mxu0 0.0
      %813 = vmatpush1.msra.mxu0 %v746
      %814 = vmatprep.subr.mxu0 0.0
      %815 = vmatpush1.msra.mxu0 %v747
      %816 = vmatprep.subr.mxu0 0.0
      %817 = vmatpush1.msra.mxu0 %v748
      %818 = vmatprep.subr.mxu0 0.0
      %819 = vmatpush1.msra.mxu0 %v749
      %820 = vmatprep.subr.mxu0 0.0
      %821 = vmatpush1.msra.mxu0 %v750
      %822 = vmatprep.subr.mxu0 0.0
      %823 = vmatpush1.msra.mxu0 %v751
      %824 = vmatprep.subr.mxu0 0.0
      %825 = vmatpush1.msra.mxu0 %v752
      %826 = vmatprep.subr.mxu0 0.0
      %827 = vmatpush1.msra.mxu0 %v753
      %828 = vmatprep.subr.mxu0 0.0
      %829 = vmatpush1.msra.mxu0 %v754
      %830 = vmatprep.subr.mxu0 0.0
      %831 = vmatpush1.msra.mxu0 %v755
      %832 = vmatprep.subr.mxu0 0.0
      %833 = vmatpush1.msra.mxu0 0.0
      %834 = vmatprep.subr.mxu0 0.0
      %835 = vmatpush1.msra.mxu0 0.0
      %836 = vmatprep.subr.mxu0 0.0
      %837 = vmatpush1.msra.mxu0 0.0
      %838 = vmatprep.subr.mxu0 0.0
      %839 = vmatpush1.msra.mxu0 0.0
      %840 = vmatprep.subr.mxu0 0.0
      %841 = vmatpush1.msra.mxu0 0.0
      %842 = vmatprep.subr.mxu0 0.0
      %843 = vmatpush1.msra.mxu0 0.0
      %844 = vmatprep.subr.mxu0 0.0
      %845 = vmatpush1.msra.mxu0 0.0
      %846 = vmatprep.subr.mxu0 0.0
      %847 = vmatpush1.msra.mxu0 0.0
      %848 = vmatprep.subr.mxu0 0.0
      %849 = vmatpush1.msra.mxu0 0.0
      %850 = vmatprep.subr.mxu0 0.0
      %851 = vmatpush1.msra.mxu0 0.0
      %852 = vmatprep.subr.mxu0 0.0
      %853 = vmatpush1.msra.mxu0 0.0
      %854 = vmatprep.subr.mxu0 0.0
      %855 = vmatpush1.msra.mxu0 0.0
      %856 = vmatprep.subr.mxu0 0.0
      %857 = vmatpush1.msra.mxu0 0.0
      %858 = vmatprep.subr.mxu0 0.0
      %859 = vmatpush1.msra.mxu0 0.0
      %860 = vmatprep.subr.mxu0 0.0
      %861 = vmatpush1.msra.mxu0 0.0
      %862 = vmatprep.subr.mxu0 0.0
      %863 = vmatpush1.msra.mxu0 0.0
      %864 = vmatprep.subr.mxu0 0.0
      %865 = vmatpush1.msra.mxu0 0.0
      %866 = vmatprep.subr.mxu0 0.0
      %867 = vmatpush1.msra.mxu0 0.0
      %868 = vmatprep.subr.mxu0 0.0
      %869 = vmatpush1.msra.mxu0 0.0
      %870 = vmatprep.subr.mxu0 0.0
      %871 = vmatpush1.msra.mxu0 0.0
      %872 = vmatprep.subr.mxu0 0.0
      %873 = vmatpush1.msra.mxu0 0.0
      %874 = vmatprep.subr.mxu0 0.0
      %875 = vmatpush1.msra.mxu0 0.0
      %876 = vmatprep.mubr.f32.mxu0 0.0
      %877 = vmatmul.mubr.f32.gmra.mrb[0].mxu0 %v765
      %v878 = vpop.f32.mrb[0].mxu0
      %v879 = vadd.f32 %v761, %v878
      %v880 = vpop.f32.mrb[0].mxu0
      %881 = vmatprep.mubr.f32.mxu0 0.0
      %882 = vmatmul.mubr.f32.gmra.mrb[0].mxu0 %v768
      %v883 = vpop.f32.mrb[0].mxu0
      %v884 = vadd.f32 %v761, %v883
      %v885 = vpop.f32.mrb[0].mxu0
      %886 = vmatprep.mubr.f32.mxu0 0.0
      %887 = vmatmul.mubr.f32.gmra.mrb[0].mxu0 %v771
      %v888 = vpop.f32.mrb[0].mxu0
      %v889 = vadd.f32 %v761, %v888
      %v890 = vpop.f32.mrb[0].mxu0
      %891 = vmatprep.mubr.f32.mxu0 0.0
      %892 = vmatmul.mubr.f32.gmra.mrb[0].mxu0 %v774
      %v893 = vpop.f32.mrb[0].mxu0
      %v894 = vadd.f32 %v761, %v893
      %v895 = vpop.f32.mrb[0].mxu0
      %896 = vmatprep.mubr.f32.mxu0 0.0
      %897 = vmatmul.mubr.f32.gmra.mrb[0].mxu0 %v777
      %v898 = vpop.f32.mrb[0].mxu0
      %v899 = vadd.f32 %v761, %v898
      %v900 = vpop.f32.mrb[0].mxu0
      %901 = vmatprep.mubr.f32.mxu0 0.0
      %902 = vmatmul.mubr.f32.gmra.mrb[0].mxu0 %v780
      %v903 = vpop.f32.mrb[0].mxu0
      %v904 = vadd.f32 %v761, %v903
      %v905 = vpop.f32.mrb[0].mxu0
      %906 = vmatprep.mubr.f32.mxu0 0.0
      %907 = vmatmul.mubr.f32.gmra.mrb[0].mxu0 %v783
      %v908 = vpop.f32.mrb[0].mxu0
      %v909 = vadd.f32 %v761, %v908
      %v910 = vpop.f32.mrb[0].mxu0
      %911 = vmatprep.mubr.f32.mxu0 0.0
      %912 = vmatmul.mubr.f32.gmra.mrb[0].mxu0 %v786
      %v913 = vpop.f32.mrb[0].mxu0
      %v914 = vadd.f32 %v761, %v913
      %v915 = vpop.f32.mrb[0].mxu0
      %916 = vmatprep.mubr.f32.mxu0 0.0
      %917 = vmatmul.mubr.f32.gmra.mrb[0].mxu0 %v789
      %v918 = vpop.f32.mrb[0].mxu0
      %v919 = vadd.f32 %v761, %v918
      %v920 = vpop.f32.mrb[0].mxu0
      %921 = vmatprep.mubr.f32.mxu0 0.0
      %922 = vmatmul.mubr.f32.gmra.mrb[0].mxu0 %v792
      %v923 = vpop.f32.mrb[0].mxu0
      %v924 = vadd.f32 %v761, %v923
      %v925 = vpop.f32.mrb[0].mxu0
      %926 = vmatprep.mubr.f32.mxu0 0.0
      %927 = vmatmul.mubr.f32.gmra.mrb[0].mxu0 %v795
      %v928 = vpop.f32.mrb[0].mxu0
      %v929 = vadd.f32 %v761, %v928
      %v930 = vpop.f32.mrb[0].mxu0
      %931 = vmatprep.mubr.f32.mxu0 0.0
      %932 = vmatmul.mubr.f32.gmra.mrb[0].mxu0 %v798
      %v933 = vpop.f32.mrb[0].mxu0
      %v934 = vadd.f32 %v761, %v933
      %v935 = vpop.f32.mrb[0].mxu0
      %936 = vmatprep.mubr.f32.mxu0 0.0
      %937 = vmatmul.mubr.f32.gmra.mrb[0].mxu0 %v801
      %v938 = vpop.f32.mrb[0].mxu0
      %v939 = vadd.f32 %v761, %v938
      %v940 = vpop.f32.mrb[0].mxu0
      %941 = vmatprep.mubr.f32.mxu0 0.0
      %942 = vmatmul.mubr.f32.gmra.mrb[0].mxu0 %v804
      %v943 = vpop.f32.mrb[0].mxu0
      %v944 = vadd.f32 %v761, %v943
      %v945 = vpop.f32.mrb[0].mxu0
      %946 = vmatprep.mubr.f32.mxu0 0.0
      %947 = vmatmul.mubr.f32.gmra.mrb[0].mxu0 %v807
      %v948 = vpop.f32.mrb[0].mxu0
      %v949 = vadd.f32 %v761, %v948
      %v950 = vpop.f32.mrb[0].mxu0
      %951 = vmatprep.mubr.f32.mxu0 0.0
      %952 = vmatmul.mubr.f32.gmra.mrb[0].mxu0 %v810
      %v953 = vpop.f32.mrb[0].mxu0
      %v954 = vadd.f32 %v761, %v953
      %v955 = vpop.f32.mrb[0].mxu0
      %956 = vdwg.mxu0
      %v957 = vsel %vm678, %v879, 0.0
      %v958 = vsel %vm678, %v884, 0.0
      %v959 = vadd.f32 %v957, %v958
      %v960 = vsel %vm678, %v889, 0.0
      %v961 = vadd.f32 %v959, %v960
      %v962 = vsel %vm678, %v894, 0.0
      %v963 = vadd.f32 %v961, %v962
      %v964 = vsel %vm678, %v899, 0.0
      %v965 = vadd.f32 %v963, %v964
      %v966 = vsel %vm678, %v904, 0.0
      %v967 = vadd.f32 %v965, %v966
      %v968 = vsel %vm678, %v909, 0.0
      %v969 = vadd.f32 %v967, %v968
      %v970 = vsel %vm678, %v914, 0.0
      %v971 = vadd.f32 %v969, %v970
      %v972 = vsel %vm678, %v919, 0.0
      %v973 = vadd.f32 %v971, %v972
      %v974 = vsel %vm678, %v924, 0.0
      %v975 = vadd.f32 %v973, %v974
      %v976 = vsel %vm678, %v929, 0.0
      %v977 = vadd.f32 %v975, %v976
      %v978 = vsel %vm678, %v934, 0.0
      %v979 = vadd.f32 %v977, %v978
      %v980 = vsel %vm678, %v939, 0.0
      %v981 = vadd.f32 %v979, %v980
      %v982 = vsel %vm678, %v944, 0.0
      %v983 = vadd.f32 %v981, %v982
      %v984 = vsel %vm678, %v949, 0.0
      %v985 = vadd.f32 %v983, %v984
      %v986 = vsel %vm678, %v954, 0.0
      %v987 = vadd.f32 %v985, %v986
      %v988 = vrot.slane %v987, 4
      %v989 = vadd.f32 %v987, %v988
      %v990 = vrot.slane %v989, 2
      %v991 = vadd.f32 %v989, %v990
      %v992 = vrot.slane %v991, 1
      %v993 = vadd.f32 %v991, %v992
      %v994 = vmul.f32 %v879, %v879
      %v995 = vmul.f32 %v884, %v884
      %v996 = vmul.f32 %v889, %v889
      %v997 = vmul.f32 %v894, %v894
      %v998 = vmul.f32 %v899, %v899
      %v999 = vmul.f32 %v904, %v904
      %v1000 = vmul.f32 %v909, %v909
      %v1001 = vmul.f32 %v914, %v914
      %v1002 = vmul.f32 %v919, %v919
      %v1003 = vmul.f32 %v924, %v924
      %v1004 = vmul.f32 %v929, %v929
      %v1005 = vmul.f32 %v934, %v934
      %v1006 = vmul.f32 %v939, %v939
      %v1007 = vmul.f32 %v944, %v944
      %v1008 = vmul.f32 %v949, %v949
      %v1009 = vmul.f32 %v954, %v954
      %v1010 = vsel %vm678, %v994, 0.0
      %v1011 = vsel %vm678, %v995, 0.0
      %v1012 = vadd.f32 %v1010, %v1011
      %v1013 = vsel %vm678, %v996, 0.0
      %v1014 = vadd.f32 %v1012, %v1013
      %v1015 = vsel %vm678, %v997, 0.0
      %v1016 = vadd.f32 %v1014, %v1015
      %v1017 = vsel %vm678, %v998, 0.0
      %v1018 = vadd.f32 %v1016, %v1017
      %v1019 = vsel %vm678, %v999, 0.0
      %v1020 = vadd.f32 %v1018, %v1019
      %v1021 = vsel %vm678, %v1000, 0.0
      %v1022 = vadd.f32 %v1020, %v1021
      %v1023 = vsel %vm678, %v1001, 0.0
      %v1024 = vadd.f32 %v1022, %v1023
      %v1025 = vsel %vm678, %v1002, 0.0
      %v1026 = vadd.f32 %v1024, %v1025
      %v1027 = vsel %vm678, %v1003, 0.0
      %v1028 = vadd.f32 %v1026, %v1027
      %v1029 = vsel %vm678, %v1004, 0.0
      %v1030 = vadd.f32 %v1028, %v1029
      %v1031 = vsel %vm678, %v1005, 0.0
      %v1032 = vadd.f32 %v1030, %v1031
      %v1033 = vsel %vm678, %v1006, 0.0
      %v1034 = vadd.f32 %v1032, %v1033
      %v1035 = vsel %vm678, %v1007, 0.0
      %v1036 = vadd.f32 %v1034, %v1035
      %v1037 = vsel %vm678, %v1008, 0.0
      %v1038 = vadd.f32 %v1036, %v1037
      %v1039 = vsel %vm678, %v1009, 0.0
      %v1040 = vadd.f32 %v1038, %v1039
      %v1041 = vrot.slane %v1040, 4
      %v1042 = vadd.f32 %v1040, %v1041
      %v1043 = vrot.slane %v1042, 2
      %v1044 = vadd.f32 %v1042, %v1043
      %v1045 = vrot.slane %v1044, 1
      %v1046 = vadd.f32 %v1044, %v1045
      %v1047 = vmul.f32 %v993, 0.0078125
      %v1048 = vmul.f32 %v1046, 0.0078125
      %v1049 = vmul.f32 %v1047, %v1047
      %v1050 = vsub.f32 %v1048, %v1049
      %v1051 = vmax.f32 %v1050, 0.0
      %v1052 = vsub.f32 %v879, %v1047
      %v1053 = vsub.f32 %v884, %v1047
      %v1054 = vsub.f32 %v889, %v1047
      %v1055 = vsub.f32 %v894, %v1047
      %v1056 = vsub.f32 %v899, %v1047
      %v1057 = vsub.f32 %v904, %v1047
      %v1058 = vsub.f32 %v909, %v1047
      %v1059 = vsub.f32 %v914, %v1047
      %v1060 = vsub.f32 %v919, %v1047
      %v1061 = vsub.f32 %v924, %v1047
      %v1062 = vsub.f32 %v929, %v1047
      %v1063 = vsub.f32 %v934, %v1047
      %v1064 = vsub.f32 %v939, %v1047
      %v1065 = vsub.f32 %v944, %v1047
      %v1066 = vsub.f32 %v949, %v1047
      %v1067 = vsub.f32 %v954, %v1047
      %v1068 = vadd.f32 %v1051, 1e-05
      %v1069 = vrsqrt.pop %v1068
      %v1070 = vmul.f32 %v1052, %v1069
      %v1071 = vmul.f32 %v1053, %v1069
      %v1072 = vmul.f32 %v1054, %v1069
      %v1073 = vmul.f32 %v1055, %v1069
      %v1074 = vmul.f32 %v1056, %v1069
      %v1075 = vmul.f32 %v1057, %v1069
      %v1076 = vmul.f32 %v1058, %v1069
      %v1077 = vmul.f32 %v1059, %v1069
      %v1078 = vmul.f32 %v1060, %v1069
      %v1079 = vmul.f32 %v1061, %v1069
      %v1080 = vmul.f32 %v1062, %v1069
      %v1081 = vmul.f32 %v1063, %v1069
      %v1082 = vmul.f32 %v1064, %v1069
      %v1083 = vmul.f32 %v1065, %v1069
      %v1084 = vmul.f32 %v1066, %v1069
      %v1085 = vmul.f32 %v1067, %v1069
      %v1086 = vadd.f32 %v1070, %v246
      %v1087 = vadd.f32 %v1071, %v247
      %v1088 = vadd.f32 %v1072, %v248
      %v1089 = vadd.f32 %v1073, %v249
      %v1090 = vadd.f32 %v1074, %v250
      %v1091 = vadd.f32 %v1075, %v251
      %v1092 = vadd.f32 %v1076, %v252
      %v1093 = vadd.f32 %v1077, %v253
      %v1094 = vadd.f32 %v1078, %v254
      %v1095 = vadd.f32 %v1079, %v255
      %v1096 = vadd.f32 %v1080, %v256
      %v1097 = vadd.f32 %v1081, %v257
      %v1098 = vadd.f32 %v1082, %v258
      %v1099 = vadd.f32 %v1083, %v259
      %v1100 = vadd.f32 %v1084, %v260
      %v1101 = vadd.f32 %v1085, %v261
      %v1102 = vmax.f32 %v1086, 0.0
      %v1103 = vmax.f32 %v1087, 0.0
      %v1104 = vmax.f32 %v1088, 0.0
      %v1105 = vmax.f32 %v1089, 0.0
      %v1106 = vmax.f32 %v1090, 0.0
      %v1107 = vmax.f32 %v1091, 0.0
      %v1108 = vmax.f32 %v1092, 0.0
      %v1109 = vmax.f32 %v1093, 0.0
      %v1110 = vmax.f32 %v1094, 0.0
      %v1111 = vmax.f32 %v1095, 0.0
      %v1112 = vmax.f32 %v1096, 0.0
      %v1113 = vmax.f32 %v1097, 0.0
      %v1114 = vmax.f32 %v1098, 0.0
      %v1115 = vmax.f32 %v1099, 0.0
      %v1116 = vmax.f32 %v1100, 0.0
      %v1117 = vmax.f32 %v1101, 0.0
      %1118 = vst.msk [vmem:[%s177] sm:$0xff] %vm678, %v1102
      %1119 = vst.msk [vmem:[%s177 + $0x8] sm:$0xff] %vm678, %v1103
      %1120 = vst.msk [vmem:[%s177 + $0x10] sm:$0xff] %vm678, %v1104
      %1121 = vst.msk [vmem:[%s177 + $0x18] sm:$0xff] %vm678, %v1105
      %1122 = vst.msk [vmem:[%s177 + $0x20] sm:$0xff] %vm678, %v1106
      %1123 = vst.msk [vmem:[%s177 + $0x28] sm:$0xff] %vm678, %v1107
      %1124 = vst.msk [vmem:[%s177 + $0x30] sm:$0xff] %vm678, %v1108
      %1125 = vst.msk [vmem:[%s177 + $0x38] sm:$0xff] %vm678, %v1109
      %1126 = vst.msk [vmem:[%s177 + $0x40] sm:$0xff] %vm678, %v1110
      %1127 = vst.msk [vmem:[%s177 + $0x48] sm:$0xff] %vm678, %v1111
      %1128 = vst.msk [vmem:[%s177 + $0x50] sm:$0xff] %vm678, %v1112
      %1129 = vst.msk [vmem:[%s177 + $0x58] sm:$0xff] %vm678, %v1113
      %1130 = vst.msk [vmem:[%s177 + $0x60] sm:$0xff] %vm678, %v1114
      %1131 = vst.msk [vmem:[%s177 + $0x68] sm:$0xff] %vm678, %v1115
      %1132 = vst.msk [vmem:[%s177 + $0x70] sm:$0xff] %vm678, %v1116
      %1133 = vst.msk [vmem:[%s177 + $0x78] sm:$0xff] %vm678, %v1117
      %p1134 = scmp.lt.s32.totalorder %s21, 1
      %s1135 = scalar_select %p1134, %s21, 1
      %s1136 = smul.addr %s1135, 16
      %s1137 = smul.addr %s1136, 8
      %s1138 = scalar_lea.vmem %s4, %s1137
      // Predicated region
      $region40: #{upconv_forward.6} parent=31 // pred_check
        %p1139 = pneg %p107
      $region41: #{upconv_forward.6} parent=31 // pred_check_branch
        %1141 = sbr.rel (%p1139) target = $region43
      $region42: #{upconv_forward.6} parent=31 // pred_region
        _
      $region43: #{upconv_forward.6} parent=31 // pred_fallthru
        _
    $region32: #{upconv_forward.6} parent=5 // pred_fallthru
      _
    %p1142 = scmp.le.s32.totalorder 2, %s16
    // Predicated region
    $region44: #{upconv_forward.6} parent=5 // pred_check
      %p1143 = pneg %p1142
    $region45: #{upconv_forward.6} parent=5 // pred_check_branch
      %1145 = sbr.rel (%p1143) target = $region47
    $region46: #{upconv_forward.6} parent=5 // pred_region
      %s1146 = ssub.s32 %s16, 2
      // Predicated region
      $region48: #{upconv_forward.6} parent=46 // pred_check
        %p1147 = pneg %p113
      $region49: #{upconv_forward.6} parent=46 // pred_check_branch
        %1149 = sbr.rel (%p1147) target = $region51
      $region50: #{upconv_forward.6} parent=46 // pred_region
        %p1150 = scmp.lt.s32.totalorder %s22, 1
        %s1151 = scalar_select %p1150, %s22, 1
        %s1152 = smul.addr %s1151, 16
        %s1153 = smul.addr %s1152, 8
        %s1154 = scalar_lea.vmem %s4, %s1153
      $region51: #{upconv_forward.6} parent=46 // pred_fallthru
        _
    $region47: #{upconv_forward.6} parent=5 // pred_fallthru
      _
  $region6: #{upconv_forward.6} parent=0 // loop_footer
    %s20 = sadd.s32 1, %s16
  $region7: #{upconv_forward.6} parent=0 // loop_footer_branch
    %15 = sbr.rel target = $region3
  $region8: #{upconv_forward.6} parent=0 // loop_exit
    _

// kernel: upconv_forward.4
$region0: #{upconv_forward.4}
  #allocation0 [shape = 'u32[]', space=smem, size = 0x4, offset = 0x4, fixed_abs, tag = 'smem constant byte address 0x4 - core index']
  #allocation1 [shape = 'u32[144,128]{1,0:T(1,128)}', space=vmem, size = 0x12000, scoped, tag = 'internal scratch']
  #allocation2 [shape = 'f32[128,8]{1,0:T(8,128)}', space=vmem, size = 0x10000, scoped, tag = 'scratch operand']
  #allocation3 [shape = 'f32[128,8]{1,0:T(8,128)}', space=vmem, size = 0x10000, scoped, tag = 'scratch operand']
  #allocation4 [shape = 'f32[128,8]{1,0:T(8,128)}', space=vmem, size = 0x10000, scoped, tag = 'scratch operand']
  #allocation5 [shape = 'f32[128,8]{1,0:T(8,128)}', space=vmem, size = 0x10000, scoped, tag = 'scratch operand']
  #allocation6 [shape = 's32[1]{0}', space=sflag, size = 0x4, scoped, tag = 'scoped memory for upconv_forward.4']
  #allocation7 [shape = 'u8[4096]{0}', space=smem, size = 0x1000, scoped, tag = 'prefetched SMEM operand 0']
  %s0 = inlined_call_operand.vmem [shape: s32[2,512], index: 0, kind: input, shape index: {}]
  %s1 = inlined_call_operand.vmem [shape: f32[2,128,8], index: 1, kind: input, shape index: {}]
  %s2 = inlined_call_operand.vmem [shape: f32[40,16], index: 2, kind: input, shape index: {}]
  %s3 = inlined_call_operand.vmem [shape: f32[1,16], index: 3, kind: input, shape index: {}]
  %s4 = inlined_call_operand.vmem [shape: f32[2,128,16], index: 4, kind: output, shape index: {}]
  %s5 = sld [smem:[#allocation0]]
  $region52: #{upconv_forward.4} parent=0
    _
  %s7 = ssub.s32 1, %s5
  %s8 = scalar_select 0, %s7, %s5
  %s9 = sshll.u32 %s0, 4
  %s10 = int_to_ptr.vmem [resolvable:$true] %s9
  %12 = dma.vmem_to_smem %s10, 128, [#allocation7], [#allocation6]
  %13 = dma.done [#allocation6], 128
  %14 = sfence
  loop: start=0, step=1, limit=4
  $region2: #{upconv_forward.4} parent=0 // loop_pre_header
    _
  $region3: #{upconv_forward.4} parent=0 // loop_header
    %s16 = sphi 0, %s20
    %p17 = scmp.ge.s32.totalorder %s16, 4
    %s26 = sphi 0, %s28
    %s29 = sphi 0, %s26
    %s30 = sphi 0, %s29
    %s46 = sphi 0, %s30
    %s50 = sphi 0, %s50
    %s52 = sphi 0, %s50
    %s53 = sphi 0, %s52
    %s67 = sphi 0, %s53
    %s71 = sphi 0, %s71
    %s73 = sphi 0, %s71
    %s74 = sphi 0, %s73
    %s88 = sphi 0, %s74
    %s94 = sphi 0, %s96
    %s97 = sphi 0, %s94
    %s98 = sphi 0, %s97
    %s114 = sphi 0, %s98
  $region4: #{upconv_forward.4} parent=0 // loop_header_branch
    %19 = sbr.rel (%p17) target = $region8
  $region5: #{upconv_forward.4} parent=0 // loop_body
    %s21 = ssub.s32 %s16, 1
    %s22 = ssub.s32 %s16, 2
    %s23 = sadd.s32 %s16, 1
    %s24 = ssub.s32 %s16, %s23
    %p25 = scmp.eq.s32.totalorder %s24, 0
    %s27 = sadd.s32 %s26, 1
    %s28 = scalar_select %p25, %s26, %s27
    %p31 = pneg %p25
    %p32 = scmp.eq.s32.totalorder %s16, 1
    %p33 = por %p31, %p32
    %p34 = scmp.ne.s32.totalorder %s26, %s29
    %p35 = scmp.eq.s32.totalorder %s16, 0
    %p36 = por %p34, %p35
    %p37 = scmp.ne.s32.totalorder %s26, %s29
    %p38 = scmp.eq.s32.totalorder %s21, 1
    %p39 = por %p37, %p38
    %p40 = scmp.ne.s32.totalorder %s29, %s30
    %p41 = scmp.eq.s32.totalorder %s21, 0
    %p42 = por %p40, %p41
    %p43 = scmp.ne.s32.totalorder %s29, %s30
    %p44 = scmp.eq.s32.totalorder %s22, 1
    %p45 = por %p43, %p44
    %p47 = scmp.ne.s32.totalorder %s30, %s46
    %p48 = scmp.eq.s32.totalorder %s22, 0
    %p49 = por %p47, %p48
    %s51 = sadd.s32 %s50, 1
    %p54 = scmp.eq.s32.totalorder %s16, 1
    %p55 = scmp.ne.s32.totalorder %s50, %s52
    %p56 = scmp.eq.s32.totalorder %s16, 0
    %p57 = por %p55, %p56
    %p58 = scmp.ne.s32.totalorder %s50, %s52
    %p59 = scmp.eq.s32.totalorder %s21, 1
    %p60 = por %p58, %p59
    %p61 = scmp.ne.s32.totalorder %s52, %s53
    %p62 = scmp.eq.s32.totalorder %s21, 0
    %p63 = por %p61, %p62
    %p64 = scmp.ne.s32.totalorder %s52, %s53
    %p65 = scmp.eq.s32.totalorder %s22, 1
    %p66 = por %p64, %p65
    %p68 = scmp.ne.s32.totalorder %s53, %s67
    %p69 = scmp.eq.s32.totalorder %s22, 0
    %p70 = por %p68, %p69
    %s72 = sadd.s32 %s71, 1
    %p75 = scmp.eq.s32.totalorder %s16, 1
    %p76 = scmp.ne.s32.totalorder %s71, %s73
    %p77 = scmp.eq.s32.totalorder %s16, 0
    %p78 = por %p76, %p77
    %p79 = scmp.ne.s32.totalorder %s71, %s73
    %p80 = scmp.eq.s32.totalorder %s21, 1
    %p81 = por %p79, %p80
    %p82 = scmp.ne.s32.totalorder %s73, %s74
    %p83 = scmp.eq.s32.totalorder %s21, 0
    %p84 = por %p82, %p83
    %p85 = scmp.ne.s32.totalorder %s73, %s74
    %p86 = scmp.eq.s32.totalorder %s22, 1
    %p87 = por %p85, %p86
    %p89 = scmp.ne.s32.totalorder %s74, %s88
    %p90 = scmp.eq.s32.totalorder %s22, 0
    %p91 = por %p89, %p90
    %s92 = ssub.s32 %s16, %s23
    %p93 = scmp.eq.s32.totalorder %s92, 0
    %s95 = sadd.s32 %s94, 1
    %s96 = scalar_select %p93, %s94, %s95
    %p99 = pneg %p93
    %p100 = scmp.eq.s32.totalorder %s16, 1
    %p101 = por %p99, %p100
    %p102 = scmp.ne.s32.totalorder %s94, %s97
    %p103 = scmp.eq.s32.totalorder %s16, 0
    %p104 = por %p102, %p103
    %p105 = scmp.ne.s32.totalorder %s94, %s97
    %p106 = scmp.eq.s32.totalorder %s21, 1
    %p107 = por %p105, %p106
    %p108 = scmp.ne.s32.totalorder %s97, %s98
    %p109 = scmp.eq.s32.totalorder %s21, 0
    %p110 = por %p108, %p109
    %p111 = scmp.ne.s32.totalorder %s97, %s98
    %p112 = scmp.eq.s32.totalorder %s22, 1
    %p113 = por %p111, %p112
    %p115 = scmp.ne.s32.totalorder %s98, %s114
    %p116 = scmp.eq.s32.totalorder %s22, 0
    %p117 = por %p115, %p116
    %p118 = scmp.le.s32.totalorder 1, %s16
    %p119 = scmp.lt.s32.totalorder %s16, 3
    %p120 = pnand %p118, %p119
    %p121 = pneg %p120
    // Predicated region
    $region9: #{upconv_forward.4} parent=5 // pred_check
      _
    $region10: #{upconv_forward.4} parent=5 // pred_check_branch
      %123 = sbr.rel (%p120) target = $region12
    $region11: #{upconv_forward.4} parent=5 // pred_region
      %s124 = ssub.s32 %s16, 1
      // Predicated region
      $region13: #{upconv_forward.4} parent=11 // pred_check
        %p125 = pneg %p63
      $region14: #{upconv_forward.4} parent=11 // pred_check_branch
        %127 = sbr.rel (%p125) target = $region16
      $region15: #{upconv_forward.4} parent=11 // pred_region
        _
      $region16: #{upconv_forward.4} parent=11 // pred_fallthru
        _
      // Predicated region
      $region17: #{upconv_forward.4} parent=11 // pred_check
        %p128 = pneg %p84
      $region18: #{upconv_forward.4} parent=11 // pred_check_branch
        %130 = sbr.rel (%p128) target = $region20
      $region19: #{upconv_forward.4} parent=11 // pred_region
        _
      $region20: #{upconv_forward.4} parent=11 // pred_fallthru
        _
    $region12: #{upconv_forward.4} parent=5 // pred_fallthru
      _
    %p131 = scmp.lt.s32.totalorder %s16, 2
    // Predicated region
    $region21: #{upconv_forward.4} parent=5 // pred_check
      %p132 = pneg %p131
    $region22: #{upconv_forward.4} parent=5 // pred_check_branch
      %134 = sbr.rel (%p132) target = $region24
    $region23: #{upconv_forward.4} parent=5 // pred_region
      // Predicated region
      $region25: #{upconv_forward.4} parent=23 // pred_check
        %p135 = pneg %p36
      $region26: #{upconv_forward.4} parent=23 // pred_check_branch
        %137 = sbr.rel (%p135) target = $region28
      $region27: #{upconv_forward.4} parent=23 // pred_region
        %p138 = scmp.lt.s32.totalorder %s16, 1
        %s139 = scalar_select %p138, %s16, 1
        %s140 = smul.addr %s139, 16
        %s141 = smul.addr %s140, 8
        %s142 = scalar_lea.vmem %s1, %s141
      $region28: #{upconv_forward.4} parent=23 // pred_fallthru
        _
    $region24: #{upconv_forward.4} parent=5 // pred_fallthru
      _
    %p143 = scmp.le.s32.totalorder 1, %s16
    %p144 = scmp.lt.s32.totalorder %s16, 3
    %p145 = pnand %p143, %p144
    %p146 = pneg %p145
    // Predicated region
    $region29: #{upconv_forward.4} parent=5 // pred_check
      _
    $region30: #{upconv_forward.4} parent=5 // pred_check_branch
      %148 = sbr.rel (%p145) target = $region32
    $region31: #{upconv_forward.4} parent=5 // pred_region
      %s149 = ssub.s32 %s16, 1
      %p150 = scmp.lt.s32.totalorder %s21, 1
      %s151 = scalar_select %p150, %s21, 1
      %s152 = smul.addr %s151, 16
      %s153 = smul.addr %s152, 8
      %s154 = scalar_lea.vmem %s1, %s153
      %p155 = pneg %p42
      %p156 = pneg %p39
      %p157 = pneg %p63
      %p158 = pneg %p60
      %p159 = pneg %p84
      %p160 = pneg %p81
      %p161 = pneg %p110
      %p162 = pneg %p107
      %p163 = scmp.lt.s32.totalorder %s21, 1
      %s164 = scalar_select %p163, %s21, 1
      %s165 = smul.addr %s164, 16
      %s166 = smul.addr %s165, 8
      %s167 = scalar_lea.vmem %s4, %s166
      %p168 = scmp.lt.s32.totalorder %s21, 1
      %s169 = scalar_select %p168, %s21, 1
      %s170 = smul.addr %s169, 16
      %s171 = smul.addr %s170, 8
      %s172 = scalar_lea.vmem %s1, %s171
      %p173 = scmp.lt.s32.totalorder %s21, 1
      %s174 = scalar_select %p173, %s21, 1
      %s175 = smul.addr %s174, 16
      %s176 = smul.addr %s175, 8
      %s177 = scalar_lea.vmem %s4, %s176
      loop: start=0, step=1, limit=128
      $region33: #{upconv_forward.4} parent=31 // loop_pre_header
        _
      $region34: #{upconv_forward.4} parent=31 // loop_header
        %s179 = sphi 0, %s183
        %p180 = scmp.ge.s32.totalorder %s179, 128
      $region35: #{upconv_forward.4} parent=31 // loop_header_branch
        %182 = sbr.rel (%p180) target = $region39
      $region36: #{upconv_forward.4} parent=31 // loop_body
        %s184 = sshra.s32 %s179, 7
        %s185 = sand.u32 %s179, 127
        %s186 = sshra.s32 %s21, 1
        %s187 = sand.u32 %s21, 1
        %s188 = smul.u32 %s186, 4
        %s189 = sadd.s32 %s184, %s188
        %s190 = smul.u32 %s189, 256
        %s191 = sshra.s32 %s21, 1
        %s192 = sand.u32 %s21, 1
        %s193 = sshra.s32 %s179, 7
        %s194 = sand.u32 %s179, 127
        %s195 = smul.u32 %s192, 128
        %s196 = sadd.s32 %s195, %s194
        %s197 = sadd.s32 %s190, %s196
        %s198 = sld [smem:[#allocation7 + %s197]]
        %s199 = sadd.s32 %s179, 128
        %s200 = sshra.s32 %s199, 7
        %s201 = sand.u32 %s199, 127
        %s202 = sadd.s32 %s200, %s188
        %s203 = smul.u32 %s202, 256
        %s204 = sshra.s32 %s199, 7
        %s205 = sand.u32 %s199, 127
        %s206 = sadd.s32 %s195, %s205
        %s207 = sadd.s32 %s203, %s206
        %s208 = sld [smem:[#allocation7 + %s207]]
        %s209 = sadd.s32 %s179, 256
        %s210 = sshra.s32 %s209, 7
        %s211 = sand.u32 %s209, 127
        %s212 = sadd.s32 %s210, %s188
        %s213 = smul.u32 %s212, 256
        %s214 = sshra.s32 %s209, 7
        %s215 = sand.u32 %s209, 127
        %s216 = sadd.s32 %s195, %s215
        %s217 = sadd.s32 %s213, %s216
        %s218 = sld [smem:[#allocation7 + %s217]]
        %s219 = sadd.s32 %s179, 384
        %s220 = sshra.s32 %s219, 7
        %s221 = sand.u32 %s219, 127
        %s222 = sadd.s32 %s220, %s188
        %s223 = smul.u32 %s222, 256
        %s224 = sshra.s32 %s219, 7
        %s225 = sand.u32 %s219, 127
        %s226 = sadd.s32 %s195, %s225
        %s227 = sadd.s32 %s223, %s226
        %s228 = sld [smem:[#allocation7 + %s227]]
        %s229 = scalar_lea.vmem %s172, %s198
        %v230 = vld [vmem:[%s229] sm:$0x1]
        %s231 = scalar_lea.vmem [#allocation2], %s179
        %vm232 = vcmask 57344
        %233 = vst.msk [vmem:[%s231] sm:$0x1] %vm232, %v230
        %s234 = scalar_lea.vmem %s172, %s208
        %v235 = vld [vmem:[%s234] sm:$0x1]
        %s236 = scalar_lea.vmem [#allocation3], %s179
        %237 = vst.msk [vmem:[%s236] sm:$0x1] %vm232, %v235
        %s238 = scalar_lea.vmem %s172, %s218
        %v239 = vld [vmem:[%s238] sm:$0x1]
        %s240 = scalar_lea.vmem [#allocation4], %s179
        %241 = vst.msk [vmem:[%s240] sm:$0x1] %vm232, %v239
        %s242 = scalar_lea.vmem %s172, %s228
        %v243 = vld [vmem:[%s242] sm:$0x1]
        %s244 = scalar_lea.vmem [#allocation5], %s179
        %245 = vst.msk [vmem:[%s244] sm:$0x1] %vm232, %v243
      $region37: #{upconv_forward.4} parent=31 // loop_footer
        %s183 = sadd.s32 1, %s179
      $region38: #{upconv_forward.4} parent=31 // loop_footer_branch
        %178 = sbr.rel target = $region34
      $region39: #{upconv_forward.4} parent=31 // loop_exit
        _
      %v246 = vld [vmem:[%s172] sm:$0xff]
      %v247 = vld [vmem:[%s172 + $0x8] sm:$0xff]
      %v248 = vld [vmem:[%s172 + $0x10] sm:$0xff]
      %v249 = vld [vmem:[%s172 + $0x18] sm:$0xff]
      %v250 = vld [vmem:[%s172 + $0x20] sm:$0xff]
      %v251 = vld [vmem:[%s172 + $0x28] sm:$0xff]
      %v252 = vld [vmem:[%s172 + $0x30] sm:$0xff]
      %v253 = vld [vmem:[%s172 + $0x38] sm:$0xff]
      %v254 = vld [vmem:[%s172 + $0x40] sm:$0xff]
      %v255 = vld [vmem:[%s172 + $0x48] sm:$0xff]
      %v256 = vld [vmem:[%s172 + $0x50] sm:$0xff]
      %v257 = vld [vmem:[%s172 + $0x58] sm:$0xff]
      %v258 = vld [vmem:[%s172 + $0x60] sm:$0xff]
      %v259 = vld [vmem:[%s172 + $0x68] sm:$0xff]
      %v260 = vld [vmem:[%s172 + $0x70] sm:$0xff]
      %v261 = vld [vmem:[%s172 + $0x78] sm:$0xff]
      %v262 = vld [vmem:[#allocation2] sm:$0xff]
      %v263 = vld [vmem:[#allocation2 + $0x8] sm:$0xff]
      %v264 = vld [vmem:[#allocation2 + $0x10] sm:$0xff]
      %v265 = vld [vmem:[#allocation2 + $0x18] sm:$0xff]
      %v266 = vld [vmem:[#allocation2 + $0x20] sm:$0xff]
      %v267 = vld [vmem:[#allocation2 + $0x28] sm:$0xff]
      %v268 = vld [vmem:[#allocation2 + $0x30] sm:$0xff]
      %v269 = vld [vmem:[#allocation2 + $0x38] sm:$0xff]
      %v270 = vld [vmem:[#allocation2 + $0x40] sm:$0xff]
      %v271 = vld [vmem:[#allocation2 + $0x48] sm:$0xff]
      %v272 = vld [vmem:[#allocation2 + $0x50] sm:$0xff]
      %v273 = vld [vmem:[#allocation2 + $0x58] sm:$0xff]
      %v274 = vld [vmem:[#allocation2 + $0x60] sm:$0xff]
      %v275 = vld [vmem:[#allocation2 + $0x68] sm:$0xff]
      %v276 = vld [vmem:[#allocation2 + $0x70] sm:$0xff]
      %v277 = vld [vmem:[#allocation2 + $0x78] sm:$0xff]
      %v278 = vld [vmem:[#allocation3] sm:$0xff]
      %v279 = vld [vmem:[#allocation3 + $0x8] sm:$0xff]
      %v280 = vld [vmem:[#allocation3 + $0x10] sm:$0xff]
      %v281 = vld [vmem:[#allocation3 + $0x18] sm:$0xff]
      %v282 = vld [vmem:[#allocation3 + $0x20] sm:$0xff]
      %v283 = vld [vmem:[#allocation3 + $0x28] sm:$0xff]
      %v284 = vld [vmem:[#allocation3 + $0x30] sm:$0xff]
      %v285 = vld [vmem:[#allocation3 + $0x38] sm:$0xff]
      %v286 = vld [vmem:[#allocation3 + $0x40] sm:$0xff]
      %v287 = vld [vmem:[#allocation3 + $0x48] sm:$0xff]
      %v288 = vld [vmem:[#allocation3 + $0x50] sm:$0xff]
      %v289 = vld [vmem:[#allocation3 + $0x58] sm:$0xff]
      %v290 = vld [vmem:[#allocation3 + $0x60] sm:$0xff]
      %v291 = vld [vmem:[#allocation3 + $0x68] sm:$0xff]
      %v292 = vld [vmem:[#allocation3 + $0x70] sm:$0xff]
      %v293 = vld [vmem:[#allocation3 + $0x78] sm:$0xff]
      %v294 = vld [vmem:[#allocation4] sm:$0xff]
      %v295 = vld [vmem:[#allocation4 + $0x8] sm:$0xff]
      %v296 = vld [vmem:[#allocation4 + $0x10] sm:$0xff]
      %v297 = vld [vmem:[#allocation4 + $0x18] sm:$0xff]
      %v298 = vld [vmem:[#allocation4 + $0x20] sm:$0xff]
      %v299 = vld [vmem:[#allocation4 + $0x28] sm:$0xff]
      %v300 = vld [vmem:[#allocation4 + $0x30] sm:$0xff]
      %v301 = vld [vmem:[#allocation4 + $0x38] sm:$0xff]
      %v302 = vld [vmem:[#allocation4 + $0x40] sm:$0xff]
      %v303 = vld [vmem:[#allocation4 + $0x48] sm:$0xff]
      %v304 = vld [vmem:[#allocation4 + $0x50] sm:$0xff]
      %v305 = vld [vmem:[#allocation4 + $0x58] sm:$0xff]
      %v306 = vld [vmem:[#allocation4 + $0x60] sm:$0xff]
      %v307 = vld [vmem:[#allocation4 + $0x68] sm:$0xff]
      %v308 = vld [vmem:[#allocation4 + $0x70] sm:$0xff]
      %v309 = vld [vmem:[#allocation4 + $0x78] sm:$0xff]
      %v310 = vld [vmem:[#allocation5] sm:$0xff]
      %v311 = vld [vmem:[#allocation5 + $0x8] sm:$0xff]
      %v312 = vld [vmem:[#allocation5 + $0x10] sm:$0xff]
      %v313 = vld [vmem:[#allocation5 + $0x18] sm:$0xff]
      %v314 = vld [vmem:[#allocation5 + $0x20] sm:$0xff]
      %v315 = vld [vmem:[#allocation5 + $0x28] sm:$0xff]
      %v316 = vld [vmem:[#allocation5 + $0x30] sm:$0xff]
      %v317 = vld [vmem:[#allocation5 + $0x38] sm:$0xff]
      %v318 = vld [vmem:[#allocation5 + $0x40] sm:$0xff]
      %v319 = vld [vmem:[#allocation5 + $0x48] sm:$0xff]
      %v320 = vld [vmem:[#allocation5 + $0x50] sm:$0xff]
      %v321 = vld [vmem:[#allocation5 + $0x58] sm:$0xff]
      %v322 = vld [vmem:[#allocation5 + $0x60] sm:$0xff]
      %v323 = vld [vmem:[#allocation5 + $0x68] sm:$0xff]
      %v324 = vld [vmem:[#allocation5 + $0x70] sm:$0xff]
      %v325 = vld [vmem:[#allocation5 + $0x78] sm:$0xff]
      %v326 = vsub.f32 %v262, %v294
      %v327 = vsub.f32 %v263, %v295
      %v328 = vsub.f32 %v264, %v296
      %v329 = vsub.f32 %v265, %v297
      %v330 = vsub.f32 %v266, %v298
      %v331 = vsub.f32 %v267, %v299
      %v332 = vsub.f32 %v268, %v300
      %v333 = vsub.f32 %v269, %v301
      %v334 = vsub.f32 %v270, %v302
      %v335 = vsub.f32 %v271, %v303
      %v336 = vsub.f32 %v272, %v304
      %v337 = vsub.f32 %v273, %v305
      %v338 = vsub.f32 %v274, %v306
      %v339 = vsub.f32 %v275, %v307
      %v340 = vsub.f32 %v276, %v308
      %v341 = vsub.f32 %v277, %v309
      %v342 = vand.u32 2147483647, %v326
      %v343 = vand.u32 2147483647, %v327
      %v344 = vand.u32 2147483647, %v328
      %v345 = vand.u32 2147483647, %v329
      %v346 = vand.u32 2147483647, %v330
      %v347 = vand.u32 2147483647, %v331
      %v348 = vand.u32 2147483647, %v332
      %v349 = vand.u32 2147483647, %v333
      %v350 = vand.u32 2147483647, %v334
      %v351 = vand.u32 2147483647, %v335
      %v352 = vand.u32 2147483647, %v336
      %v353 = vand.u32 2147483647, %v337
      %v354 = vand.u32 2147483647, %v338
      %v355 = vand.u32 2147483647, %v339
      %v356 = vand.u32 2147483647, %v340
      %v357 = vand.u32 2147483647, %v341
      %v358 = vadd.f32 %v262, %v294
      %v359 = vadd.f32 %v263, %v295
      %v360 = vadd.f32 %v264, %v296
      %v361 = vadd.f32 %v265, %v297
      %v362 = vadd.f32 %v266, %v298
      %v363 = vadd.f32 %v267, %v299
      %v364 = vadd.f32 %v268, %v300
      %v365 = vadd.f32 %v269, %v301
      %v366 = vadd.f32 %v270, %v302
      %v367 = vadd.f32 %v271, %v303
      %v368 = vadd.f32 %v272, %v304
      %v369 = vadd.f32 %v273, %v305
      %v370 = vadd.f32 %v274, %v306
      %v371 = vadd.f32 %v275, %v307
      %v372 = vadd.f32 %v276, %v308
      %v373 = vadd.f32 %v277, %v309
      %v374 = vsub.f32 %v278, %v310
      %v375 = vsub.f32 %v279, %v311
      %v376 = vsub.f32 %v280, %v312
      %v377 = vsub.f32 %v281, %v313
      %v378 = vsub.f32 %v282, %v314
      %v379 = vsub.f32 %v283, %v315
      %v380 = vsub.f32 %v284, %v316
      %v381 = vsub.f32 %v285, %v317
      %v382 = vsub.f32 %v286, %v318
      %v383 = vsub.f32 %v287, %v319
      %v384 = vsub.f32 %v288, %v320
      %v385 = vsub.f32 %v289, %v321
      %v386 = vsub.f32 %v290, %v322
      %v387 = vsub.f32 %v291, %v323
      %v388 = vsub.f32 %v292, %v324
      %v389 = vsub.f32 %v293, %v325
      %v390 = vand.u32 2147483647, %v374
      %v391 = vand.u32 2147483647, %v375
      %v392 = vand.u32 2147483647, %v376
      %v393 = vand.u32 2147483647, %v377
      %v394 = vand.u32 2147483647, %v378
      %v395 = vand.u32 2147483647, %v379
      %v396 = vand.u32 2147483647, %v380
      %v397 = vand.u32 2147483647, %v381
      %v398 = vand.u32 2147483647, %v382
      %v399 = vand.u32 2147483647, %v383
      %v400 = vand.u32 2147483647, %v384
      %v401 = vand.u32 2147483647, %v385
      %v402 = vand.u32 2147483647, %v386
      %v403 = vand.u32 2147483647, %v387
      %v404 = vand.u32 2147483647, %v388
      %v405 = vand.u32 2147483647, %v389
      %v406 = vadd.f32 %v278, %v310
      %v407 = vadd.f32 %v279, %v311
      %v408 = vadd.f32 %v280, %v312
      %v409 = vadd.f32 %v281, %v313
      %v410 = vadd.f32 %v282, %v314
      %v411 = vadd.f32 %v283, %v315
      %v412 = vadd.f32 %v284, %v316
      %v413 = vadd.f32 %v285, %v317
      %v414 = vadd.f32 %v286, %v318
      %v415 = vadd.f32 %v287, %v319
      %v416 = vadd.f32 %v288, %v320
      %v417 = vadd.f32 %v289, %v321
      %v418 = vadd.f32 %v290, %v322
      %v419 = vadd.f32 %v291, %v323
      %v420 = vadd.f32 %v292, %v324
      %v421 = vadd.f32 %v293, %v325
      %438 = vrot.lane.b32.xlu0 %v342, 8
      %v439 = vpop.permute.xlu0 %438
      %440 = vrot.lane.b32.xlu0 %v343, 8
      %v441 = vpop.permute.xlu0 %440
      %442 = vrot.lane.b32.xlu0 %v344, 8
      %v443 = vpop.permute.xlu0 %442
      %444 = vrot.lane.b32.xlu0 %v345, 8
      %v445 = vpop.permute.xlu0 %444
      %446 = vrot.lane.b32.xlu0 %v346, 8
      %v447 = vpop.permute.xlu0 %446
      %448 = vrot.lane.b32.xlu0 %v347, 8
      %v449 = vpop.permute.xlu0 %448
      %450 = vrot.lane.b32.xlu0 %v348, 8
      %v451 = vpop.permute.xlu0 %450
      %452 = vrot.lane.b32.xlu0 %v349, 8
      %v453 = vpop.permute.xlu0 %452
      %454 = vrot.lane.b32.xlu0 %v350, 8
      %v455 = vpop.permute.xlu0 %454
      %456 = vrot.lane.b32.xlu0 %v351, 8
      %v457 = vpop.permute.xlu0 %456
      %458 = vrot.lane.b32.xlu0 %v352, 8
      %v459 = vpop.permute.xlu0 %458
      %460 = vrot.lane.b32.xlu0 %v353, 8
      %v461 = vpop.permute.xlu0 %460
      %462 = vrot.lane.b32.xlu0 %v354, 8
      %v463 = vpop.permute.xlu0 %462
      %464 = vrot.lane.b32.xlu0 %v355, 8
      %v465 = vpop.permute.xlu0 %464
      %466 = vrot.lane.b32.xlu0 %v356, 8
      %v467 = vpop.permute.xlu0 %466
      %468 = vrot.lane.b32.xlu0 %v357, 8
      %v469 = vpop.permute.xlu0 %468
      %502 = vrot.lane.b32.xlu0 %v358, 16
      %v503 = vpop.permute.xlu0 %502
      %504 = vrot.lane.b32.xlu0 %v359, 16
      %v505 = vpop.permute.xlu0 %504
      %506 = vrot.lane.b32.xlu0 %v360, 16
      %v507 = vpop.permute.xlu0 %506
      %508 = vrot.lane.b32.xlu0 %v361, 16
      %v509 = vpop.permute.xlu0 %508
      %510 = vrot.lane.b32.xlu0 %v362, 16
      %v511 = vpop.permute.xlu0 %510
      %512 = vrot.lane.b32.xlu0 %v363, 16
      %v513 = vpop.permute.xlu0 %512
      %514 = vrot.lane.b32.xlu0 %v364, 16
      %v515 = vpop.permute.xlu0 %514
      %516 = vrot.lane.b32.xlu0 %v365, 16
      %v517 = vpop.permute.xlu0 %516
      %518 = vrot.lane.b32.xlu0 %v366, 16
      %v519 = vpop.permute.xlu0 %518
      %520 = vrot.lane.b32.xlu0 %v367, 16
      %v521 = vpop.permute.xlu0 %520
      %522 = vrot.lane.b32.xlu0 %v368, 16
      %v523 = vpop.permute.xlu0 %522
      %524 = vrot.lane.b32.xlu0 %v369, 16
      %v525 = vpop.permute.xlu0 %524
      %526 = vrot.lane.b32.xlu0 %v370, 16
      %v527 = vpop.permute.xlu0 %526
      %528 = vrot.lane.b32.xlu0 %v371, 16
      %v529 = vpop.permute.xlu0 %528
      %530 = vrot.lane.b32.xlu0 %v372, 16
      %v531 = vpop.permute.xlu0 %530
      %532 = vrot.lane.b32.xlu0 %v373, 16
      %v533 = vpop.permute.xlu0 %532
      %566 = vrot.lane.b32.xlu0 %v390, 24
      %v567 = vpop.permute.xlu0 %566
      %568 = vrot.lane.b32.xlu0 %v391, 24
      %v569 = vpop.permute.xlu0 %568
      %570 = vrot.lane.b32.xlu0 %v392, 24
      %v571 = vpop.permute.xlu0 %570
      %572 = vrot.lane.b32.xlu0 %v393, 24
      %v573 = vpop.permute.xlu0 %572
      %574 = vrot.lane.b32.xlu0 %v394, 24
      %v575 = vpop.permute.xlu0 %574
      %576 = vrot.lane.b32.xlu0 %v395, 24
      %v577 = vpop.permute.xlu0 %576
      %578 = vrot.lane.b32.xlu0 %v396, 24
      %v579 = vpop.permute.xlu0 %578
      %580 = vrot.lane.b32.xlu0 %v397, 24
      %v581 = vpop.permute.xlu0 %580
      %582 = vrot.lane.b32.xlu0 %v398, 24
      %v583 = vpop.permute.xlu0 %582
      %584 = vrot.lane.b32.xlu0 %v399, 24
      %v585 = vpop.permute.xlu0 %584
      %586 = vrot.lane.b32.xlu0 %v400, 24
      %v587 = vpop.permute.xlu0 %586
      %588 = vrot.lane.b32.xlu0 %v401, 24
      %v589 = vpop.permute.xlu0 %588
      %590 = vrot.lane.b32.xlu0 %v402, 24
      %v591 = vpop.permute.xlu0 %590
      %592 = vrot.lane.b32.xlu0 %v403, 24
      %v593 = vpop.permute.xlu0 %592
      %594 = vrot.lane.b32.xlu0 %v404, 24
      %v595 = vpop.permute.xlu0 %594
      %596 = vrot.lane.b32.xlu0 %v405, 24
      %v597 = vpop.permute.xlu0 %596
      %630 = vrot.lane.b32.xlu0 %v406, 32
      %v631 = vpop.permute.xlu0 %630
      %632 = vrot.lane.b32.xlu0 %v407, 32
      %v633 = vpop.permute.xlu0 %632
      %634 = vrot.lane.b32.xlu0 %v408, 32
      %v635 = vpop.permute.xlu0 %634
      %636 = vrot.lane.b32.xlu0 %v409, 32
      %v637 = vpop.permute.xlu0 %636
      %638 = vrot.lane.b32.xlu0 %v410, 32
      %v639 = vpop.permute.xlu0 %638
      %640 = vrot.lane.b32.xlu0 %v411, 32
      %v641 = vpop.permute.xlu0 %640
      %642 = vrot.lane.b32.xlu0 %v412, 32
      %v643 = vpop.permute.xlu0 %642
      %644 = vrot.lane.b32.xlu0 %v413, 32
      %v645 = vpop.permute.xlu0 %644
      %646 = vrot.lane.b32.xlu0 %v414, 32
      %v647 = vpop.permute.xlu0 %646
      %648 = vrot.lane.b32.xlu0 %v415, 32
      %v649 = vpop.permute.xlu0 %648
      %650 = vrot.lane.b32.xlu0 %v416, 32
      %v651 = vpop.permute.xlu0 %650
      %652 = vrot.lane.b32.xlu0 %v417, 32
      %v653 = vpop.permute.xlu0 %652
      %654 = vrot.lane.b32.xlu0 %v418, 32
      %v655 = vpop.permute.xlu0 %654
      %656 = vrot.lane.b32.xlu0 %v419, 32
      %v657 = vpop.permute.xlu0 %656
      %658 = vrot.lane.b32.xlu0 %v420, 32
      %v659 = vpop.permute.xlu0 %658
      %660 = vrot.lane.b32.xlu0 %v421, 32
      %v661 = vpop.permute.xlu0 %660
      %vm678 = vcmask 64512
      %v679 = vsel %vm678, %v246, %v439
      %v680 = vsel %vm678, %v247, %v441
      %v681 = vsel %vm678, %v248, %v443
      %v682 = vsel %vm678, %v249, %v445
      %v683 = vsel %vm678, %v250, %v447
      %v684 = vsel %vm678, %v251, %v449
      %v685 = vsel %vm678, %v252, %v451
      %v686 = vsel %vm678, %v253, %v453
      %v687 = vsel %vm678, %v254, %v455
      %v688 = vsel %vm678, %v255, %v457
      %v689 = vsel %vm678, %v256, %v459
      %v690 = vsel %vm678, %v257, %v461
      %v691 = vsel %vm678, %v258, %v463
      %v692 = vsel %vm678, %v259, %v465
      %v693 = vsel %vm678, %v260, %v467
      %v694 = vsel %vm678, %v261, %v469
      %vm695 = vcmask 130048
      %v696 = vsel %vm695, %v679, %v503
      %v697 = vsel %vm695, %v680, %v505
      %v698 = vsel %vm695, %v681, %v507
      %v699 = vsel %vm695, %v682, %v509
      %v700 = vsel %vm695, %v683, %v511
      %v701 = vsel %vm695, %v684, %v513
      %v702 = vsel %vm695, %v685, %v515
      %v703 = vsel %vm695, %v686, %v517
      %v704 = vsel %vm695, %v687, %v519
      %v705 = vsel %vm695, %v688, %v521
      %v706 = vsel %vm695, %v689, %v523
      %v707 = vsel %vm695, %v690, %v525
      %v708 = vsel %vm695, %v691, %v527
      %v709 = vsel %vm695, %v692, %v529
      %v710 = vsel %vm695, %v693, %v531
      %v711 = vsel %vm695, %v694, %v533
      %vm712 = vcmask 195584
      %v713 = vsel %vm712, %v696, %v567
      %v714 = vsel %vm712, %v697, %v569
      %v715 = vsel %vm712, %v698, %v571
      %v716 = vsel %vm712, %v699, %v573
      %v717 = vsel %vm712, %v700, %v575
      %v718 = vsel %vm712, %v701, %v577
      %v719 = vsel %vm712, %v702, %v579
      %v720 = vsel %vm712, %v703, %v581
      %v721 = vsel %vm712, %v704, %v583
      %v722 = vsel %vm712, %v705, %v585
      %v723 = vsel %vm712, %v706, %v587
      %v724 = vsel %vm712, %v707, %v589
      %v725 = vsel %vm712, %v708, %v591
      %v726 = vsel %vm712, %v709, %v593
      %v727 = vsel %vm712, %v710, %v595
      %v728 = vsel %vm712, %v711, %v597
      %vm729 = vcmask 261120
      %v730 = vsel %vm729, %v713, %v631
      %v731 = vsel %vm729, %v714, %v633
      %v732 = vsel %vm729, %v715, %v635
      %v733 = vsel %vm729, %v716, %v637
      %v734 = vsel %vm729, %v717, %v639
      %v735 = vsel %vm729, %v718, %v641
      %v736 = vsel %vm729, %v719, %v643
      %v737 = vsel %vm729, %v720, %v645
      %v738 = vsel %vm729, %v721, %v647
      %v739 = vsel %vm729, %v722, %v649
      %v740 = vsel %vm729, %v723, %v651
      %v741 = vsel %vm729, %v724, %v653
      %v742 = vsel %vm729, %v725, %v655
      %v743 = vsel %vm729, %v726, %v657
      %v744 = vsel %vm729, %v727, %v659
      %v745 = vsel %vm729, %v728, %v661
      %v746 = vld [vmem:[%s2] sm:$0xff]
      %v747 = vld [vmem:[%s2 + $0x8] sm:$0xff]
      %v748 = vld [vmem:[%s2 + $0x10] sm:$0xff]
      %v749 = vld [vmem:[%s2 + $0x18] sm:$0xff]
      %v750 = vld [vmem:[%s2 + $0x20] sm:$0xff]
      %v751 = vld [vmem:[%s3] sm:$0x1]
      %v753 = vlaneseq
      %v754 = vshrl.u32 %v753, 7
      %v755 = vsub.s32 0, %v754
      %v756 = vrot.slane %v751, %v755
      %vm758 = vcmask 326656
      %v760 = vsel %vm758, %v730, 0
      %v763 = vsel %vm758, %v731, 0
      %v766 = vsel %vm758, %v732, 0
      %v769 = vsel %vm758, %v733, 0
      %v772 = vsel %vm758, %v734, 0
      %v775 = vsel %vm758, %v735, 0
      %v778 = vsel %vm758, %v736, 0
      %v781 = vsel %vm758, %v737, 0
      %v784 = vsel %vm758, %v738, 0
      %v787 = vsel %vm758, %v739, 0
      %v790 = vsel %vm758, %v740, 0
      %v793 = vsel %vm758, %v741, 0
      %v796 = vsel %vm758, %v742, 0
      %v799 = vsel %vm758, %v743, 0
      %v802 = vsel %vm758, %v744, 0
      %v805 = vsel %vm758, %v745, 0
      %807 = vmatprep.subr.mxu0 0.0
      %808 = vmatpush1.msra.mxu0 %v746
      %809 = vmatprep.subr.mxu0 0.0
      %810 = vmatpush1.msra.mxu0 %v747
      %811 = vmatprep.subr.mxu0 0.0
      %812 = vmatpush1.msra.mxu0 %v748
      %813 = vmatprep.subr.mxu0 0.0
      %814 = vmatpush1.msra.mxu0 %v749
      %815 = vmatprep.subr.mxu0 0.0
      %816 = vmatpush1.msra.mxu0 %v750
      %817 = vmatprep.subr.mxu0 0.0
      %818 = vmatpush1.msra.mxu0 0.0
      %819 = vmatprep.subr.mxu0 0.0
      %820 = vmatpush1.msra.mxu0 0.0
      %821 = vmatprep.subr.mxu0 0.0
      %822 = vmatpush1.msra.mxu0 0.0
      %823 = vmatprep.subr.mxu0 0.0
      %824 = vmatpush1.msra.mxu0 0.0
      %825 = vmatprep.subr.mxu0 0.0
      %826 = vmatpush1.msra.mxu0 0.0
      %827 = vmatprep.subr.mxu0 0.0
      %828 = vmatpush1.msra.mxu0 0.0
      %829 = vmatprep.subr.mxu0 0.0
      %830 = vmatpush1.msra.mxu0 0.0
      %831 = vmatprep.subr.mxu0 0.0
      %832 = vmatpush1.msra.mxu0 0.0
      %833 = vmatprep.subr.mxu0 0.0
      %834 = vmatpush1.msra.mxu0 0.0
      %835 = vmatprep.subr.mxu0 0.0
      %836 = vmatpush1.msra.mxu0 0.0
      %837 = vmatprep.subr.mxu0 0.0
      %838 = vmatpush1.msra.mxu0 0.0
      %839 = vmatprep.subr.mxu0 0.0
      %840 = vmatpush1.msra.mxu0 0.0
      %841 = vmatprep.subr.mxu0 0.0
      %842 = vmatpush1.msra.mxu0 0.0
      %843 = vmatprep.subr.mxu0 0.0
      %844 = vmatpush1.msra.mxu0 0.0
      %845 = vmatprep.subr.mxu0 0.0
      %846 = vmatpush1.msra.mxu0 0.0
      %847 = vmatprep.subr.mxu0 0.0
      %848 = vmatpush1.msra.mxu0 0.0
      %849 = vmatprep.subr.mxu0 0.0
      %850 = vmatpush1.msra.mxu0 0.0
      %851 = vmatprep.subr.mxu0 0.0
      %852 = vmatpush1.msra.mxu0 0.0
      %853 = vmatprep.subr.mxu0 0.0
      %854 = vmatpush1.msra.mxu0 0.0
      %855 = vmatprep.subr.mxu0 0.0
      %856 = vmatpush1.msra.mxu0 0.0
      %857 = vmatprep.subr.mxu0 0.0
      %858 = vmatpush1.msra.mxu0 0.0
      %859 = vmatprep.subr.mxu0 0.0
      %860 = vmatpush1.msra.mxu0 0.0
      %861 = vmatprep.subr.mxu0 0.0
      %862 = vmatpush1.msra.mxu0 0.0
      %863 = vmatprep.subr.mxu0 0.0
      %864 = vmatpush1.msra.mxu0 0.0
      %865 = vmatprep.subr.mxu0 0.0
      %866 = vmatpush1.msra.mxu0 0.0
      %867 = vmatprep.subr.mxu0 0.0
      %868 = vmatpush1.msra.mxu0 0.0
      %869 = vmatprep.subr.mxu0 0.0
      %870 = vmatpush1.msra.mxu0 0.0
      %871 = vmatprep.mubr.f32.mxu0 0.0
      %872 = vmatmul.mubr.f32.gmra.mrb[0].mxu0 %v760
      %v873 = vpop.f32.mrb[0].mxu0
      %v874 = vadd.f32 %v756, %v873
      %v875 = vpop.f32.mrb[0].mxu0
      %876 = vmatprep.mubr.f32.mxu0 0.0
      %877 = vmatmul.mubr.f32.gmra.mrb[0].mxu0 %v763
      %v878 = vpop.f32.mrb[0].mxu0
      %v879 = vadd.f32 %v756, %v878
      %v880 = vpop.f32.mrb[0].mxu0
      %881 = vmatprep.mubr.f32.mxu0 0.0
      %882 = vmatmul.mubr.f32.gmra.mrb[0].mxu0 %v766
      %v883 = vpop.f32.mrb[0].mxu0
      %v884 = vadd.f32 %v756, %v883
      %v885 = vpop.f32.mrb[0].mxu0
      %886 = vmatprep.mubr.f32.mxu0 0.0
      %887 = vmatmul.mubr.f32.gmra.mrb[0].mxu0 %v769
      %v888 = vpop.f32.mrb[0].mxu0
      %v889 = vadd.f32 %v756, %v888
      %v890 = vpop.f32.mrb[0].mxu0
      %891 = vmatprep.mubr.f32.mxu0 0.0
      %892 = vmatmul.mubr.f32.gmra.mrb[0].mxu0 %v772
      %v893 = vpop.f32.mrb[0].mxu0
      %v894 = vadd.f32 %v756, %v893
      %v895 = vpop.f32.mrb[0].mxu0
      %896 = vmatprep.mubr.f32.mxu0 0.0
      %897 = vmatmul.mubr.f32.gmra.mrb[0].mxu0 %v775
      %v898 = vpop.f32.mrb[0].mxu0
      %v899 = vadd.f32 %v756, %v898
      %v900 = vpop.f32.mrb[0].mxu0
      %901 = vmatprep.mubr.f32.mxu0 0.0
      %902 = vmatmul.mubr.f32.gmra.mrb[0].mxu0 %v778
      %v903 = vpop.f32.mrb[0].mxu0
      %v904 = vadd.f32 %v756, %v903
      %v905 = vpop.f32.mrb[0].mxu0
      %906 = vmatprep.mubr.f32.mxu0 0.0
      %907 = vmatmul.mubr.f32.gmra.mrb[0].mxu0 %v781
      %v908 = vpop.f32.mrb[0].mxu0
      %v909 = vadd.f32 %v756, %v908
      %v910 = vpop.f32.mrb[0].mxu0
      %911 = vmatprep.mubr.f32.mxu0 0.0
      %912 = vmatmul.mubr.f32.gmra.mrb[0].mxu0 %v784
      %v913 = vpop.f32.mrb[0].mxu0
      %v914 = vadd.f32 %v756, %v913
      %v915 = vpop.f32.mrb[0].mxu0
      %916 = vmatprep.mubr.f32.mxu0 0.0
      %917 = vmatmul.mubr.f32.gmra.mrb[0].mxu0 %v787
      %v918 = vpop.f32.mrb[0].mxu0
      %v919 = vadd.f32 %v756, %v918
      %v920 = vpop.f32.mrb[0].mxu0
      %921 = vmatprep.mubr.f32.mxu0 0.0
      %922 = vmatmul.mubr.f32.gmra.mrb[0].mxu0 %v790
      %v923 = vpop.f32.mrb[0].mxu0
      %v924 = vadd.f32 %v756, %v923
      %v925 = vpop.f32.mrb[0].mxu0
      %926 = vmatprep.mubr.f32.mxu0 0.0
      %927 = vmatmul.mubr.f32.gmra.mrb[0].mxu0 %v793
      %v928 = vpop.f32.mrb[0].mxu0
      %v929 = vadd.f32 %v756, %v928
      %v930 = vpop.f32.mrb[0].mxu0
      %931 = vmatprep.mubr.f32.mxu0 0.0
      %932 = vmatmul.mubr.f32.gmra.mrb[0].mxu0 %v796
      %v933 = vpop.f32.mrb[0].mxu0
      %v934 = vadd.f32 %v756, %v933
      %v935 = vpop.f32.mrb[0].mxu0
      %936 = vmatprep.mubr.f32.mxu0 0.0
      %937 = vmatmul.mubr.f32.gmra.mrb[0].mxu0 %v799
      %v938 = vpop.f32.mrb[0].mxu0
      %v939 = vadd.f32 %v756, %v938
      %v940 = vpop.f32.mrb[0].mxu0
      %941 = vmatprep.mubr.f32.mxu0 0.0
      %942 = vmatmul.mubr.f32.gmra.mrb[0].mxu0 %v802
      %v943 = vpop.f32.mrb[0].mxu0
      %v944 = vadd.f32 %v756, %v943
      %v945 = vpop.f32.mrb[0].mxu0
      %946 = vmatprep.mubr.f32.mxu0 0.0
      %947 = vmatmul.mubr.f32.gmra.mrb[0].mxu0 %v805
      %v948 = vpop.f32.mrb[0].mxu0
      %v949 = vadd.f32 %v756, %v948
      %v950 = vpop.f32.mrb[0].mxu0
      %951 = vdwg.mxu0
      %952 = vst.msk [vmem:[%s177] sm:$0xff] %vm695, %v874
      %953 = vst.msk [vmem:[%s177 + $0x8] sm:$0xff] %vm695, %v879
      %954 = vst.msk [vmem:[%s177 + $0x10] sm:$0xff] %vm695, %v884
      %955 = vst.msk [vmem:[%s177 + $0x18] sm:$0xff] %vm695, %v889
      %956 = vst.msk [vmem:[%s177 + $0x20] sm:$0xff] %vm695, %v894
      %957 = vst.msk [vmem:[%s177 + $0x28] sm:$0xff] %vm695, %v899
      %958 = vst.msk [vmem:[%s177 + $0x30] sm:$0xff] %vm695, %v904
      %959 = vst.msk [vmem:[%s177 + $0x38] sm:$0xff] %vm695, %v909
      %960 = vst.msk [vmem:[%s177 + $0x40] sm:$0xff] %vm695, %v914
      %961 = vst.msk [vmem:[%s177 + $0x48] sm:$0xff] %vm695, %v919
      %962 = vst.msk [vmem:[%s177 + $0x50] sm:$0xff] %vm695, %v924
      %963 = vst.msk [vmem:[%s177 + $0x58] sm:$0xff] %vm695, %v929
      %964 = vst.msk [vmem:[%s177 + $0x60] sm:$0xff] %vm695, %v934
      %965 = vst.msk [vmem:[%s177 + $0x68] sm:$0xff] %vm695, %v939
      %966 = vst.msk [vmem:[%s177 + $0x70] sm:$0xff] %vm695, %v944
      %967 = vst.msk [vmem:[%s177 + $0x78] sm:$0xff] %vm695, %v949
      %p968 = scmp.lt.s32.totalorder %s21, 1
      %s969 = scalar_select %p968, %s21, 1
      %s970 = smul.addr %s969, 16
      %s971 = smul.addr %s970, 8
      %s972 = scalar_lea.vmem %s4, %s971
      // Predicated region
      $region40: #{upconv_forward.4} parent=31 // pred_check
        %p973 = pneg %p107
      $region41: #{upconv_forward.4} parent=31 // pred_check_branch
        %975 = sbr.rel (%p973) target = $region43
      $region42: #{upconv_forward.4} parent=31 // pred_region
        _
      $region43: #{upconv_forward.4} parent=31 // pred_fallthru
        _
    $region32: #{upconv_forward.4} parent=5 // pred_fallthru
      _
    %p976 = scmp.le.s32.totalorder 2, %s16
    // Predicated region
    $region44: #{upconv_forward.4} parent=5 // pred_check
      %p977 = pneg %p976
    $region45: #{upconv_forward.4} parent=5 // pred_check_branch
      %979 = sbr.rel (%p977) target = $region47
    $region46: #{upconv_forward.4} parent=5 // pred_region
      %s980 = ssub.s32 %s16, 2
      // Predicated region
      $region48: #{upconv_forward.4} parent=46 // pred_check
        %p981 = pneg %p113
      $region49: #{upconv_forward.4} parent=46 // pred_check_branch
        %983 = sbr.rel (%p981) target = $region51
      $region50: #{upconv_forward.4} parent=46 // pred_region
        %p984 = scmp.lt.s32.totalorder %s22, 1
        %s985 = scalar_select %p984, %s22, 1
        %s986 = smul.addr %s985, 16
        %s987 = smul.addr %s986, 8
        %s988 = scalar_lea.vmem %s4, %s987
      $region51: #{upconv_forward.4} parent=46 // pred_fallthru
        _
    $region47: #{upconv_forward.4} parent=5 // pred_fallthru
      _
  $region6: #{upconv_forward.4} parent=0 // loop_footer
    %s20 = sadd.s32 1, %s16
  $region7: #{upconv_forward.4} parent=0 // loop_footer_branch
    %15 = sbr.rel target = $region3
  $region8: #{upconv_forward.4} parent=0 // loop_exit
    _

// kernel: upconv_forward.5
$region0: #{upconv_forward.5}
  #allocation0 [shape = 'u32[]', space=smem, size = 0x4, offset = 0x4, fixed_abs, tag = 'smem constant byte address 0x4 - core index']
  #allocation1 [shape = 'u32[144,128]{1,0:T(1,128)}', space=vmem, size = 0x12000, scoped, tag = 'internal scratch']
  #allocation2 [shape = 'f32[128,16]{1,0:T(8,128)}', space=vmem, size = 0x10000, scoped, tag = 'scratch operand']
  #allocation3 [shape = 'f32[128,16]{1,0:T(8,128)}', space=vmem, size = 0x10000, scoped, tag = 'scratch operand']
  #allocation4 [shape = 'f32[128,16]{1,0:T(8,128)}', space=vmem, size = 0x10000, scoped, tag = 'scratch operand']
  #allocation5 [shape = 'f32[128,16]{1,0:T(8,128)}', space=vmem, size = 0x10000, scoped, tag = 'scratch operand']
  #allocation6 [shape = 's32[1]{0}', space=sflag, size = 0x4, scoped, tag = 'scoped memory for upconv_forward.5']
  #allocation7 [shape = 'u8[4096]{0}', space=smem, size = 0x1000, scoped, tag = 'prefetched SMEM operand 0']
  %s0 = inlined_call_operand.vmem [shape: s32[2,512], index: 0, kind: input, shape index: {}]
  %s1 = inlined_call_operand.vmem [shape: f32[2,128,16], index: 1, kind: input, shape index: {}]
  %s2 = inlined_call_operand.vmem [shape: f32[2,128,16], index: 2, kind: input, shape index: {}]
  %s3 = inlined_call_operand.vmem [shape: f32[80,16], index: 3, kind: input, shape index: {}]
  %s4 = inlined_call_operand.vmem [shape: f32[80,16], index: 4, kind: input, shape index: {}]
  %s5 = inlined_call_operand.vmem [shape: f32[1,16], index: 5, kind: input, shape index: {}]
  %s6 = inlined_call_operand.vmem [shape: f32[2,128,16], index: 6, kind: output, shape index: {}]
  %s7 = sld [smem:[#allocation0]]
  $region67: #{upconv_forward.5} parent=0
    _
  %s9 = ssub.s32 1, %s7
  %s10 = scalar_select 0, %s9, %s7
  %s11 = sshll.u32 %s0, 4
  %s12 = int_to_ptr.vmem [resolvable:$true] %s11
  %14 = dma.vmem_to_smem %s12, 128, [#allocation7], [#allocation6]
  %15 = dma.done [#allocation6], 128
  %16 = sfence
  loop: start=0, step=1, limit=4
  $region2: #{upconv_forward.5} parent=0 // loop_pre_header
    _
  $region3: #{upconv_forward.5} parent=0 // loop_header
    %s18 = sphi 0, %s22
    %p19 = scmp.ge.s32.totalorder %s18, 4
    %s28 = sphi 0, %s30
    %s31 = sphi 0, %s28
    %s32 = sphi 0, %s31
    %s48 = sphi 0, %s32
    %s54 = sphi 0, %s56
    %s57 = sphi 0, %s54
    %s58 = sphi 0, %s57
    %s74 = sphi 0, %s58
    %s78 = sphi 0, %s78
    %s80 = sphi 0, %s78
    %s81 = sphi 0, %s80
    %s95 = sphi 0, %s81
    %s99 = sphi 0, %s99
    %s101 = sphi 0, %s99
    %s102 = sphi 0, %s101
    %s116 = sphi 0, %s102
    %s120 = sphi 0, %s120
    %s122 = sphi 0, %s120
    %s123 = sphi 0, %s122
    %s137 = sphi 0, %s123
    %s143 = sphi 0, %s145
    %s146 = sphi 0, %s143
    %s147 = sphi 0, %s146
    %s163 = sphi 0, %s147
  $region4: #{upconv_forward.5} parent=0 // loop_header_branch
    %21 = sbr.rel (%p19) target = $region8
  $region5: #{upconv_forward.5} parent=0 // loop_body
    %s23 = ssub.s32 %s18, 1
    %s24 = ssub.s32 %s18, 2
    %s25 = sadd.s32 %s18, 1
    %s26 = ssub.s32 %s18, %s25
    %p27 = scmp.eq.s32.totalorder %s26, 0
    %s29 = sadd.s32 %s28, 1
    %s30 = scalar_select %p27, %s28, %s29
    %p33 = pneg %p27
    %p34 = scmp.eq.s32.totalorder %s18, 1
    %p35 = por %p33, %p34
    %p36 = scmp.ne.s32.totalorder %s28, %s31
    %p37 = scmp.eq.s32.totalorder %s18, 0
    %p38 = por %p36, %p37
    %p39 = scmp.ne.s32.totalorder %s28, %s31
    %p40 = scmp.eq.s32.totalorder %s23, 1
    %p41 = por %p39, %p40
    %p42 = scmp.ne.s32.totalorder %s31, %s32
    %p43 = scmp.eq.s32.totalorder %s23, 0
    %p44 = por %p42, %p43
    %p45 = scmp.ne.s32.totalorder %s31, %s32
    %p46 = scmp.eq.s32.totalorder %s24, 1
    %p47 = por %p45, %p46
    %p49 = scmp.ne.s32.totalorder %s32, %s48
    %p50 = scmp.eq.s32.totalorder %s24, 0
    %p51 = por %p49, %p50
    %s52 = ssub.s32 %s18, %s25
    %p53 = scmp.eq.s32.totalorder %s52, 0
    %s55 = sadd.s32 %s54, 1
    %s56 = scalar_select %p53, %s54, %s55
    %p59 = pneg %p53
    %p60 = scmp.eq.s32.totalorder %s18, 1
    %p61 = por %p59, %p60
    %p62 = scmp.ne.s32.totalorder %s54, %s57
    %p63 = scmp.eq.s32.totalorder %s18, 0
    %p64 = por %p62, %p63
    %p65 = scmp.ne.s32.totalorder %s54, %s57
    %p66 = scmp.eq.s32.totalorder %s23, 1
    %p67 = por %p65, %p66
    %p68 = scmp.ne.s32.totalorder %s57, %s58
    %p69 = scmp.eq.s32.totalorder %s23, 0
    %p70 = por %p68, %p69
    %p71 = scmp.ne.s32.totalorder %s57, %s58
    %p72 = scmp.eq.s32.totalorder %s24, 1
    %p73 = por %p71, %p72
    %p75 = scmp.ne.s32.totalorder %s58, %s74
    %p76 = scmp.eq.s32.totalorder %s24, 0
    %p77 = por %p75, %p76
    %s79 = sadd.s32 %s78, 1
    %p82 = scmp.eq.s32.totalorder %s18, 1
    %p83 = scmp.ne.s32.totalorder %s78, %s80
    %p84 = scmp.eq.s32.totalorder %s18, 0
    %p85 = por %p83, %p84
    %p86 = scmp.ne.s32.totalorder %s78, %s80
    %p87 = scmp.eq.s32.totalorder %s23, 1
    %p88 = por %p86, %p87
    %p89 = scmp.ne.s32.totalorder %s80, %s81
    %p90 = scmp.eq.s32.totalorder %s23, 0
    %p91 = por %p89, %p90
    %p92 = scmp.ne.s32.totalorder %s80, %s81
    %p93 = scmp.eq.s32.totalorder %s24, 1
    %p94 = por %p92, %p93
    %p96 = scmp.ne.s32.totalorder %s81, %s95
    %p97 = scmp.eq.s32.totalorder %s24, 0
    %p98 = por %p96, %p97
    %s100 = sadd.s32 %s99, 1
    %p103 = scmp.eq.s32.totalorder %s18, 1
    %p104 = scmp.ne.s32.totalorder %s99, %s101
    %p105 = scmp.eq.s32.totalorder %s18, 0
    %p106 = por %p104, %p105
    %p107 = scmp.ne.s32.totalorder %s99, %s101
    %p108 = scmp.eq.s32.totalorder %s23, 1
    %p109 = por %p107, %p108
    %p110 = scmp.ne.s32.totalorder %s101, %s102
    %p111 = scmp.eq.s32.totalorder %s23, 0
    %p112 = por %p110, %p111
    %p113 = scmp.ne.s32.totalorder %s101, %s102
    %p114 = scmp.eq.s32.totalorder %s24, 1
    %p115 = por %p113, %p114
    %p117 = scmp.ne.s32.totalorder %s102, %s116
    %p118 = scmp.eq.s32.totalorder %s24, 0
    %p119 = por %p117, %p118
    %s121 = sadd.s32 %s120, 1
    %p124 = scmp.eq.s32.totalorder %s18, 1
    %p125 = scmp.ne.s32.totalorder %s120, %s122
    %p126 = scmp.eq.s32.totalorder %s18, 0
    %p127 = por %p125, %p126
    %p128 = scmp.ne.s32.totalorder %s120, %s122
    %p129 = scmp.eq.s32.totalorder %s23, 1
    %p130 = por %p128, %p129
    %p131 = scmp.ne.s32.totalorder %s122, %s123
    %p132 = scmp.eq.s32.totalorder %s23, 0
    %p133 = por %p131, %p132
    %p134 = scmp.ne.s32.totalorder %s122, %s123
    %p135 = scmp.eq.s32.totalorder %s24, 1
    %p136 = por %p134, %p135
    %p138 = scmp.ne.s32.totalorder %s123, %s137
    %p139 = scmp.eq.s32.totalorder %s24, 0
    %p140 = por %p138, %p139
    %s141 = ssub.s32 %s18, %s25
    %p142 = scmp.eq.s32.totalorder %s141, 0
    %s144 = sadd.s32 %s143, 1
    %s145 = scalar_select %p142, %s143, %s144
    %p148 = pneg %p142
    %p149 = scmp.eq.s32.totalorder %s18, 1
    %p150 = por %p148, %p149
    %p151 = scmp.ne.s32.totalorder %s143, %s146
    %p152 = scmp.eq.s32.totalorder %s18, 0
    %p153 = por %p151, %p152
    %p154 = scmp.ne.s32.totalorder %s143, %s146
    %p155 = scmp.eq.s32.totalorder %s23, 1
    %p156 = por %p154, %p155
    %p157 = scmp.ne.s32.totalorder %s146, %s147
    %p158 = scmp.eq.s32.totalorder %s23, 0
    %p159 = por %p157, %p158
    %p160 = scmp.ne.s32.totalorder %s146, %s147
    %p161 = scmp.eq.s32.totalorder %s24, 1
    %p162 = por %p160, %p161
    %p164 = scmp.ne.s32.totalorder %s147, %s163
    %p165 = scmp.eq.s32.totalorder %s24, 0
    %p166 = por %p164, %p165
    %p167 = scmp.le.s32.totalorder 1, %s18
    %p168 = scmp.lt.s32.totalorder %s18, 3
    %p169 = pnand %p167, %p168
    %p170 = pneg %p169
    // Predicated region
    $region9: #{upconv_forward.5} parent=5 // pred_check
      _
    $region10: #{upconv_forward.5} parent=5 // pred_check_branch
      %172 = sbr.rel (%p169) target = $region12
    $region11: #{upconv_forward.5} parent=5 // pred_region
      %s173 = ssub.s32 %s18, 1
      // Predicated region
      $region13: #{upconv_forward.5} parent=11 // pred_check
        %p174 = pneg %p91
      $region14: #{upconv_forward.5} parent=11 // pred_check_branch
        %176 = sbr.rel (%p174) target = $region16
      $region15: #{upconv_forward.5} parent=11 // pred_region
        _
      $region16: #{upconv_forward.5} parent=11 // pred_fallthru
        _
      // Predicated region
      $region17: #{upconv_forward.5} parent=11 // pred_check
        %p177 = pneg %p112
      $region18: #{upconv_forward.5} parent=11 // pred_check_branch
        %179 = sbr.rel (%p177) target = $region20
      $region19: #{upconv_forward.5} parent=11 // pred_region
        _
      $region20: #{upconv_forward.5} parent=11 // pred_fallthru
        _
      // Predicated region
      $region21: #{upconv_forward.5} parent=11 // pred_check
        %p180 = pneg %p133
      $region22: #{upconv_forward.5} parent=11 // pred_check_branch
        %182 = sbr.rel (%p180) target = $region24
      $region23: #{upconv_forward.5} parent=11 // pred_region
        _
      $region24: #{upconv_forward.5} parent=11 // pred_fallthru
        _
    $region12: #{upconv_forward.5} parent=5 // pred_fallthru
      _
    %p183 = scmp.lt.s32.totalorder %s18, 2
    // Predicated region
    $region25: #{upconv_forward.5} parent=5 // pred_check
      %p184 = pneg %p183
    $region26: #{upconv_forward.5} parent=5 // pred_check_branch
      %186 = sbr.rel (%p184) target = $region28
    $region27: #{upconv_forward.5} parent=5 // pred_region
      // Predicated region
      $region29: #{upconv_forward.5} parent=27 // pred_check
        %p187 = pneg %p38
      $region30: #{upconv_forward.5} parent=27 // pred_check_branch
        %189 = sbr.rel (%p187) target = $region32
      $region31: #{upconv_forward.5} parent=27 // pred_region
        %p190 = scmp.lt.s32.totalorder %s18, 1
        %s191 = scalar_select %p190, %s18, 1
        %s192 = smul.addr %s191, 16
        %s193 = smul.addr %s192, 8
        %s194 = scalar_lea.vmem %s1, %s193
      $region32: #{upconv_forward.5} parent=27 // pred_fallthru
        _
      // Predicated region
      $region33: #{upconv_forward.5} parent=27 // pred_check
        %p195 = pneg %p64
      $region34: #{upconv_forward.5} parent=27 // pred_check_branch
        %197 = sbr.rel (%p195) target = $region36
      $region35: #{upconv_forward.5} parent=27 // pred_region
        %p198 = scmp.lt.s32.totalorder %s18, 1
        %s199 = scalar_select %p198, %s18, 1
        %s200 = smul.addr %s199, 16
        %s201 = smul.addr %s200, 8
        %s202 = scalar_lea.vmem %s2, %s201
      $region36: #{upconv_forward.5} parent=27 // pred_fallthru
        _
    $region28: #{upconv_forward.5} parent=5 // pred_fallthru
      _
    %p203 = scmp.le.s32.totalorder 1, %s18
    %p204 = scmp.lt.s32.totalorder %s18, 3
    %p205 = pnand %p203, %p204
    %p206 = pneg %p205
    // Predicated region
    $region37: #{upconv_forward.5} parent=5 // pred_check
      _
    $region38: #{upconv_forward.5} parent=5 // pred_check_branch
      %208 = sbr.rel (%p205) target = $region40
    $region39: #{upconv_forward.5} parent=5 // pred_region
      %s209 = ssub.s32 %s18, 1
      %p210 = scmp.lt.s32.totalorder %s23, 1
      %s211 = scalar_select %p210, %s23, 1
      %s212 = smul.addr %s211, 16
      %s213 = smul.addr %s212, 8
      %s214 = scalar_lea.vmem %s1, %s213
      %p215 = pneg %p44
      %p216 = pneg %p41
      %p217 = scmp.lt.s32.totalorder %s23, 1
      %s218 = scalar_select %p217, %s23, 1
      %s219 = smul.addr %s218, 16
      %s220 = smul.addr %s219, 8
      %s221 = scalar_lea.vmem %s2, %s220
      %p222 = pneg %p70
      %p223 = pneg %p67
      %p224 = pneg %p91
      %p225 = pneg %p88
      %p226 = pneg %p112
      %p227 = pneg %p109
      %p228 = pneg %p133
      %p229 = pneg %p130
      %p230 = pneg %p159
      %p231 = pneg %p156
      %p232 = scmp.lt.s32.totalorder %s23, 1
      %s233 = scalar_select %p232, %s23, 1
      %s234 = smul.addr %s233, 16
      %s235 = smul.addr %s234, 8
      %s236 = scalar_lea.vmem %s6, %s235
      %p237 = scmp.lt.s32.totalorder %s23, 1
      %s238 = scalar_select %p237, %s23, 1
      %s239 = smul.addr %s238, 16
      %s240 = smul.addr %s239, 8
      %s241 = scalar_lea.vmem %s1, %s240
      %p242 = scmp.lt.s32.totalorder %s23, 1
      %s243 = scalar_select %p242, %s23, 1
      %s244 = smul.addr %s243, 16
      %s245 = smul.addr %s244, 8
      %s246 = scalar_lea.vmem %s2, %s245
      %p247 = scmp.lt.s32.totalorder %s23, 1
      %s248 = scalar_select %p247, %s23, 1
      %s249 = smul.addr %s248, 16
      %s250 = smul.addr %s249, 8
      %s251 = scalar_lea.vmem %s6, %s250
      loop: start=0, step=1, limit=128
      $region41: #{upconv_forward.5} parent=39 // loop_pre_header
        _
      $region42: #{upconv_forward.5} parent=39 // loop_header
        %s253 = sphi 0, %s257
        %p254 = scmp.ge.s32.totalorder %s253, 128
      $region43: #{upconv_forward.5} parent=39 // loop_header_branch
        %256 = sbr.rel (%p254) target = $region47
      $region44: #{upconv_forward.5} parent=39 // loop_body
        %s258 = sshra.s32 %s253, 7
        %s259 = sand.u32 %s253, 127
        %s260 = sshra.s32 %s23, 1
        %s261 = sand.u32 %s23, 1
        %s262 = smul.u32 %s260, 4
        %s263 = sadd.s32 %s258, %s262
        %s264 = smul.u32 %s263, 256
        %s265 = sshra.s32 %s23, 1
        %s266 = sand.u32 %s23, 1
        %s267 = sshra.s32 %s253, 7
        %s268 = sand.u32 %s253, 127
        %s269 = smul.u32 %s266, 128
        %s270 = sadd.s32 %s269, %s268
        %s271 = sadd.s32 %s264, %s270
        %s272 = sld [smem:[#allocation7 + %s271]]
        %s273 = sadd.s32 %s253, 128
        %s274 = sshra.s32 %s273, 7
        %s275 = sand.u32 %s273, 127
        %s276 = sadd.s32 %s274, %s262
        %s277 = smul.u32 %s276, 256
        %s278 = sshra.s32 %s273, 7
        %s279 = sand.u32 %s273, 127
        %s280 = sadd.s32 %s269, %s279
        %s281 = sadd.s32 %s277, %s280
        %s282 = sld [smem:[#allocation7 + %s281]]
        %s283 = sadd.s32 %s253, 256
        %s284 = sshra.s32 %s283, 7
        %s285 = sand.u32 %s283, 127
        %s286 = sadd.s32 %s284, %s262
        %s287 = smul.u32 %s286, 256
        %s288 = sshra.s32 %s283, 7
        %s289 = sand.u32 %s283, 127
        %s290 = sadd.s32 %s269, %s289
        %s291 = sadd.s32 %s287, %s290
        %s292 = sld [smem:[#allocation7 + %s291]]
        %s293 = sadd.s32 %s253, 384
        %s294 = sshra.s32 %s293, 7
        %s295 = sand.u32 %s293, 127
        %s296 = sadd.s32 %s294, %s262
        %s297 = smul.u32 %s296, 256
        %s298 = sshra.s32 %s293, 7
        %s299 = sand.u32 %s293, 127
        %s300 = sadd.s32 %s269, %s299
        %s301 = sadd.s32 %s297, %s300
        %s302 = sld [smem:[#allocation7 + %s301]]
        %s303 = scalar_lea.vmem %s241, %s272
        %v304 = vld [vmem:[%s303] sm:$0x1]
        %s305 = scalar_lea.vmem [#allocation2], %s253
        %vm306 = vcmask 122880
        %307 = vst.msk [vmem:[%s305] sm:$0x1] %vm306, %v304
        %s308 = scalar_lea.vmem %s241, %s282
        %v309 = vld [vmem:[%s308] sm:$0x1]
        %s310 = scalar_lea.vmem [#allocation3], %s253
        %311 = vst.msk [vmem:[%s310] sm:$0x1] %vm306, %v309
        %s312 = scalar_lea.vmem %s241, %s292
        %v313 = vld [vmem:[%s312] sm:$0x1]
        %s314 = scalar_lea.vmem [#allocation4], %s253
        %315 = vst.msk [vmem:[%s314] sm:$0x1] %vm306, %v313
        %s316 = scalar_lea.vmem %s241, %s302
        %v317 = vld [vmem:[%s316] sm:$0x1]
        %s318 = scalar_lea.vmem [#allocation5], %s253
        %319 = vst.msk [vmem:[%s318] sm:$0x1] %vm306, %v317
      $region45: #{upconv_forward.5} parent=39 // loop_footer
        %s257 = sadd.s32 1, %s253
      $region46: #{upconv_forward.5} parent=39 // loop_footer_branch
        %252 = sbr.rel target = $region42
      $region47: #{upconv_forward.5} parent=39 // loop_exit
        _
      %v320 = vld [vmem:[%s241] sm:$0xff]
      %v321 = vld [vmem:[%s241 + $0x8] sm:$0xff]
      %v322 = vld [vmem:[%s241 + $0x10] sm:$0xff]
      %v323 = vld [vmem:[%s241 + $0x18] sm:$0xff]
      %v324 = vld [vmem:[%s241 + $0x20] sm:$0xff]
      %v325 = vld [vmem:[%s241 + $0x28] sm:$0xff]
      %v326 = vld [vmem:[%s241 + $0x30] sm:$0xff]
      %v327 = vld [vmem:[%s241 + $0x38] sm:$0xff]
      %v328 = vld [vmem:[%s241 + $0x40] sm:$0xff]
      %v329 = vld [vmem:[%s241 + $0x48] sm:$0xff]
      %v330 = vld [vmem:[%s241 + $0x50] sm:$0xff]
      %v331 = vld [vmem:[%s241 + $0x58] sm:$0xff]
      %v332 = vld [vmem:[%s241 + $0x60] sm:$0xff]
      %v333 = vld [vmem:[%s241 + $0x68] sm:$0xff]
      %v334 = vld [vmem:[%s241 + $0x70] sm:$0xff]
      %v335 = vld [vmem:[%s241 + $0x78] sm:$0xff]
      %v336 = vld [vmem:[#allocation2] sm:$0xff]
      %v337 = vld [vmem:[#allocation2 + $0x8] sm:$0xff]
      %v338 = vld [vmem:[#allocation2 + $0x10] sm:$0xff]
      %v339 = vld [vmem:[#allocation2 + $0x18] sm:$0xff]
      %v340 = vld [vmem:[#allocation2 + $0x20] sm:$0xff]
      %v341 = vld [vmem:[#allocation2 + $0x28] sm:$0xff]
      %v342 = vld [vmem:[#allocation2 + $0x30] sm:$0xff]
      %v343 = vld [vmem:[#allocation2 + $0x38] sm:$0xff]
      %v344 = vld [vmem:[#allocation2 + $0x40] sm:$0xff]
      %v345 = vld [vmem:[#allocation2 + $0x48] sm:$0xff]
      %v346 = vld [vmem:[#allocation2 + $0x50] sm:$0xff]
      %v347 = vld [vmem:[#allocation2 + $0x58] sm:$0xff]
      %v348 = vld [vmem:[#allocation2 + $0x60] sm:$0xff]
      %v349 = vld [vmem:[#allocation2 + $0x68] sm:$0xff]
      %v350 = vld [vmem:[#allocation2 + $0x70] sm:$0xff]
      %v351 = vld [vmem:[#allocation2 + $0x78] sm:$0xff]
      %v352 = vld [vmem:[#allocation3] sm:$0xff]
      %v353 = vld [vmem:[#allocation3 + $0x8] sm:$0xff]
      %v354 = vld [vmem:[#allocation3 + $0x10] sm:$0xff]
      %v355 = vld [vmem:[#allocation3 + $0x18] sm:$0xff]
      %v356 = vld [vmem:[#allocation3 + $0x20] sm:$0xff]
      %v357 = vld [vmem:[#allocation3 + $0x28] sm:$0xff]
      %v358 = vld [vmem:[#allocation3 + $0x30] sm:$0xff]
      %v359 = vld [vmem:[#allocation3 + $0x38] sm:$0xff]
      %v360 = vld [vmem:[#allocation3 + $0x40] sm:$0xff]
      %v361 = vld [vmem:[#allocation3 + $0x48] sm:$0xff]
      %v362 = vld [vmem:[#allocation3 + $0x50] sm:$0xff]
      %v363 = vld [vmem:[#allocation3 + $0x58] sm:$0xff]
      %v364 = vld [vmem:[#allocation3 + $0x60] sm:$0xff]
      %v365 = vld [vmem:[#allocation3 + $0x68] sm:$0xff]
      %v366 = vld [vmem:[#allocation3 + $0x70] sm:$0xff]
      %v367 = vld [vmem:[#allocation3 + $0x78] sm:$0xff]
      %v368 = vld [vmem:[#allocation4] sm:$0xff]
      %v369 = vld [vmem:[#allocation4 + $0x8] sm:$0xff]
      %v370 = vld [vmem:[#allocation4 + $0x10] sm:$0xff]
      %v371 = vld [vmem:[#allocation4 + $0x18] sm:$0xff]
      %v372 = vld [vmem:[#allocation4 + $0x20] sm:$0xff]
      %v373 = vld [vmem:[#allocation4 + $0x28] sm:$0xff]
      %v374 = vld [vmem:[#allocation4 + $0x30] sm:$0xff]
      %v375 = vld [vmem:[#allocation4 + $0x38] sm:$0xff]
      %v376 = vld [vmem:[#allocation4 + $0x40] sm:$0xff]
      %v377 = vld [vmem:[#allocation4 + $0x48] sm:$0xff]
      %v378 = vld [vmem:[#allocation4 + $0x50] sm:$0xff]
      %v379 = vld [vmem:[#allocation4 + $0x58] sm:$0xff]
      %v380 = vld [vmem:[#allocation4 + $0x60] sm:$0xff]
      %v381 = vld [vmem:[#allocation4 + $0x68] sm:$0xff]
      %v382 = vld [vmem:[#allocation4 + $0x70] sm:$0xff]
      %v383 = vld [vmem:[#allocation4 + $0x78] sm:$0xff]
      %v384 = vld [vmem:[#allocation5] sm:$0xff]
      %v385 = vld [vmem:[#allocation5 + $0x8] sm:$0xff]
      %v386 = vld [vmem:[#allocation5 + $0x10] sm:$0xff]
      %v387 = vld [vmem:[#allocation5 + $0x18] sm:$0xff]
      %v388 = vld [vmem:[#allocation5 + $0x20] sm:$0xff]
      %v389 = vld [vmem:[#allocation5 + $0x28] sm:$0xff]
      %v390 = vld [vmem:[#allocation5 + $0x30] sm:$0xff]
      %v391 = vld [vmem:[#allocation5 + $0x38] sm:$0xff]
      %v392 = vld [vmem:[#allocation5 + $0x40] sm:$0xff]
      %v393 = vld [vmem:[#allocation5 + $0x48] sm:$0xff]
      %v394 = vld [vmem:[#allocation5 + $0x50] sm:$0xff]
      %v395 = vld [vmem:[#allocation5 + $0x58] sm:$0xff]
      %v396 = vld [vmem:[#allocation5 + $0x60] sm:$0xff]
      %v397 = vld [vmem:[#allocation5 + $0x68] sm:$0xff]
      %v398 = vld [vmem:[#allocation5 + $0x70] sm:$0xff]
      %v399 = vld [vmem:[#allocation5 + $0x78] sm:$0xff]
      %v400 = vsub.f32 %v336, %v368
      %v401 = vsub.f32 %v337, %v369
      %v402 = vsub.f32 %v338, %v370
      %v403 = vsub.f32 %v339, %v371
      %v404 = vsub.f32 %v340, %v372
      %v405 = vsub.f32 %v341, %v373
      %v406 = vsub.f32 %v342, %v374
      %v407 = vsub.f32 %v343, %v375
      %v408 = vsub.f32 %v344, %v376
      %v409 = vsub.f32 %v345, %v377
      %v410 = vsub.f32 %v346, %v378
      %v411 = vsub.f32 %v347, %v379
      %v412 = vsub.f32 %v348, %v380
      %v413 = vsub.f32 %v349, %v381
      %v414 = vsub.f32 %v350, %v382
      %v415 = vsub.f32 %v351, %v383
      %v416 = vand.u32 2147483647, %v400
      %v417 = vand.u32 2147483647, %v401
      %v418 = vand.u32 2147483647, %v402
      %v419 = vand.u32 2147483647, %v403
      %v420 = vand.u32 2147483647, %v404
      %v421 = vand.u32 2147483647, %v405
      %v422 = vand.u32 2147483647, %v406
      %v423 = vand.u32 2147483647, %v407
      %v424 = vand.u32 2147483647, %v408
      %v425 = vand.u32 2147483647, %v409
      %v426 = vand.u32 2147483647, %v410
      %v427 = vand.u32 2147483647, %v411
      %v428 = vand.u32 2147483647, %v412
      %v429 = vand.u32 2147483647, %v413
      %v430 = vand.u32 2147483647, %v414
      %v431 = vand.u32 2147483647, %v415
      %v432 = vadd.f32 %v336, %v368
      %v433 = vadd.f32 %v337, %v369
      %v434 = vadd.f32 %v338, %v370
      %v435 = vadd.f32 %v339, %v371
      %v436 = vadd.f32 %v340, %v372
      %v437 = vadd.f32 %v341, %v373
      %v438 = vadd.f32 %v342, %v374
      %v439 = vadd.f32 %v343, %v375
      %v440 = vadd.f32 %v344, %v376
      %v441 = vadd.f32 %v345, %v377
      %v442 = vadd.f32 %v346, %v378
      %v443 = vadd.f32 %v347, %v379
      %v444 = vadd.f32 %v348, %v380
      %v445 = vadd.f32 %v349, %v381
      %v446 = vadd.f32 %v350, %v382
      %v447 = vadd.f32 %v351, %v383
      %v448 = vsub.f32 %v352, %v384
      %v449 = vsub.f32 %v353, %v385
      %v450 = vsub.f32 %v354, %v386
      %v451 = vsub.f32 %v355, %v387
      %v452 = vsub.f32 %v356, %v388
      %v453 = vsub.f32 %v357, %v389
      %v454 = vsub.f32 %v358, %v390
      %v455 = vsub.f32 %v359, %v391
      %v456 = vsub.f32 %v360, %v392
      %v457 = vsub.f32 %v361, %v393
      %v458 = vsub.f32 %v362, %v394
      %v459 = vsub.f32 %v363, %v395
      %v460 = vsub.f32 %v364, %v396
      %v461 = vsub.f32 %v365, %v397
      %v462 = vsub.f32 %v366, %v398
      %v463 = vsub.f32 %v367, %v399
      %v464 = vand.u32 2147483647, %v448
      %v465 = vand.u32 2147483647, %v449
      %v466 = vand.u32 2147483647, %v450
      %v467 = vand.u32 2147483647, %v451
      %v468 = vand.u32 2147483647, %v452
      %v469 = vand.u32 2147483647, %v453
      %v470 = vand.u32 2147483647, %v454
      %v471 = vand.u32 2147483647, %v455
      %v472 = vand.u32 2147483647, %v456
      %v473 = vand.u32 2147483647, %v457
      %v474 = vand.u32 2147483647, %v458
      %v475 = vand.u32 2147483647, %v459
      %v476 = vand.u32 2147483647, %v460
      %v477 = vand.u32 2147483647, %v461
      %v478 = vand.u32 2147483647, %v462
      %v479 = vand.u32 2147483647, %v463
      %v480 = vadd.f32 %v352, %v384
      %v481 = vadd.f32 %v353, %v385
      %v482 = vadd.f32 %v354, %v386
      %v483 = vadd.f32 %v355, %v387
      %v484 = vadd.f32 %v356, %v388
      %v485 = vadd.f32 %v357, %v389
      %v486 = vadd.f32 %v358, %v390
      %v487 = vadd.f32 %v359, %v391
      %v488 = vadd.f32 %v360, %v392
      %v489 = vadd.f32 %v361, %v393
      %v490 = vadd.f32 %v362, %v394
      %v491 = vadd.f32 %v363, %v395
      %v492 = vadd.f32 %v364, %v396
      %v493 = vadd.f32 %v365, %v397
      %v494 = vadd.f32 %v366, %v398
      %v495 = vadd.f32 %v367, %v399
      %512 = vrot.lane.b32.xlu0 %v416, 16
      %v513 = vpop.permute.xlu0 %512
      %514 = vrot.lane.b32.xlu0 %v417, 16
      %v515 = vpop.permute.xlu0 %514
      %516 = vrot.lane.b32.xlu0 %v418, 16
      %v517 = vpop.permute.xlu0 %516
      %518 = vrot.lane.b32.xlu0 %v419, 16
      %v519 = vpop.permute.xlu0 %518
      %520 = vrot.lane.b32.xlu0 %v420, 16
      %v521 = vpop.permute.xlu0 %520
      %522 = vrot.lane.b32.xlu0 %v421, 16
      %v523 = vpop.permute.xlu0 %522
      %524 = vrot.lane.b32.xlu0 %v422, 16
      %v525 = vpop.permute.xlu0 %524
      %526 = vrot.lane.b32.xlu0 %v423, 16
      %v527 = vpop.permute.xlu0 %526
      %528 = vrot.lane.b32.xlu0 %v424, 16
      %v529 = vpop.permute.xlu0 %528
      %530 = vrot.lane.b32.xlu0 %v425, 16
      %v531 = vpop.permute.xlu0 %530
      %532 = vrot.lane.b32.xlu0 %v426, 16
      %v533 = vpop.permute.xlu0 %532
      %534 = vrot.lane.b32.xlu0 %v427, 16
      %v535 = vpop.permute.xlu0 %534
      %536 = vrot.lane.b32.xlu0 %v428, 16
      %v537 = vpop.permute.xlu0 %536
      %538 = vrot.lane.b32.xlu0 %v429, 16
      %v539 = vpop.permute.xlu0 %538
      %540 = vrot.lane.b32.xlu0 %v430, 16
      %v541 = vpop.permute.xlu0 %540
      %542 = vrot.lane.b32.xlu0 %v431, 16
      %v543 = vpop.permute.xlu0 %542
      %576 = vrot.lane.b32.xlu0 %v432, 32
      %v577 = vpop.permute.xlu0 %576
      %578 = vrot.lane.b32.xlu0 %v433, 32
      %v579 = vpop.permute.xlu0 %578
      %580 = vrot.lane.b32.xlu0 %v434, 32
      %v581 = vpop.permute.xlu0 %580
      %582 = vrot.lane.b32.xlu0 %v435, 32
      %v583 = vpop.permute.xlu0 %582
      %584 = vrot.lane.b32.xlu0 %v436, 32
      %v585 = vpop.permute.xlu0 %584
      %586 = vrot.lane.b32.xlu0 %v437, 32
      %v587 = vpop.permute.xlu0 %586
      %588 = vrot.lane.b32.xlu0 %v438, 32
      %v589 = vpop.permute.xlu0 %588
      %590 = vrot.lane.b32.xlu0 %v439, 32
      %v591 = vpop.permute.xlu0 %590
      %592 = vrot.lane.b32.xlu0 %v440, 32
      %v593 = vpop.permute.xlu0 %592
      %594 = vrot.lane.b32.xlu0 %v441, 32
      %v595 = vpop.permute.xlu0 %594
      %596 = vrot.lane.b32.xlu0 %v442, 32
      %v597 = vpop.permute.xlu0 %596
      %598 = vrot.lane.b32.xlu0 %v443, 32
      %v599 = vpop.permute.xlu0 %598
      %600 = vrot.lane.b32.xlu0 %v444, 32
      %v601 = vpop.permute.xlu0 %600
      %602 = vrot.lane.b32.xlu0 %v445, 32
      %v603 = vpop.permute.xlu0 %602
      %604 = vrot.lane.b32.xlu0 %v446, 32
      %v605 = vpop.permute.xlu0 %604
      %606 = vrot.lane.b32.xlu0 %v447, 32
      %v607 = vpop.permute.xlu0 %606
      %640 = vrot.lane.b32.xlu0 %v464, 48
      %v641 = vpop.permute.xlu0 %640
      %642 = vrot.lane.b32.xlu0 %v465, 48
      %v643 = vpop.permute.xlu0 %642
      %644 = vrot.lane.b32.xlu0 %v466, 48
      %v645 = vpop.permute.xlu0 %644
      %646 = vrot.lane.b32.xlu0 %v467, 48
      %v647 = vpop.permute.xlu0 %646
      %648 = vrot.lane.b32.xlu0 %v468, 48
      %v649 = vpop.permute.xlu0 %648
      %650 = vrot.lane.b32.xlu0 %v469, 48
      %v651 = vpop.permute.xlu0 %650
      %652 = vrot.lane.b32.xlu0 %v470, 48
      %v653 = vpop.permute.xlu0 %652
      %654 = vrot.lane.b32.xlu0 %v471, 48
      %v655 = vpop.permute.xlu0 %654
      %656 = vrot.lane.b32.xlu0 %v472, 48
      %v657 = vpop.permute.xlu0 %656
      %658 = vrot.lane.b32.xlu0 %v473, 48
      %v659 = vpop.permute.xlu0 %658
      %660 = vrot.lane.b32.xlu0 %v474, 48
      %v661 = vpop.permute.xlu0 %660
      %662 = vrot.lane.b32.xlu0 %v475, 48
      %v663 = vpop.permute.xlu0 %662
      %664 = vrot.lane.b32.xlu0 %v476, 48
      %v665 = vpop.permute.xlu0 %664
      %666 = vrot.lane.b32.xlu0 %v477, 48
      %v667 = vpop.permute.xlu0 %666
      %668 = vrot.lane.b32.xlu0 %v478, 48
      %v669 = vpop.permute.xlu0 %668
      %670 = vrot.lane.b32.xlu0 %v479, 48
      %v671 = vpop.permute.xlu0 %670
      %704 = vrot.lane.b32.xlu0 %v480, 64
      %v705 = vpop.permute.xlu0 %704
      %706 = vrot.lane.b32.xlu0 %v481, 64
      %v707 = vpop.permute.xlu0 %706
      %708 = vrot.lane.b32.xlu0 %v482, 64
      %v709 = vpop.permute.xlu0 %708
      %710 = vrot.lane.b32.xlu0 %v483, 64
      %v711 = vpop.permute.xlu0 %710
      %712 = vrot.lane.b32.xlu0 %v484, 64
      %v713 = vpop.permute.xlu0 %712
      %714 = vrot.lane.b32.xlu0 %v485, 64
      %v715 = vpop.permute.xlu0 %714
      %716 = vrot.lane.b32.xlu0 %v486, 64
      %v717 = vpop.permute.xlu0 %716
      %718 = vrot.lane.b32.xlu0 %v487, 64
      %v719 = vpop.permute.xlu0 %718
      %720 = vrot.lane.b32.xlu0 %v488, 64
      %v721 = vpop.permute.xlu0 %720
      %722 = vrot.lane.b32.xlu0 %v489, 64
      %v723 = vpop.permute.xlu0 %722
      %724 = vrot.lane.b32.xlu0 %v490, 64
      %v725 = vpop.permute.xlu0 %724
      %726 = vrot.lane.b32.xlu0 %v491, 64
      %v727 = vpop.permute.xlu0 %726
      %728 = vrot.lane.b32.xlu0 %v492, 64
      %v729 = vpop.permute.xlu0 %728
      %730 = vrot.lane.b32.xlu0 %v493, 64
      %v731 = vpop.permute.xlu0 %730
      %732 = vrot.lane.b32.xlu0 %v494, 64
      %v733 = vpop.permute.xlu0 %732
      %734 = vrot.lane.b32.xlu0 %v495, 64
      %v735 = vpop.permute.xlu0 %734
      %vm752 = vcmask 130048
      %v753 = vsel %vm752, %v320, %v513
      %v754 = vsel %vm752, %v321, %v515
      %v755 = vsel %vm752, %v322, %v517
      %v756 = vsel %vm752, %v323, %v519
      %v757 = vsel %vm752, %v324, %v521
      %v758 = vsel %vm752, %v325, %v523
      %v759 = vsel %vm752, %v326, %v525
      %v760 = vsel %vm752, %v327, %v527
      %v761 = vsel %vm752, %v328, %v529
      %v762 = vsel %vm752, %v329, %v531
      %v763 = vsel %vm752, %v330, %v533
      %v764 = vsel %vm752, %v331, %v535
      %v765 = vsel %vm752, %v332, %v537
      %v766 = vsel %vm752, %v333, %v539
      %v767 = vsel %vm752, %v334, %v541
      %v768 = vsel %vm752, %v335, %v543
      %vm769 = vcmask 261120
      %v770 = vsel %vm769, %v753, %v577
      %v771 = vsel %vm769, %v754, %v579
      %v772 = vsel %vm769, %v755, %v581
      %v773 = vsel %vm769, %v756, %v583
      %v774 = vsel %vm769, %v757, %v585
      %v775 = vsel %vm769, %v758, %v587
      %v776 = vsel %vm769, %v759, %v589
      %v777 = vsel %vm769, %v760, %v591
      %v778 = vsel %vm769, %v761, %v593
      %v779 = vsel %vm769, %v762, %v595
      %v780 = vsel %vm769, %v763, %v597
      %v781 = vsel %vm769, %v764, %v599
      %v782 = vsel %vm769, %v765, %v601
      %v783 = vsel %vm769, %v766, %v603
      %v784 = vsel %vm769, %v767, %v605
      %v785 = vsel %vm769, %v768, %v607
      %vm786 = vcmask 392192
      %v787 = vsel %vm786, %v770, %v641
      %v788 = vsel %vm786, %v771, %v643
      %v789 = vsel %vm786, %v772, %v645
      %v790 = vsel %vm786, %v773, %v647
      %v791 = vsel %vm786, %v774, %v649
      %v792 = vsel %vm786, %v775, %v651
      %v793 = vsel %vm786, %v776, %v653
      %v794 = vsel %vm786, %v777, %v655
      %v795 = vsel %vm786, %v778, %v657
      %v796 = vsel %vm786, %v779, %v659
      %v797 = vsel %vm786, %v780, %v661
      %v798 = vsel %vm786, %v781, %v663
      %v799 = vsel %vm786, %v782, %v665
      %v800 = vsel %vm786, %v783, %v667
      %v801 = vsel %vm786, %v784, %v669
      %v802 = vsel %vm786, %v785, %v671
      %vm803 = vcmask 523264
      %v804 = vsel %vm803, %v787, %v705
      %v805 = vsel %vm803, %v788, %v707
      %v806 = vsel %vm803, %v789, %v709
      %v807 = vsel %vm803, %v790, %v711
      %v808 = vsel %vm803, %v791, %v713
      %v809 = vsel %vm803, %v792, %v715
      %v810 = vsel %vm803, %v793, %v717
      %v811 = vsel %vm803, %v794, %v719
      %v812 = vsel %vm803, %v795, %v721
      %v813 = vsel %vm803, %v796, %v723
      %v814 = vsel %vm803, %v797, %v725
      %v815 = vsel %vm803, %v798, %v727
      %v816 = vsel %vm803, %v799, %v729
      %v817 = vsel %vm803, %v800, %v731
      %v818 = vsel %vm803, %v801, %v733
      %v819 = vsel %vm803, %v802, %v735
      %v820 = vld [vmem:[%s3] sm:$0xff]
      %v821 = vld [vmem:[%s3 + $0x8] sm:$0xff]
      %v822 = vld [vmem:[%s3 + $0x10] sm:$0xff]
      %v823 = vld [vmem:[%s3 + $0x18] sm:$0xff]
      %v824 = vld [vmem:[%s3 + $0x20] sm:$0xff]
      %v825 = vld [vmem:[%s3 + $0x28] sm:$0xff]
      %v826 = vld [vmem:[%s3 + $0x30] sm:$0xff]
      %v827 = vld [vmem:[%s3 + $0x38] sm:$0xff]
      %v828 = vld [vmem:[%s3 + $0x40] sm:$0xff]
      %v829 = vld [vmem:[%s3 + $0x48] sm:$0xff]
      loop: start=0, step=1, limit=128
      $region48: #{upconv_forward.5} parent=39 // loop_pre_header
        _
      $region49: #{upconv_forward.5} parent=39 // loop_header
        %s831 = sphi 0, %s835
        %p832 = scmp.ge.s32.totalorder %s831, 128
      $region50: #{upconv_forward.5} parent=39 // loop_header_branch
        %834 = sbr.rel (%p832) target = $region54
      $region51: #{upconv_forward.5} parent=39 // loop_body
        %s836 = sshra.s32 %s831, 7
        %s837 = sand.u32 %s831, 127
        %s838 = sshra.s32 %s23, 1
        %s839 = sand.u32 %s23, 1
        %s840 = smul.u32 %s838, 4
        %s841 = sadd.s32 %s836, %s840
        %s842 = smul.u32 %s841, 256
        %s843 = sshra.s32 %s23, 1
        %s844 = sand.u32 %s23, 1
        %s845 = sshra.s32 %s831, 7
        %s846 = sand.u32 %s831, 127
        %s847 = smul.u32 %s844, 128
        %s848 = sadd.s32 %s847, %s846
        %s849 = sadd.s32 %s842, %s848
        %s850 = sld [smem:[#allocation7 + %s849]]
        %s851 = sadd.s32 %s831, 128
        %s852 = sshra.s32 %s851, 7
        %s853 = sand.u32 %s851, 127
        %s854 = sadd.s32 %s852, %s840
        %s855 = smul.u32 %s854, 256
        %s856 = sshra.s32 %s851, 7
        %s857 = sand.u32 %s851, 127
        %s858 = sadd.s32 %s847, %s857
        %s859 = sadd.s32 %s855, %s858
        %s860 = sld [smem:[#allocation7 + %s859]]
        %s861 = sadd.s32 %s831, 256
        %s862 = sshra.s32 %s861, 7
        %s863 = sand.u32 %s861, 127
        %s864 = sadd.s32 %s862, %s840
        %s865 = smul.u32 %s864, 256
        %s866 = sshra.s32 %s861, 7
        %s867 = sand.u32 %s861, 127
        %s868 = sadd.s32 %s847, %s867
        %s869 = sadd.s32 %s865, %s868
        %s870 = sld [smem:[#allocation7 + %s869]]
        %s871 = sadd.s32 %s831, 384
        %s872 = sshra.s32 %s871, 7
        %s873 = sand.u32 %s871, 127
        %s874 = sadd.s32 %s872, %s840
        %s875 = smul.u32 %s874, 256
        %s876 = sshra.s32 %s871, 7
        %s877 = sand.u32 %s871, 127
        %s878 = sadd.s32 %s847, %s877
        %s879 = sadd.s32 %s875, %s878
        %s880 = sld [smem:[#allocation7 + %s879]]
        %s881 = scalar_lea.vmem %s246, %s850
        %v882 = vld [vmem:[%s881] sm:$0x1]
        %s883 = scalar_lea.vmem [#allocation2], %s831
        %vm884 = vcmask 122880
        %885 = vst.msk [vmem:[%s883] sm:$0x1] %vm884, %v882
        %s886 = scalar_lea.vmem %s246, %s860
        %v887 = vld [vmem:[%s886] sm:$0x1]
        %s888 = scalar_lea.vmem [#allocation3], %s831
        %889 = vst.msk [vmem:[%s888] sm:$0x1] %vm884, %v887
        %s890 = scalar_lea.vmem %s246, %s870
        %v891 = vld [vmem:[%s890] sm:$0x1]
        %s892 = scalar_lea.vmem [#allocation4], %s831
        %893 = vst.msk [vmem:[%s892] sm:$0x1] %vm884, %v891
        %s894 = scalar_lea.vmem %s246, %s880
        %v895 = vld [vmem:[%s894] sm:$0x1]
        %s896 = scalar_lea.vmem [#allocation5], %s831
        %897 = vst.msk [vmem:[%s896] sm:$0x1] %vm884, %v895
      $region52: #{upconv_forward.5} parent=39 // loop_footer
        %s835 = sadd.s32 1, %s831
      $region53: #{upconv_forward.5} parent=39 // loop_footer_branch
        %830 = sbr.rel target = $region49
      $region54: #{upconv_forward.5} parent=39 // loop_exit
        _
      %v898 = vld [vmem:[%s246] sm:$0xff]
      %v899 = vld [vmem:[%s246 + $0x8] sm:$0xff]
      %v900 = vld [vmem:[%s246 + $0x10] sm:$0xff]
      %v901 = vld [vmem:[%s246 + $0x18] sm:$0xff]
      %v902 = vld [vmem:[%s246 + $0x20] sm:$0xff]
      %v903 = vld [vmem:[%s246 + $0x28] sm:$0xff]
      %v904 = vld [vmem:[%s246 + $0x30] sm:$0xff]
      %v905 = vld [vmem:[%s246 + $0x38] sm:$0xff]
      %v906 = vld [vmem:[%s246 + $0x40] sm:$0xff]
      %v907 = vld [vmem:[%s246 + $0x48] sm:$0xff]
      %v908 = vld [vmem:[%s246 + $0x50] sm:$0xff]
      %v909 = vld [vmem:[%s246 + $0x58] sm:$0xff]
      %v910 = vld [vmem:[%s246 + $0x60] sm:$0xff]
      %v911 = vld [vmem:[%s246 + $0x68] sm:$0xff]
      %v912 = vld [vmem:[%s246 + $0x70] sm:$0xff]
      %v913 = vld [vmem:[%s246 + $0x78] sm:$0xff]
      %v914 = vld [vmem:[#allocation2] sm:$0xff]
      %v915 = vld [vmem:[#allocation2 + $0x8] sm:$0xff]
      %v916 = vld [vmem:[#allocation2 + $0x10] sm:$0xff]
      %v917 = vld [vmem:[#allocation2 + $0x18] sm:$0xff]
      %v918 = vld [vmem:[#allocation2 + $0x20] sm:$0xff]
      %v919 = vld [vmem:[#allocation2 + $0x28] sm:$0xff]
      %v920 = vld [vmem:[#allocation2 + $0x30] sm:$0xff]
      %v921 = vld [vmem:[#allocation2 + $0x38] sm:$0xff]
      %v922 = vld [vmem:[#allocation2 + $0x40] sm:$0xff]
      %v923 = vld [vmem:[#allocation2 + $0x48] sm:$0xff]
      %v924 = vld [vmem:[#allocation2 + $0x50] sm:$0xff]
      %v925 = vld [vmem:[#allocation2 + $0x58] sm:$0xff]
      %v926 = vld [vmem:[#allocation2 + $0x60] sm:$0xff]
      %v927 = vld [vmem:[#allocation2 + $0x68] sm:$0xff]
      %v928 = vld [vmem:[#allocation2 + $0x70] sm:$0xff]
      %v929 = vld [vmem:[#allocation2 + $0x78] sm:$0xff]
      %v930 = vld [vmem:[#allocation3] sm:$0xff]
      %v931 = vld [vmem:[#allocation3 + $0x8] sm:$0xff]
      %v932 = vld [vmem:[#allocation3 + $0x10] sm:$0xff]
      %v933 = vld [vmem:[#allocation3 + $0x18] sm:$0xff]
      %v934 = vld [vmem:[#allocation3 + $0x20] sm:$0xff]
      %v935 = vld [vmem:[#allocation3 + $0x28] sm:$0xff]
      %v936 = vld [vmem:[#allocation3 + $0x30] sm:$0xff]
      %v937 = vld [vmem:[#allocation3 + $0x38] sm:$0xff]
      %v938 = vld [vmem:[#allocation3 + $0x40] sm:$0xff]
      %v939 = vld [vmem:[#allocation3 + $0x48] sm:$0xff]
      %v940 = vld [vmem:[#allocation3 + $0x50] sm:$0xff]
      %v941 = vld [vmem:[#allocation3 + $0x58] sm:$0xff]
      %v942 = vld [vmem:[#allocation3 + $0x60] sm:$0xff]
      %v943 = vld [vmem:[#allocation3 + $0x68] sm:$0xff]
      %v944 = vld [vmem:[#allocation3 + $0x70] sm:$0xff]
      %v945 = vld [vmem:[#allocation3 + $0x78] sm:$0xff]
      %v946 = vld [vmem:[#allocation4] sm:$0xff]
      %v947 = vld [vmem:[#allocation4 + $0x8] sm:$0xff]
      %v948 = vld [vmem:[#allocation4 + $0x10] sm:$0xff]
      %v949 = vld [vmem:[#allocation4 + $0x18] sm:$0xff]
      %v950 = vld [vmem:[#allocation4 + $0x20] sm:$0xff]
      %v951 = vld [vmem:[#allocation4 + $0x28] sm:$0xff]
      %v952 = vld [vmem:[#allocation4 + $0x30] sm:$0xff]
      %v953 = vld [vmem:[#allocation4 + $0x38] sm:$0xff]
      %v954 = vld [vmem:[#allocation4 + $0x40] sm:$0xff]
      %v955 = vld [vmem:[#allocation4 + $0x48] sm:$0xff]
      %v956 = vld [vmem:[#allocation4 + $0x50] sm:$0xff]
      %v957 = vld [vmem:[#allocation4 + $0x58] sm:$0xff]
      %v958 = vld [vmem:[#allocation4 + $0x60] sm:$0xff]
      %v959 = vld [vmem:[#allocation4 + $0x68] sm:$0xff]
      %v960 = vld [vmem:[#allocation4 + $0x70] sm:$0xff]
      %v961 = vld [vmem:[#allocation4 + $0x78] sm:$0xff]
      %v962 = vld [vmem:[#allocation5] sm:$0xff]
      %v963 = vld [vmem:[#allocation5 + $0x8] sm:$0xff]
      %v964 = vld [vmem:[#allocation5 + $0x10] sm:$0xff]
      %v965 = vld [vmem:[#allocation5 + $0x18] sm:$0xff]
      %v966 = vld [vmem:[#allocation5 + $0x20] sm:$0xff]
      %v967 = vld [vmem:[#allocation5 + $0x28] sm:$0xff]
      %v968 = vld [vmem:[#allocation5 + $0x30] sm:$0xff]
      %v969 = vld [vmem:[#allocation5 + $0x38] sm:$0xff]
      %v970 = vld [vmem:[#allocation5 + $0x40] sm:$0xff]
      %v971 = vld [vmem:[#allocation5 + $0x48] sm:$0xff]
      %v972 = vld [vmem:[#allocation5 + $0x50] sm:$0xff]
      %v973 = vld [vmem:[#allocation5 + $0x58] sm:$0xff]
      %v974 = vld [vmem:[#allocation5 + $0x60] sm:$0xff]
      %v975 = vld [vmem:[#allocation5 + $0x68] sm:$0xff]
      %v976 = vld [vmem:[#allocation5 + $0x70] sm:$0xff]
      %v977 = vld [vmem:[#allocation5 + $0x78] sm:$0xff]
      %v978 = vsub.f32 %v914, %v946
      %v979 = vsub.f32 %v915, %v947
      %v980 = vsub.f32 %v916, %v948
      %v981 = vsub.f32 %v917, %v949
      %v982 = vsub.f32 %v918, %v950
      %v983 = vsub.f32 %v919, %v951
      %v984 = vsub.f32 %v920, %v952
      %v985 = vsub.f32 %v921, %v953
      %v986 = vsub.f32 %v922, %v954
      %v987 = vsub.f32 %v923, %v955
      %v988 = vsub.f32 %v924, %v956
      %v989 = vsub.f32 %v925, %v957
      %v990 = vsub.f32 %v926, %v958
      %v991 = vsub.f32 %v927, %v959
      %v992 = vsub.f32 %v928, %v960
      %v993 = vsub.f32 %v929, %v961
      %v994 = vand.u32 2147483647, %v978
      %v995 = vand.u32 2147483647, %v979
      %v996 = vand.u32 2147483647, %v980
      %v997 = vand.u32 2147483647, %v981
      %v998 = vand.u32 2147483647, %v982
      %v999 = vand.u32 2147483647, %v983
      %v1000 = vand.u32 2147483647, %v984
      %v1001 = vand.u32 2147483647, %v985
      %v1002 = vand.u32 2147483647, %v986
      %v1003 = vand.u32 2147483647, %v987
      %v1004 = vand.u32 2147483647, %v988
      %v1005 = vand.u32 2147483647, %v989
      %v1006 = vand.u32 2147483647, %v990
      %v1007 = vand.u32 2147483647, %v991
      %v1008 = vand.u32 2147483647, %v992
      %v1009 = vand.u32 2147483647, %v993
      %v1010 = vadd.f32 %v914, %v946
      %v1011 = vadd.f32 %v915, %v947
      %v1012 = vadd.f32 %v916, %v948
      %v1013 = vadd.f32 %v917, %v949
      %v1014 = vadd.f32 %v918, %v950
      %v1015 = vadd.f32 %v919, %v951
      %v1016 = vadd.f32 %v920, %v952
      %v1017 = vadd.f32 %v921, %v953
      %v1018 = vadd.f32 %v922, %v954
      %v1019 = vadd.f32 %v923, %v955
      %v1020 = vadd.f32 %v924, %v956
      %v1021 = vadd.f32 %v925, %v957
      %v1022 = vadd.f32 %v926, %v958
      %v1023 = vadd.f32 %v927, %v959
      %v1024 = vadd.f32 %v928, %v960
      %v1025 = vadd.f32 %v929, %v961
      %v1026 = vsub.f32 %v930, %v962
      %v1027 = vsub.f32 %v931, %v963
      %v1028 = vsub.f32 %v932, %v964
      %v1029 = vsub.f32 %v933, %v965
      %v1030 = vsub.f32 %v934, %v966
      %v1031 = vsub.f32 %v935, %v967
      %v1032 = vsub.f32 %v936, %v968
      %v1033 = vsub.f32 %v937, %v969
      %v1034 = vsub.f32 %v938, %v970
      %v1035 = vsub.f32 %v939, %v971
      %v1036 = vsub.f32 %v940, %v972
      %v1037 = vsub.f32 %v941, %v973
      %v1038 = vsub.f32 %v942, %v974
      %v1039 = vsub.f32 %v943, %v975
      %v1040 = vsub.f32 %v944, %v976
      %v1041 = vsub.f32 %v945, %v977
      %v1042 = vand.u32 2147483647, %v1026
      %v1043 = vand.u32 2147483647, %v1027
      %v1044 = vand.u32 2147483647, %v1028
      %v1045 = vand.u32 2147483647, %v1029
      %v1046 = vand.u32 2147483647, %v1030
      %v1047 = vand.u32 2147483647, %v1031
      %v1048 = vand.u32 2147483647, %v1032
      %v1049 = vand.u32 2147483647, %v1033
      %v1050 = vand.u32 2147483647, %v1034
      %v1051 = vand.u32 2147483647, %v1035
      %v1052 = vand.u32 2147483647, %v1036
      %v1053 = vand.u32 2147483647, %v1037
      %v1054 = vand.u32 2147483647, %v1038
      %v1055 = vand.u32 2147483647, %v1039
      %v1056 = vand.u32 2147483647, %v1040
      %v1057 = vand.u32 2147483647, %v1041
      %v1058 = vadd.f32 %v930, %v962
      %v1059 = vadd.f32 %v931, %v963
      %v1060 = vadd.f32 %v932, %v964
      %v1061 = vadd.f32 %v933, %v965
      %v1062 = vadd.f32 %v934, %v966
      %v1063 = vadd.f32 %v935, %v967
      %v1064 = vadd.f32 %v936, %v968
      %v1065 = vadd.f32 %v937, %v969
      %v1066 = vadd.f32 %v938, %v970
      %v1067 = vadd.f32 %v939, %v971
      %v1068 = vadd.f32 %v940, %v972
      %v1069 = vadd.f32 %v941, %v973
      %v1070 = vadd.f32 %v942, %v974
      %v1071 = vadd.f32 %v943, %v975
      %v1072 = vadd.f32 %v944, %v976
      %v1073 = vadd.f32 %v945, %v977
      %1090 = vrot.lane.b32.xlu0 %v994, 16
      %v1091 = vpop.permute.xlu0 %1090
      %1092 = vrot.lane.b32.xlu0 %v995, 16
      %v1093 = vpop.permute.xlu0 %1092
      %1094 = vrot.lane.b32.xlu0 %v996, 16
      %v1095 = vpop.permute.xlu0 %1094
      %1096 = vrot.lane.b32.xlu0 %v997, 16
      %v1097 = vpop.permute.xlu0 %1096
      %1098 = vrot.lane.b32.xlu0 %v998, 16
      %v1099 = vpop.permute.xlu0 %1098
      %1100 = vrot.lane.b32.xlu0 %v999, 16
      %v1101 = vpop.permute.xlu0 %1100
      %1102 = vrot.lane.b32.xlu0 %v1000, 16
      %v1103 = vpop.permute.xlu0 %1102
      %1104 = vrot.lane.b32.xlu0 %v1001, 16
      %v1105 = vpop.permute.xlu0 %1104
      %1106 = vrot.lane.b32.xlu0 %v1002, 16
      %v1107 = vpop.permute.xlu0 %1106
      %1108 = vrot.lane.b32.xlu0 %v1003, 16
      %v1109 = vpop.permute.xlu0 %1108
      %1110 = vrot.lane.b32.xlu0 %v1004, 16
      %v1111 = vpop.permute.xlu0 %1110
      %1112 = vrot.lane.b32.xlu0 %v1005, 16
      %v1113 = vpop.permute.xlu0 %1112
      %1114 = vrot.lane.b32.xlu0 %v1006, 16
      %v1115 = vpop.permute.xlu0 %1114
      %1116 = vrot.lane.b32.xlu0 %v1007, 16
      %v1117 = vpop.permute.xlu0 %1116
      %1118 = vrot.lane.b32.xlu0 %v1008, 16
      %v1119 = vpop.permute.xlu0 %1118
      %1120 = vrot.lane.b32.xlu0 %v1009, 16
      %v1121 = vpop.permute.xlu0 %1120
      %1154 = vrot.lane.b32.xlu0 %v1010, 32
      %v1155 = vpop.permute.xlu0 %1154
      %1156 = vrot.lane.b32.xlu0 %v1011, 32
      %v1157 = vpop.permute.xlu0 %1156
      %1158 = vrot.lane.b32.xlu0 %v1012, 32
      %v1159 = vpop.permute.xlu0 %1158
      %1160 = vrot.lane.b32.xlu0 %v1013, 32
      %v1161 = vpop.permute.xlu0 %1160
      %1162 = vrot.lane.b32.xlu0 %v1014, 32
      %v1163 = vpop.permute.xlu0 %1162
      %1164 = vrot.lane.b32.xlu0 %v1015, 32
      %v1165 = vpop.permute.xlu0 %1164
      %1166 = vrot.lane.b32.xlu0 %v1016, 32
      %v1167 = vpop.permute.xlu0 %1166
      %1168 = vrot.lane.b32.xlu0 %v1017, 32
      %v1169 = vpop.permute.xlu0 %1168
      %1170 = vrot.lane.b32.xlu0 %v1018, 32
      %v1171 = vpop.permute.xlu0 %1170
      %1172 = vrot.lane.b32.xlu0 %v1019, 32
      %v1173 = vpop.permute.xlu0 %1172
      %1174 = vrot.lane.b32.xlu0 %v1020, 32
      %v1175 = vpop.permute.xlu0 %1174
      %1176 = vrot.lane.b32.xlu0 %v1021, 32
      %v1177 = vpop.permute.xlu0 %1176
      %1178 = vrot.lane.b32.xlu0 %v1022, 32
      %v1179 = vpop.permute.xlu0 %1178
      %1180 = vrot.lane.b32.xlu0 %v1023, 32
      %v1181 = vpop.permute.xlu0 %1180
      %1182 = vrot.lane.b32.xlu0 %v1024, 32
      %v1183 = vpop.permute.xlu0 %1182
      %1184 = vrot.lane.b32.xlu0 %v1025, 32
      %v1185 = vpop.permute.xlu0 %1184
      %1218 = vrot.lane.b32.xlu0 %v1042, 48
      %v1219 = vpop.permute.xlu0 %1218
      %1220 = vrot.lane.b32.xlu0 %v1043, 48
      %v1221 = vpop.permute.xlu0 %1220
      %1222 = vrot.lane.b32.xlu0 %v1044, 48
      %v1223 = vpop.permute.xlu0 %1222
      %1224 = vrot.lane.b32.xlu0 %v1045, 48
      %v1225 = vpop.permute.xlu0 %1224
      %1226 = vrot.lane.b32.xlu0 %v1046, 48
      %v1227 = vpop.permute.xlu0 %1226
      %1228 = vrot.lane.b32.xlu0 %v1047, 48
      %v1229 = vpop.permute.xlu0 %1228
      %1230 = vrot.lane.b32.xlu0 %v1048, 48
      %v1231 = vpop.permute.xlu0 %1230
      %1232 = vrot.lane.b32.xlu0 %v1049, 48
      %v1233 = vpop.permute.xlu0 %1232
      %1234 = vrot.lane.b32.xlu0 %v1050, 48
      %v1235 = vpop.permute.xlu0 %1234
      %1236 = vrot.lane.b32.xlu0 %v1051, 48
      %v1237 = vpop.permute.xlu0 %1236
      %1238 = vrot.lane.b32.xlu0 %v1052, 48
      %v1239 = vpop.permute.xlu0 %1238
      %1240 = vrot.lane.b32.xlu0 %v1053, 48
      %v1241 = vpop.permute.xlu0 %1240
      %1242 = vrot.lane.b32.xlu0 %v1054, 48
      %v1243 = vpop.permute.xlu0 %1242
      %1244 = vrot.lane.b32.xlu0 %v1055, 48
      %v1245 = vpop.permute.xlu0 %1244
      %1246 = vrot.lane.b32.xlu0 %v1056, 48
      %v1247 = vpop.permute.xlu0 %1246
      %1248 = vrot.lane.b32.xlu0 %v1057, 48
      %v1249 = vpop.permute.xlu0 %1248
      %1282 = vrot.lane.b32.xlu0 %v1058, 64
      %v1283 = vpop.permute.xlu0 %1282
      %1284 = vrot.lane.b32.xlu0 %v1059, 64
      %v1285 = vpop.permute.xlu0 %1284
      %1286 = vrot.lane.b32.xlu0 %v1060, 64
      %v1287 = vpop.permute.xlu0 %1286
      %1288 = vrot.lane.b32.xlu0 %v1061, 64
      %v1289 = vpop.permute.xlu0 %1288
      %1290 = vrot.lane.b32.xlu0 %v1062, 64
      %v1291 = vpop.permute.xlu0 %1290
      %1292 = vrot.lane.b32.xlu0 %v1063, 64
      %v1293 = vpop.permute.xlu0 %1292
      %1294 = vrot.lane.b32.xlu0 %v1064, 64
      %v1295 = vpop.permute.xlu0 %1294
      %1296 = vrot.lane.b32.xlu0 %v1065, 64
      %v1297 = vpop.permute.xlu0 %1296
      %1298 = vrot.lane.b32.xlu0 %v1066, 64
      %v1299 = vpop.permute.xlu0 %1298
      %1300 = vrot.lane.b32.xlu0 %v1067, 64
      %v1301 = vpop.permute.xlu0 %1300
      %1302 = vrot.lane.b32.xlu0 %v1068, 64
      %v1303 = vpop.permute.xlu0 %1302
      %1304 = vrot.lane.b32.xlu0 %v1069, 64
      %v1305 = vpop.permute.xlu0 %1304
      %1306 = vrot.lane.b32.xlu0 %v1070, 64
      %v1307 = vpop.permute.xlu0 %1306
      %1308 = vrot.lane.b32.xlu0 %v1071, 64
      %v1309 = vpop.permute.xlu0 %1308
      %1310 = vrot.lane.b32.xlu0 %v1072, 64
      %v1311 = vpop.permute.xlu0 %1310
      %1312 = vrot.lane.b32.xlu0 %v1073, 64
      %v1313 = vpop.permute.xlu0 %1312
      %v1330 = vsel %vm752, %v898, %v1091
      %v1331 = vsel %vm752, %v899, %v1093
      %v1332 = vsel %vm752, %v900, %v1095
      %v1333 = vsel %vm752, %v901, %v1097
      %v1334 = vsel %vm752, %v902, %v1099
      %v1335 = vsel %vm752, %v903, %v1101
      %v1336 = vsel %vm752, %v904, %v1103
      %v1337 = vsel %vm752, %v905, %v1105
      %v1338 = vsel %vm752, %v906, %v1107
      %v1339 = vsel %vm752, %v907, %v1109
      %v1340 = vsel %vm752, %v908, %v1111
      %v1341 = vsel %vm752, %v909, %v1113
      %v1342 = vsel %vm752, %v910, %v1115
      %v1343 = vsel %vm752, %v911, %v1117
      %v1344 = vsel %vm752, %v912, %v1119
      %v1345 = vsel %vm752, %v913, %v1121
      %v1346 = vsel %vm769, %v1330, %v1155
      %v1347 = vsel %vm769, %v1331, %v1157
      %v1348 = vsel %vm769, %v1332, %v1159
      %v1349 = vsel %vm769, %v1333, %v1161
      %v1350 = vsel %vm769, %v1334, %v1163
      %v1351 = vsel %vm769, %v1335, %v1165
      %v1352 = vsel %vm769, %v1336, %v1167
      %v1353 = vsel %vm769, %v1337, %v1169
      %v1354 = vsel %vm769, %v1338, %v1171
      %v1355 = vsel %vm769, %v1339, %v1173
      %v1356 = vsel %vm769, %v1340, %v1175
      %v1357 = vsel %vm769, %v1341, %v1177
      %v1358 = vsel %vm769, %v1342, %v1179
      %v1359 = vsel %vm769, %v1343, %v1181
      %v1360 = vsel %vm769, %v1344, %v1183
      %v1361 = vsel %vm769, %v1345, %v1185
      %v1362 = vsel %vm786, %v1346, %v1219
      %v1363 = vsel %vm786, %v1347, %v1221
      %v1364 = vsel %vm786, %v1348, %v1223
      %v1365 = vsel %vm786, %v1349, %v1225
      %v1366 = vsel %vm786, %v1350, %v1227
      %v1367 = vsel %vm786, %v1351, %v1229
      %v1368 = vsel %vm786, %v1352, %v1231
      %v1369 = vsel %vm786, %v1353, %v1233
      %v1370 = vsel %vm786, %v1354, %v1235
      %v1371 = vsel %vm786, %v1355, %v1237
      %v1372 = vsel %vm786, %v1356, %v1239
      %v1373 = vsel %vm786, %v1357, %v1241
      %v1374 = vsel %vm786, %v1358, %v1243
      %v1375 = vsel %vm786, %v1359, %v1245
      %v1376 = vsel %vm786, %v1360, %v1247
      %v1377 = vsel %vm786, %v1361, %v1249
      %v1378 = vsel %vm803, %v1362, %v1283
      %v1379 = vsel %vm803, %v1363, %v1285
      %v1380 = vsel %vm803, %v1364, %v1287
      %v1381 = vsel %vm803, %v1365, %v1289
      %v1382 = vsel %vm803, %v1366, %v1291
      %v1383 = vsel %vm803, %v1367, %v1293
      %v1384 = vsel %vm803, %v1368, %v1295
      %v1385 = vsel %vm803, %v1369, %v1297
      %v1386 = vsel %vm803, %v1370, %v1299
      %v1387 = vsel %vm803, %v1371, %v1301
      %v1388 = vsel %vm803, %v1372, %v1303
      %v1389 = vsel %vm803, %v1373, %v1305
      %v1390 = vsel %vm803, %v1374, %v1307
      %v1391 = vsel %vm803, %v1375, %v1309
      %v1392 = vsel %vm803, %v1376, %v1311
      %v1393 = vsel %vm803, %v1377, %v1313
      %v1394 = vld [vmem:[%s4] sm:$0xff]
      %v1395 = vld [vmem:[%s4 + $0x8] sm:$0xff]
      %v1396 = vld [vmem:[%s4 + $0x10] sm:$0xff]
      %v1397 = vld [vmem:[%s4 + $0x18] sm:$0xff]
      %v1398 = vld [vmem:[%s4 + $0x20] sm:$0xff]
      %v1399 = vld [vmem:[%s4 + $0x28] sm:$0xff]
      %v1400 = vld [vmem:[%s4 + $0x30] sm:$0xff]
      %v1401 = vld [vmem:[%s4 + $0x38] sm:$0xff]
      %v1402 = vld [vmem:[%s4 + $0x40] sm:$0xff]
      %v1403 = vld [vmem:[%s4 + $0x48] sm:$0xff]
      %vm1404 = vcmask 654336
      %v1406 = vsel %vm1404, %v1378, 0
      %v1409 = vsel %vm1404, %v1379, 0
      %v1412 = vsel %vm1404, %v1380, 0
      %v1415 = vsel %vm1404, %v1381, 0
      %v1418 = vsel %vm1404, %v1382, 0
      %v1421 = vsel %vm1404, %v1383, 0
      %v1424 = vsel %vm1404, %v1384, 0
      %v1427 = vsel %vm1404, %v1385, 0
      %v1430 = vsel %vm1404, %v1386, 0
      %v1433 = vsel %vm1404, %v1387, 0
      %v1436 = vsel %vm1404, %v1388, 0
      %v1439 = vsel %vm1404, %v1389, 0
      %v1442 = vsel %vm1404, %v1390, 0
      %v1445 = vsel %vm1404, %v1391, 0
      %v1448 = vsel %vm1404, %v1392, 0
      %v1451 = vsel %vm1404, %v1393, 0
      %1453 = vmatprep.subr.mxu0 0.0
      %1454 = vmatpush1.msra.mxu0 %v1394
      %1455 = vmatprep.subr.mxu0 0.0
      %1456 = vmatpush1.msra.mxu0 %v1395
      %1457 = vmatprep.subr.mxu0 0.0
      %1458 = vmatpush1.msra.mxu0 %v1396
      %1459 = vmatprep.subr.mxu0 0.0
      %1460 = vmatpush1.msra.mxu0 %v1397
      %1461 = vmatprep.subr.mxu0 0.0
      %1462 = vmatpush1.msra.mxu0 %v1398
      %1463 = vmatprep.subr.mxu0 0.0
      %1464 = vmatpush1.msra.mxu0 %v1399
      %1465 = vmatprep.subr.mxu0 0.0
      %1466 = vmatpush1.msra.mxu0 %v1400
      %1467 = vmatprep.subr.mxu0 0.0
      %1468 = vmatpush1.msra.mxu0 %v1401
      %1469 = vmatprep.subr.mxu0 0.0
      %1470 = vmatpush1.msra.mxu0 %v1402
      %1471 = vmatprep.subr.mxu0 0.0
      %1472 = vmatpush1.msra.mxu0 %v1403
      %1473 = vmatprep.subr.mxu0 0.0
      %1474 = vmatpush1.msra.mxu0 0.0
      %1475 = vmatprep.subr.mxu0 0.0
      %1476 = vmatpush1.msra.mxu0 0.0
      %1477 = vmatprep.subr.mxu0 0.0
      %1478 = vmatpush1.msra.mxu0 0.0
      %1479 = vmatprep.subr.mxu0 0.0
      %1480 = vmatpush1.msra.mxu0 0.0
      %1481 = vmatprep.subr.mxu0 0.0
      %1482 = vmatpush1.msra.mxu0 0.0
      %1483 = vmatprep.subr.mxu0 0.0
      %1484 = vmatpush1.msra.mxu0 0.0
      %1485 = vmatprep.subr.mxu0 0.0
      %1486 = vmatpush1.msra.mxu0 0.0
      %1487 = vmatprep.subr.mxu0 0.0
      %1488 = vmatpush1.msra.mxu0 0.0
      %1489 = vmatprep.subr.mxu0 0.0
      %1490 = vmatpush1.msra.mxu0 0.0
      %1491 = vmatprep.subr.mxu0 0.0
      %1492 = vmatpush1.msra.mxu0 0.0
      %1493 = vmatprep.subr.mxu0 0.0
      %1494 = vmatpush1.msra.mxu0 0.0
      %1495 = vmatprep.subr.mxu0 0.0
      %1496 = vmatpush1.msra.mxu0 0.0
      %1497 = vmatprep.subr.mxu0 0.0
      %1498 = vmatpush1.msra.mxu0 0.0
      %1499 = vmatprep.subr.mxu0 0.0
      %1500 = vmatpush1.msra.mxu0 0.0
      %1501 = vmatprep.subr.mxu0 0.0
      %1502 = vmatpush1.msra.mxu0 0.0
      %1503 = vmatprep.subr.mxu0 0.0
      %1504 = vmatpush1.msra.mxu0 0.0
      %1505 = vmatprep.subr.mxu0 0.0
      %1506 = vmatpush1.msra.mxu0 0.0
      %1507 = vmatprep.subr.mxu0 0.0
      %1508 = vmatpush1.msra.mxu0 0.0
      %1509 = vmatprep.subr.mxu0 0.0
      %1510 = vmatpush1.msra.mxu0 0.0
      %1511 = vmatprep.subr.mxu0 0.0
      %1512 = vmatpush1.msra.mxu0 0.0
      %1513 = vmatprep.subr.mxu0 0.0
      %1514 = vmatpush1.msra.mxu0 0.0
      %1515 = vmatprep.subr.mxu0 0.0
      %1516 = vmatpush1.msra.mxu0 0.0
      %1517 = vmatprep.mubr.f32.mxu0 0.0
      %1518 = vmatmul.mubr.f32.gmra.mrb[0].mxu0 %v1406
      %v1519 = vpop.f32.mrb[0].mxu0
      %v1520 = vadd.f32 0.0, %v1519
      %v1521 = vpop.f32.mrb[0].mxu0
      %1522 = vmatprep.mubr.f32.mxu0 0.0
      %1523 = vmatmul.mubr.f32.gmra.mrb[0].mxu0 %v1409
      %v1524 = vpop.f32.mrb[0].mxu0
      %v1525 = vadd.f32 0.0, %v1524
      %v1526 = vpop.f32.mrb[0].mxu0
      %1527 = vmatprep.mubr.f32.mxu0 0.0
      %1528 = vmatmul.mubr.f32.gmra.mrb[0].mxu0 %v1412
      %v1529 = vpop.f32.mrb[0].mxu0
      %v1530 = vadd.f32 0.0, %v1529
      %v1531 = vpop.f32.mrb[0].mxu0
      %1532 = vmatprep.mubr.f32.mxu0 0.0
      %1533 = vmatmul.mubr.f32.gmra.mrb[0].mxu0 %v1415
      %v1534 = vpop.f32.mrb[0].mxu0
      %v1535 = vadd.f32 0.0, %v1534
      %v1536 = vpop.f32.mrb[0].mxu0
      %1537 = vmatprep.mubr.f32.mxu0 0.0
      %1538 = vmatmul.mubr.f32.gmra.mrb[0].mxu0 %v1418
      %v1539 = vpop.f32.mrb[0].mxu0
      %v1540 = vadd.f32 0.0, %v1539
      %v1541 = vpop.f32.mrb[0].mxu0
      %1542 = vmatprep.mubr.f32.mxu0 0.0
      %1543 = vmatmul.mubr.f32.gmra.mrb[0].mxu0 %v1421
      %v1544 = vpop.f32.mrb[0].mxu0
      %v1545 = vadd.f32 0.0, %v1544
      %v1546 = vpop.f32.mrb[0].mxu0
      %1547 = vmatprep.mubr.f32.mxu0 0.0
      %1548 = vmatmul.mubr.f32.gmra.mrb[0].mxu0 %v1424
      %v1549 = vpop.f32.mrb[0].mxu0
      %v1550 = vadd.f32 0.0, %v1549
      %v1551 = vpop.f32.mrb[0].mxu0
      %1552 = vmatprep.mubr.f32.mxu0 0.0
      %1553 = vmatmul.mubr.f32.gmra.mrb[0].mxu0 %v1427
      %v1554 = vpop.f32.mrb[0].mxu0
      %v1555 = vadd.f32 0.0, %v1554
      %v1556 = vpop.f32.mrb[0].mxu0
      %1557 = vmatprep.mubr.f32.mxu0 0.0
      %1558 = vmatmul.mubr.f32.gmra.mrb[0].mxu0 %v1430
      %v1559 = vpop.f32.mrb[0].mxu0
      %v1560 = vadd.f32 0.0, %v1559
      %v1561 = vpop.f32.mrb[0].mxu0
      %1562 = vmatprep.mubr.f32.mxu0 0.0
      %1563 = vmatmul.mubr.f32.gmra.mrb[0].mxu0 %v1433
      %v1564 = vpop.f32.mrb[0].mxu0
      %v1565 = vadd.f32 0.0, %v1564
      %v1566 = vpop.f32.mrb[0].mxu0
      %1567 = vmatprep.mubr.f32.mxu0 0.0
      %1568 = vmatmul.mubr.f32.gmra.mrb[0].mxu0 %v1436
      %v1569 = vpop.f32.mrb[0].mxu0
      %v1570 = vadd.f32 0.0, %v1569
      %v1571 = vpop.f32.mrb[0].mxu0
      %1572 = vmatprep.mubr.f32.mxu0 0.0
      %1573 = vmatmul.mubr.f32.gmra.mrb[0].mxu0 %v1439
      %v1574 = vpop.f32.mrb[0].mxu0
      %v1575 = vadd.f32 0.0, %v1574
      %v1576 = vpop.f32.mrb[0].mxu0
      %1577 = vmatprep.mubr.f32.mxu0 0.0
      %1578 = vmatmul.mubr.f32.gmra.mrb[0].mxu0 %v1442
      %v1579 = vpop.f32.mrb[0].mxu0
      %v1580 = vadd.f32 0.0, %v1579
      %v1581 = vpop.f32.mrb[0].mxu0
      %1582 = vmatprep.mubr.f32.mxu0 0.0
      %1583 = vmatmul.mubr.f32.gmra.mrb[0].mxu0 %v1445
      %v1584 = vpop.f32.mrb[0].mxu0
      %v1585 = vadd.f32 0.0, %v1584
      %v1586 = vpop.f32.mrb[0].mxu0
      %1587 = vmatprep.mubr.f32.mxu0 0.0
      %1588 = vmatmul.mubr.f32.gmra.mrb[0].mxu0 %v1448
      %v1589 = vpop.f32.mrb[0].mxu0
      %v1590 = vadd.f32 0.0, %v1589
      %v1591 = vpop.f32.mrb[0].mxu0
      %1592 = vmatprep.mubr.f32.mxu0 0.0
      %1593 = vmatmul.mubr.f32.gmra.mrb[0].mxu0 %v1451
      %v1594 = vpop.f32.mrb[0].mxu0
      %v1595 = vadd.f32 0.0, %v1594
      %v1596 = vpop.f32.mrb[0].mxu0
      %1597 = vdwg.mxu0
      %v1599 = vsel %vm1404, %v804, 0
      %v1602 = vsel %vm1404, %v805, 0
      %v1605 = vsel %vm1404, %v806, 0
      %v1608 = vsel %vm1404, %v807, 0
      %v1611 = vsel %vm1404, %v808, 0
      %v1614 = vsel %vm1404, %v809, 0
      %v1617 = vsel %vm1404, %v810, 0
      %v1620 = vsel %vm1404, %v811, 0
      %v1623 = vsel %vm1404, %v812, 0
      %v1626 = vsel %vm1404, %v813, 0
      %v1629 = vsel %vm1404, %v814, 0
      %v1632 = vsel %vm1404, %v815, 0
      %v1635 = vsel %vm1404, %v816, 0
      %v1638 = vsel %vm1404, %v817, 0
      %v1641 = vsel %vm1404, %v818, 0
      %v1644 = vsel %vm1404, %v819, 0
      %1646 = vmatprep.subr.mxu0 0.0
      %1647 = vmatpush1.msra.mxu0 %v820
      %1648 = vmatprep.subr.mxu0 0.0
      %1649 = vmatpush1.msra.mxu0 %v821
      %1650 = vmatprep.subr.mxu0 0.0
      %1651 = vmatpush1.msra.mxu0 %v822
      %1652 = vmatprep.subr.mxu0 0.0
      %1653 = vmatpush1.msra.mxu0 %v823
      %1654 = vmatprep.subr.mxu0 0.0
      %1655 = vmatpush1.msra.mxu0 %v824
      %1656 = vmatprep.subr.mxu0 0.0
      %1657 = vmatpush1.msra.mxu0 %v825
      %1658 = vmatprep.subr.mxu0 0.0
      %1659 = vmatpush1.msra.mxu0 %v826
      %1660 = vmatprep.subr.mxu0 0.0
      %1661 = vmatpush1.msra.mxu0 %v827
      %1662 = vmatprep.subr.mxu0 0.0
      %1663 = vmatpush1.msra.mxu0 %v828
      %1664 = vmatprep.subr.mxu0 0.0
      %1665 = vmatpush1.msra.mxu0 %v829
      %1666 = vmatprep.subr.mxu0 0.0
      %1667 = vmatpush1.msra.mxu0 0.0
      %1668 = vmatprep.subr.mxu0 0.0
      %1669 = vmatpush1.msra.mxu0 0.0
      %1670 = vmatprep.subr.mxu0 0.0
      %1671 = vmatpush1.msra.mxu0 0.0
      %1672 = vmatprep.subr.mxu0 0.0
      %1673 = vmatpush1.msra.mxu0 0.0
      %1674 = vmatprep.subr.mxu0 0.0
      %1675 = vmatpush1.msra.mxu0 0.0
      %1676 = vmatprep.subr.mxu0 0.0
      %1677 = vmatpush1.msra.mxu0 0.0
      %1678 = vmatprep.subr.mxu0 0.0
      %1679 = vmatpush1.msra.mxu0 0.0
      %1680 = vmatprep.subr.mxu0 0.0
      %1681 = vmatpush1.msra.mxu0 0.0
      %1682 = vmatprep.subr.mxu0 0.0
      %1683 = vmatpush1.msra.mxu0 0.0
      %1684 = vmatprep.subr.mxu0 0.0
      %1685 = vmatpush1.msra.mxu0 0.0
      %1686 = vmatprep.subr.mxu0 0.0
      %1687 = vmatpush1.msra.mxu0 0.0
      %1688 = vmatprep.subr.mxu0 0.0
      %1689 = vmatpush1.msra.mxu0 0.0
      %1690 = vmatprep.subr.mxu0 0.0
      %1691 = vmatpush1.msra.mxu0 0.0
      %1692 = vmatprep.subr.mxu0 0.0
      %1693 = vmatpush1.msra.mxu0 0.0
      %1694 = vmatprep.subr.mxu0 0.0
      %1695 = vmatpush1.msra.mxu0 0.0
      %1696 = vmatprep.subr.mxu0 0.0
      %1697 = vmatpush1.msra.mxu0 0.0
      %1698 = vmatprep.subr.mxu0 0.0
      %1699 = vmatpush1.msra.mxu0 0.0
      %1700 = vmatprep.subr.mxu0 0.0
      %1701 = vmatpush1.msra.mxu0 0.0
      %1702 = vmatprep.subr.mxu0 0.0
      %1703 = vmatpush1.msra.mxu0 0.0
      %1704 = vmatprep.subr.mxu0 0.0
      %1705 = vmatpush1.msra.mxu0 0.0
      %1706 = vmatprep.subr.mxu0 0.0
      %1707 = vmatpush1.msra.mxu0 0.0
      %1708 = vmatprep.subr.mxu0 0.0
      %1709 = vmatpush1.msra.mxu0 0.0
      %1710 = vmatprep.mubr.f32.mxu0 0.0
      %1711 = vmatmul.mubr.f32.gmra.mrb[0].mxu0 %v1599
      %v1712 = vpop.f32.mrb[0].mxu0
      %v1713 = vadd.f32 %v1520, %v1712
      %v1714 = vpop.f32.mrb[0].mxu0
      %1715 = vmatprep.mubr.f32.mxu0 0.0
      %1716 = vmatmul.mubr.f32.gmra.mrb[0].mxu0 %v1602
      %v1717 = vpop.f32.mrb[0].mxu0
      %v1718 = vadd.f32 %v1525, %v1717
      %v1719 = vpop.f32.mrb[0].mxu0
      %1720 = vmatprep.mubr.f32.mxu0 0.0
      %1721 = vmatmul.mubr.f32.gmra.mrb[0].mxu0 %v1605
      %v1722 = vpop.f32.mrb[0].mxu0
      %v1723 = vadd.f32 %v1530, %v1722
      %v1724 = vpop.f32.mrb[0].mxu0
      %1725 = vmatprep.mubr.f32.mxu0 0.0
      %1726 = vmatmul.mubr.f32.gmra.mrb[0].mxu0 %v1608
      %v1727 = vpop.f32.mrb[0].mxu0
      %v1728 = vadd.f32 %v1535, %v1727
      %v1729 = vpop.f32.mrb[0].mxu0
      %1730 = vmatprep.mubr.f32.mxu0 0.0
      %1731 = vmatmul.mubr.f32.gmra.mrb[0].mxu0 %v1611
      %v1732 = vpop.f32.mrb[0].mxu0
      %v1733 = vadd.f32 %v1540, %v1732
      %v1734 = vpop.f32.mrb[0].mxu0
      %1735 = vmatprep.mubr.f32.mxu0 0.0
      %1736 = vmatmul.mubr.f32.gmra.mrb[0].mxu0 %v1614
      %v1737 = vpop.f32.mrb[0].mxu0
      %v1738 = vadd.f32 %v1545, %v1737
      %v1739 = vpop.f32.mrb[0].mxu0
      %1740 = vmatprep.mubr.f32.mxu0 0.0
      %1741 = vmatmul.mubr.f32.gmra.mrb[0].mxu0 %v1617
      %v1742 = vpop.f32.mrb[0].mxu0
      %v1743 = vadd.f32 %v1550, %v1742
      %v1744 = vpop.f32.mrb[0].mxu0
      %1745 = vmatprep.mubr.f32.mxu0 0.0
      %1746 = vmatmul.mubr.f32.gmra.mrb[0].mxu0 %v1620
      %v1747 = vpop.f32.mrb[0].mxu0
      %v1748 = vadd.f32 %v1555, %v1747
      %v1749 = vpop.f32.mrb[0].mxu0
      %1750 = vmatprep.mubr.f32.mxu0 0.0
      %1751 = vmatmul.mubr.f32.gmra.mrb[0].mxu0 %v1623
      %v1752 = vpop.f32.mrb[0].mxu0
      %v1753 = vadd.f32 %v1560, %v1752
      %v1754 = vpop.f32.mrb[0].mxu0
      %1755 = vmatprep.mubr.f32.mxu0 0.0
      %1756 = vmatmul.mubr.f32.gmra.mrb[0].mxu0 %v1626
      %v1757 = vpop.f32.mrb[0].mxu0
      %v1758 = vadd.f32 %v1565, %v1757
      %v1759 = vpop.f32.mrb[0].mxu0
      %1760 = vmatprep.mubr.f32.mxu0 0.0
      %1761 = vmatmul.mubr.f32.gmra.mrb[0].mxu0 %v1629
      %v1762 = vpop.f32.mrb[0].mxu0
      %v1763 = vadd.f32 %v1570, %v1762
      %v1764 = vpop.f32.mrb[0].mxu0
      %1765 = vmatprep.mubr.f32.mxu0 0.0
      %1766 = vmatmul.mubr.f32.gmra.mrb[0].mxu0 %v1632
      %v1767 = vpop.f32.mrb[0].mxu0
      %v1768 = vadd.f32 %v1575, %v1767
      %v1769 = vpop.f32.mrb[0].mxu0
      %1770 = vmatprep.mubr.f32.mxu0 0.0
      %1771 = vmatmul.mubr.f32.gmra.mrb[0].mxu0 %v1635
      %v1772 = vpop.f32.mrb[0].mxu0
      %v1773 = vadd.f32 %v1580, %v1772
      %v1774 = vpop.f32.mrb[0].mxu0
      %1775 = vmatprep.mubr.f32.mxu0 0.0
      %1776 = vmatmul.mubr.f32.gmra.mrb[0].mxu0 %v1638
      %v1777 = vpop.f32.mrb[0].mxu0
      %v1778 = vadd.f32 %v1585, %v1777
      %v1779 = vpop.f32.mrb[0].mxu0
      %1780 = vmatprep.mubr.f32.mxu0 0.0
      %1781 = vmatmul.mubr.f32.gmra.mrb[0].mxu0 %v1641
      %v1782 = vpop.f32.mrb[0].mxu0
      %v1783 = vadd.f32 %v1590, %v1782
      %v1784 = vpop.f32.mrb[0].mxu0
      %1785 = vmatprep.mubr.f32.mxu0 0.0
      %1786 = vmatmul.mubr.f32.gmra.mrb[0].mxu0 %v1644
      %v1787 = vpop.f32.mrb[0].mxu0
      %v1788 = vadd.f32 %v1595, %v1787
      %v1789 = vpop.f32.mrb[0].mxu0
      %1790 = vdwg.mxu0
      %v1791 = vld [vmem:[%s5] sm:$0x1]
      %v1793 = vlaneseq
      %v1794 = vshrl.u32 %v1793, 7
      %v1795 = vsub.s32 0, %v1794
      %v1796 = vrot.slane %v1791, %v1795
      %v1798 = vadd.f32 %v1713, %v1796
      %v1799 = vadd.f32 %v1718, %v1796
      %v1800 = vadd.f32 %v1723, %v1796
      %v1801 = vadd.f32 %v1728, %v1796
      %v1802 = vadd.f32 %v1733, %v1796
      %v1803 = vadd.f32 %v1738, %v1796
      %v1804 = vadd.f32 %v1743, %v1796
      %v1805 = vadd.f32 %v1748, %v1796
      %v1806 = vadd.f32 %v1753, %v1796
      %v1807 = vadd.f32 %v1758, %v1796
      %v1808 = vadd.f32 %v1763, %v1796
      %v1809 = vadd.f32 %v1768, %v1796
      %v1810 = vadd.f32 %v1773, %v1796
      %v1811 = vadd.f32 %v1778, %v1796
      %v1812 = vadd.f32 %v1783, %v1796
      %v1813 = vadd.f32 %v1788, %v1796
      %v1814 = vsel %vm752, %v1798, 0.0
      %v1815 = vsel %vm752, %v1799, 0.0
      %v1816 = vadd.f32 %v1814, %v1815
      %v1817 = vsel %vm752, %v1800, 0.0
      %v1818 = vadd.f32 %v1816, %v1817
      %v1819 = vsel %vm752, %v1801, 0.0
      %v1820 = vadd.f32 %v1818, %v1819
      %v1821 = vsel %vm752, %v1802, 0.0
      %v1822 = vadd.f32 %v1820, %v1821
      %v1823 = vsel %vm752, %v1803, 0.0
      %v1824 = vadd.f32 %v1822, %v1823
      %v1825 = vsel %vm752, %v1804, 0.0
      %v1826 = vadd.f32 %v1824, %v1825
      %v1827 = vsel %vm752, %v1805, 0.0
      %v1828 = vadd.f32 %v1826, %v1827
      %v1829 = vsel %vm752, %v1806, 0.0
      %v1830 = vadd.f32 %v1828, %v1829
      %v1831 = vsel %vm752, %v1807, 0.0
      %v1832 = vadd.f32 %v1830, %v1831
      %v1833 = vsel %vm752, %v1808, 0.0
      %v1834 = vadd.f32 %v1832, %v1833
      %v1835 = vsel %vm752, %v1809, 0.0
      %v1836 = vadd.f32 %v1834, %v1835
      %v1837 = vsel %vm752, %v1810, 0.0
      %v1838 = vadd.f32 %v1836, %v1837
      %v1839 = vsel %vm752, %v1811, 0.0
      %v1840 = vadd.f32 %v1838, %v1839
      %v1841 = vsel %vm752, %v1812, 0.0
      %v1842 = vadd.f32 %v1840, %v1841
      %v1843 = vsel %vm752, %v1813, 0.0
      %v1844 = vadd.f32 %v1842, %v1843
      %v1845 = vrot.slane %v1844, 4
      %v1846 = vadd.f32 %v1844, %v1845
      %v1847 = vrot.slane %v1846, 2
      %v1848 = vadd.f32 %v1846, %v1847
      %v1849 = vrot.slane %v1848, 1
      %v1850 = vadd.f32 %v1848, %v1849
      %v1851 = vmul.f32 %v1798, %v1798
      %v1852 = vmul.f32 %v1799, %v1799
      %v1853 = vmul.f32 %v1800, %v1800
      %v1854 = vmul.f32 %v1801, %v1801
      %v1855 = vmul.f32 %v1802, %v1802
      %v1856 = vmul.f32 %v1803, %v1803
      %v1857 = vmul.f32 %v1804, %v1804
      %v1858 = vmul.f32 %v1805, %v1805
      %v1859 = vmul.f32 %v1806, %v1806
      %v1860 = vmul.f32 %v1807, %v1807
      %v1861 = vmul.f32 %v1808, %v1808
      %v1862 = vmul.f32 %v1809, %v1809
      %v1863 = vmul.f32 %v1810, %v1810
      %v1864 = vmul.f32 %v1811, %v1811
      %v1865 = vmul.f32 %v1812, %v1812
      %v1866 = vmul.f32 %v1813, %v1813
      %v1867 = vsel %vm752, %v1851, 0.0
      %v1868 = vsel %vm752, %v1852, 0.0
      %v1869 = vadd.f32 %v1867, %v1868
      %v1870 = vsel %vm752, %v1853, 0.0
      %v1871 = vadd.f32 %v1869, %v1870
      %v1872 = vsel %vm752, %v1854, 0.0
      %v1873 = vadd.f32 %v1871, %v1872
      %v1874 = vsel %vm752, %v1855, 0.0
      %v1875 = vadd.f32 %v1873, %v1874
      %v1876 = vsel %vm752, %v1856, 0.0
      %v1877 = vadd.f32 %v1875, %v1876
      %v1878 = vsel %vm752, %v1857, 0.0
      %v1879 = vadd.f32 %v1877, %v1878
      %v1880 = vsel %vm752, %v1858, 0.0
      %v1881 = vadd.f32 %v1879, %v1880
      %v1882 = vsel %vm752, %v1859, 0.0
      %v1883 = vadd.f32 %v1881, %v1882
      %v1884 = vsel %vm752, %v1860, 0.0
      %v1885 = vadd.f32 %v1883, %v1884
      %v1886 = vsel %vm752, %v1861, 0.0
      %v1887 = vadd.f32 %v1885, %v1886
      %v1888 = vsel %vm752, %v1862, 0.0
      %v1889 = vadd.f32 %v1887, %v1888
      %v1890 = vsel %vm752, %v1863, 0.0
      %v1891 = vadd.f32 %v1889, %v1890
      %v1892 = vsel %vm752, %v1864, 0.0
      %v1893 = vadd.f32 %v1891, %v1892
      %v1894 = vsel %vm752, %v1865, 0.0
      %v1895 = vadd.f32 %v1893, %v1894
      %v1896 = vsel %vm752, %v1866, 0.0
      %v1897 = vadd.f32 %v1895, %v1896
      %v1898 = vrot.slane %v1897, 4
      %v1899 = vadd.f32 %v1897, %v1898
      %v1900 = vrot.slane %v1899, 2
      %v1901 = vadd.f32 %v1899, %v1900
      %v1902 = vrot.slane %v1901, 1
      %v1903 = vadd.f32 %v1901, %v1902
      %v1904 = vmul.f32 %v1850, 0.0078125
      %v1905 = vmul.f32 %v1903, 0.0078125
      %v1906 = vmul.f32 %v1904, %v1904
      %v1907 = vsub.f32 %v1905, %v1906
      %v1908 = vmax.f32 %v1907, 0.0
      %v1909 = vsub.f32 %v1798, %v1904
      %v1910 = vsub.f32 %v1799, %v1904
      %v1911 = vsub.f32 %v1800, %v1904
      %v1912 = vsub.f32 %v1801, %v1904
      %v1913 = vsub.f32 %v1802, %v1904
      %v1914 = vsub.f32 %v1803, %v1904
      %v1915 = vsub.f32 %v1804, %v1904
      %v1916 = vsub.f32 %v1805, %v1904
      %v1917 = vsub.f32 %v1806, %v1904
      %v1918 = vsub.f32 %v1807, %v1904
      %v1919 = vsub.f32 %v1808, %v1904
      %v1920 = vsub.f32 %v1809, %v1904
      %v1921 = vsub.f32 %v1810, %v1904
      %v1922 = vsub.f32 %v1811, %v1904
      %v1923 = vsub.f32 %v1812, %v1904
      %v1924 = vsub.f32 %v1813, %v1904
      %v1925 = vadd.f32 %v1908, 1e-05
      %v1926 = vrsqrt.pop %v1925
      %v1927 = vmul.f32 %v1909, %v1926
      %v1928 = vmul.f32 %v1910, %v1926
      %v1929 = vmul.f32 %v1911, %v1926
      %v1930 = vmul.f32 %v1912, %v1926
      %v1931 = vmul.f32 %v1913, %v1926
      %v1932 = vmul.f32 %v1914, %v1926
      %v1933 = vmul.f32 %v1915, %v1926
      %v1934 = vmul.f32 %v1916, %v1926
      %v1935 = vmul.f32 %v1917, %v1926
      %v1936 = vmul.f32 %v1918, %v1926
      %v1937 = vmul.f32 %v1919, %v1926
      %v1938 = vmul.f32 %v1920, %v1926
      %v1939 = vmul.f32 %v1921, %v1926
      %v1940 = vmul.f32 %v1922, %v1926
      %v1941 = vmul.f32 %v1923, %v1926
      %v1942 = vmul.f32 %v1924, %v1926
      %v1943 = vmax.f32 %v1927, 0.0
      %v1944 = vmax.f32 %v1928, 0.0
      %v1945 = vmax.f32 %v1929, 0.0
      %v1946 = vmax.f32 %v1930, 0.0
      %v1947 = vmax.f32 %v1931, 0.0
      %v1948 = vmax.f32 %v1932, 0.0
      %v1949 = vmax.f32 %v1933, 0.0
      %v1950 = vmax.f32 %v1934, 0.0
      %v1951 = vmax.f32 %v1935, 0.0
      %v1952 = vmax.f32 %v1936, 0.0
      %v1953 = vmax.f32 %v1937, 0.0
      %v1954 = vmax.f32 %v1938, 0.0
      %v1955 = vmax.f32 %v1939, 0.0
      %v1956 = vmax.f32 %v1940, 0.0
      %v1957 = vmax.f32 %v1941, 0.0
      %v1958 = vmax.f32 %v1942, 0.0
      %1959 = vst.msk [vmem:[%s251] sm:$0xff] %vm752, %v1943
      %1960 = vst.msk [vmem:[%s251 + $0x8] sm:$0xff] %vm752, %v1944
      %1961 = vst.msk [vmem:[%s251 + $0x10] sm:$0xff] %vm752, %v1945
      %1962 = vst.msk [vmem:[%s251 + $0x18] sm:$0xff] %vm752, %v1946
      %1963 = vst.msk [vmem:[%s251 + $0x20] sm:$0xff] %vm752, %v1947
      %1964 = vst.msk [vmem:[%s251 + $0x28] sm:$0xff] %vm752, %v1948
      %1965 = vst.msk [vmem:[%s251 + $0x30] sm:$0xff] %vm752, %v1949
      %1966 = vst.msk [vmem:[%s251 + $0x38] sm:$0xff] %vm752, %v1950
      %1967 = vst.msk [vmem:[%s251 + $0x40] sm:$0xff] %vm752, %v1951
      %1968 = vst.msk [vmem:[%s251 + $0x48] sm:$0xff] %vm752, %v1952
      %1969 = vst.msk [vmem:[%s251 + $0x50] sm:$0xff] %vm752, %v1953
      %1970 = vst.msk [vmem:[%s251 + $0x58] sm:$0xff] %vm752, %v1954
      %1971 = vst.msk [vmem:[%s251 + $0x60] sm:$0xff] %vm752, %v1955
      %1972 = vst.msk [vmem:[%s251 + $0x68] sm:$0xff] %vm752, %v1956
      %1973 = vst.msk [vmem:[%s251 + $0x70] sm:$0xff] %vm752, %v1957
      %1974 = vst.msk [vmem:[%s251 + $0x78] sm:$0xff] %vm752, %v1958
      %p1975 = scmp.lt.s32.totalorder %s23, 1
      %s1976 = scalar_select %p1975, %s23, 1
      %s1977 = smul.addr %s1976, 16
      %s1978 = smul.addr %s1977, 8
      %s1979 = scalar_lea.vmem %s6, %s1978
      // Predicated region
      $region55: #{upconv_forward.5} parent=39 // pred_check
        %p1980 = pneg %p156
      $region56: #{upconv_forward.5} parent=39 // pred_check_branch
        %1982 = sbr.rel (%p1980) target = $region58
      $region57: #{upconv_forward.5} parent=39 // pred_region
        _
      $region58: #{upconv_forward.5} parent=39 // pred_fallthru
        _
    $region40: #{upconv_forward.5} parent=5 // pred_fallthru
      _
    %p1983 = scmp.le.s32.totalorder 2, %s18
    // Predicated region
    $region59: #{upconv_forward.5} parent=5 // pred_check
      %p1984 = pneg %p1983
    $region60: #{upconv_forward.5} parent=5 // pred_check_branch
      %1986 = sbr.rel (%p1984) target = $region62
    $region61: #{upconv_forward.5} parent=5 // pred_region
      %s1987 = ssub.s32 %s18, 2
      // Predicated region
      $region63: #{upconv_forward.5} parent=61 // pred_check
        %p1988 = pneg %p162
      $region64: #{upconv_forward.5} parent=61 // pred_check_branch
        %1990 = sbr.rel (%p1988) target = $region66
      $region65: #{upconv_forward.5} parent=61 // pred_region
        %p1991 = scmp.lt.s32.totalorder %s24, 1
        %s1992 = scalar_select %p1991, %s24, 1
        %s1993 = smul.addr %s1992, 16
        %s1994 = smul.addr %s1993, 8
        %s1995 = scalar_lea.vmem %s6, %s1994
      $region66: #{upconv_forward.5} parent=61 // pred_fallthru
        _
    $region62: #{upconv_forward.5} parent=5 // pred_fallthru
      _
  $region6: #{upconv_forward.5} parent=0 // loop_footer
    %s22 = sadd.s32 1, %s18
  $region7: #{upconv_forward.5} parent=0 // loop_footer_branch
    %17 = sbr.rel target = $region3
  $region8: #{upconv_forward.5} parent=0 // loop_exit
    _

</llo_original>
